<compile_context>
chip_gen: v7x
topology: tpu7x:2x2x1
jax: 0.10.0
libtpu: 0.0.40
codegen_flags: <defaults>
</compile_context>

<pallas_src>
import math
import functools

import jax
import jax.numpy as jnp
from jax.experimental import pallas as pl
from jax.experimental.pallas import tpu as pltpu

# ----- small, self-consistent hyperparameters (match the module's __init__) -----
OUTPUT_DIM   = 8
NHEAD        = 4
NHID         = 64
NLAYERS      = 2
NGAME_CONT   = 6
NTEAM_CONT   = 4
NPLAYER_CONT = 5
NITEMS       = 20
NCHAMPIONS   = 15
NRUNES       = 12
GAME_DIM     = 4
TEAM_DIM     = 4
PLAYER_DIM   = 8
ITEM_DIM     = 4
CHAMPION_DIM = 8
RUNES_DIM    = 8
INPUT_DIM = GAME_DIM + ITEM_DIM + 2 * TEAM_DIM + 10 * (PLAYER_DIM + CHAMPION_DIM + RUNES_DIM)  # 256
HEAD_DIM  = INPUT_DIM // NHEAD                                                                 # 64
SEQ   = 8
BATCH = 2
RAW_FEAT = NGAME_CONT + 1 + 2 * NTEAM_CONT + 10 * (NPLAYER_CONT + 10)  # 165
NEG_INF = -1e9        # numerically-safe stand-in for float('-inf') causal mask
LN_EPS  = 1e-5        # torch.nn.LayerNorm default


# ---------------------------------------------------------------------------
# Single fused Pallas kernel: NLAYERS post-norm encoder layers + decoder head
# ---------------------------------------------------------------------------
def _fused_transformer_kernel(x_ref,
                              wqkv_ref, bqkv_ref, wo_ref, bo_ref,
                              w1_ref, b1_ref, w2_ref, b2_ref,
                              g1_ref, beta1_ref, g2_ref, beta2_ref,
                              decw_ref, decb_ref,
                              o_ref, *, nhead, nlayers):
    x = x_ref[...]                      # (S, D) — batch dim squeezed by BlockSpec
    s_len, d = x.shape
    hd = d // nhead
    scale = 1.0 / math.sqrt(hd)

    # causal mask generated in-kernel (no DMA'd mask input)
    row = jax.lax.broadcasted_iota(jnp.int32, (s_len, s_len), 0)
    col = jax.lax.broadcasted_iota(jnp.int32, (s_len, s_len), 1)
    mask = jnp.where(col <= row, 0.0, NEG_INF).astype(jnp.float32)

    def layer_norm(t, g, beta):
        mu = jnp.mean(t, axis=-1, keepdims=True)
        var = jnp.mean((t - mu) ** 2, axis=-1, keepdims=True)
        return (t - mu) * jax.lax.rsqrt(var + LN_EPS) * g + beta

    for l in range(nlayers):            # static unrolled loop over layers
        # ---- self-attention: one fused QKV matmul (S,D)@(D,3D) ----
        qkv = jnp.dot(x, wqkv_ref[l], preferred_element_type=jnp.float32) + bqkv_ref[l]
        q = qkv[:, :d]
        k = qkv[:, d:2 * d]
        v = qkv[:, 2 * d:]

        wo = wo_ref[l]                  # (D, D), pre-transposed (in, out)
        attn = bo_ref[l]                # (1, D); broadcasts to (S, D) on first add
        for h in range(nhead):          # static head loop; no concat, no scratch
            sl = slice(h * hd, (h + 1) * hd)
            # q_h @ k_h^T via dot_general (no explicit transpose)
            sc = jax.lax.dot_general(
                q[:, sl], k[:, sl], (((1,), (1,)), ((), ())),
                preferred_element_type=jnp.float32) * scale + mask
            sc = sc - jnp.max(sc, axis=-1, keepdims=True)
            p = jnp.exp(sc)
            p = p * pl.reciprocal(jnp.sum(p, axis=-1, keepdims=True), approx=True)
            head = jnp.dot(p, v[:, sl], preferred_element_type=jnp.float32)      # (S, hd)
            # concat(heads) @ Wo  ==  sum_h head_h @ Wo[h*hd:(h+1)*hd, :]
            attn = attn + jnp.dot(head, wo[sl, :], preferred_element_type=jnp.float32)

        # ---- post-norm residual + feed-forward ----
        y = layer_norm(x + attn, g1_ref[l], beta1_ref[l])
        hid = jnp.maximum(
            jnp.dot(y, w1_ref[l], preferred_element_type=jnp.float32) + b1_ref[l], 0.0)
        ff = jnp.dot(hid, w2_ref[l], preferred_element_type=jnp.float32) + b2_ref[l]
        x = layer_norm(y + ff, g2_ref[l], beta2_ref[l])

    # ---- decoder applied to the last sequence position (== output[-1]) ----
    last = x[s_len - 1:s_len, :]                                                  # (1, D)
    o_ref[...] = (jnp.dot(last, decw_ref[...],
                          preferred_element_type=jnp.float32) + decb_ref[...])    # (1, OUT)


def fused_transformer(x_bsd, params):
    """x_bsd: (B, S, D) float32 -> (B, OUTPUT_DIM) float32."""
    B, S, D = x_bsd.shape
    L = NLAYERS
    kernel = functools.partial(_fused_transformer_kernel, nhead=NHEAD, nlayers=NLAYERS)
    c3 = lambda b: (0, 0, 0)
    c2 = lambda b: (0, 0)
    out = pl.pallas_call(
        kernel,
        out_shape=jax.ShapeDtypeStruct((B, 1, OUTPUT_DIM), jnp.float32),
        grid=(B,),
        in_specs=[
            pl.BlockSpec((None, S, D), lambda b: (b, 0, 0)),       # x (batch squeezed)
            pl.BlockSpec((L, D, 3 * D), c3),                       # wqkv  (in, out)
            pl.BlockSpec((L, 1, 3 * D), c3),                       # bqkv
            pl.BlockSpec((L, D, D), c3),                           # wo    (in, out)
            pl.BlockSpec((L, 1, D), c3),                           # bo
            pl.BlockSpec((L, D, NHID), c3),                        # w1    (in, out)
            pl.BlockSpec((L, 1, NHID), c3),                        # b1
            pl.BlockSpec((L, NHID, D), c3),                        # w2    (in, out)
            pl.BlockSpec((L, 1, D), c3),                           # b2
            pl.BlockSpec((L, 1, D), c3),                           # norm1.weight
            pl.BlockSpec((L, 1, D), c3),                           # norm1.bias
            pl.BlockSpec((L, 1, D), c3),                           # norm2.weight
            pl.BlockSpec((L, 1, D), c3),                           # norm2.bias
            pl.BlockSpec((D, OUTPUT_DIM), c2),                     # decoder.weight (in, out)
            pl.BlockSpec((1, OUTPUT_DIM), c2),                     # decoder.bias
        ],
        out_specs=pl.BlockSpec((None, 1, OUTPUT_DIM), lambda b: (b, 0, 0)),
        compiler_params=pltpu.CompilerParams(dimension_semantics=("parallel",)),
    )(x_bsd,
      params['wqkv'], params['bqkv'], params['wo'], params['bo'],
      params['w1'], params['b1'], params['w2'], params['b2'],
      params['g1'], params['beta1'], params['g2'], params['beta2'],
      params['dec_w'], params['dec_b'])
    return out[:, 0, :]


# ---------------------------------------------------------------------------
# Parameter construction (deterministic, synthetic).  Matmul weights stored
# pre-transposed (in, out); encoder-layer params stacked along a layer axis.
# ---------------------------------------------------------------------------
def make_positional_encoding(max_len, d_model):
    position = jnp.arange(max_len, dtype=jnp.float32)[:, None]
    div_term = jnp.exp(jnp.arange(0, d_model, 2, dtype=jnp.float32)
                       * (-math.log(10000.0) / d_model))
    pe = jnp.zeros((max_len, d_model), jnp.float32)
    pe = pe.at[:, 0::2].set(jnp.sin(position * div_term))
    pe = pe.at[:, 1::2].set(jnp.cos(position * div_term))
    return pe[:, None, :]                 # (max_len, 1, d_model)


def init_params(key):
    ki = iter(jax.random.split(key, 64))

    def nrm(shape, scale=0.05):
        return jax.random.normal(next(ki), shape, jnp.float32) * scale

    def stack(make):
        return jnp.stack([make() for _ in range(NLAYERS)], axis=0)

    return dict(
        # wrapper-side feature projections / embeddings
        game_w=nrm((NGAME_CONT, GAME_DIM)),       game_b=jnp.zeros((GAME_DIM,), jnp.float32),
        team_w=nrm((NTEAM_CONT, TEAM_DIM)),       team_b=jnp.zeros((TEAM_DIM,), jnp.float32),
        player_w=nrm((NPLAYER_CONT, PLAYER_DIM)), player_b=jnp.zeros((PLAYER_DIM,), jnp.float32),
        item_emb=nrm((NITEMS, ITEM_DIM)),
        champ_emb=nrm((NCHAMPIONS, CHAMPION_DIM)),
        runes_emb=nrm((NRUNES, RUNES_DIM)),
        pe=make_positional_encoding(64, INPUT_DIM),
        # fused-kernel params (stacked over layers, pre-transposed (in, out))
        wqkv=stack(lambda: nrm((INPUT_DIM, 3 * INPUT_DIM))),
        bqkv=jnp.zeros((NLAYERS, 1, 3 * INPUT_DIM), jnp.float32),
        wo=stack(lambda: nrm((INPUT_DIM, INPUT_DIM))),
        bo=jnp.zeros((NLAYERS, 1, INPUT_DIM), jnp.float32),
        w1=stack(lambda: nrm((INPUT_DIM, NHID))),
        b1=jnp.zeros((NLAYERS, 1, NHID), jnp.float32),
        w2=stack(lambda: nrm((NHID, INPUT_DIM))),
        b2=jnp.zeros((NLAYERS, 1, INPUT_DIM), jnp.float32),
        g1=jnp.ones((NLAYERS, 1, INPUT_DIM), jnp.float32),
        beta1=jnp.zeros((NLAYERS, 1, INPUT_DIM), jnp.float32),
        g2=jnp.ones((NLAYERS, 1, INPUT_DIM), jnp.float32),
        beta2=jnp.zeros((NLAYERS, 1, INPUT_DIM), jnp.float32),
        dec_w=nrm((INPUT_DIM, OUTPUT_DIM)),
        dec_b=jnp.zeros((1, OUTPUT_DIM), jnp.float32),
    )


# ---------------------------------------------------------------------------
# Wrapper-side feature embedding (tiny ops; XLA fuses these — no pallas launches)
# ---------------------------------------------------------------------------
def embed_features(src, params):
    # src: (S, B, RAW_FEAT) float32; embedding-index columns hold integer values.
    S, B, _ = src.shape
    base = NGAME_CONT + 1 + 2 * NTEAM_CONT

    src_game = src[:, :, :NGAME_CONT]                                       # (S,B,6)
    item_idx = src[:, :, NGAME_CONT].astype(jnp.int32)                      # (S,B)
    team_cont = src[:, :, NGAME_CONT + 1:base].reshape(S, B, 2, NTEAM_CONT)
    players = src[:, :, base:base + 10 * (NPLAYER_CONT + 10)]
    players = players.reshape(S, B, 10, NPLAYER_CONT + 10)
    player_cont = players[..., :NPLAYER_CONT]                               # (S,B,10,5)
    champ_idx = players[..., NPLAYER_CONT].astype(jnp.int32)                # (S,B,10)
    runes_idx = players[..., NPLAYER_CONT + 1:].astype(jnp.int32)           # (S,B,10,9)

    game = jnp.dot(src_game, params['game_w']) + params['game_b']                       # (S,B,4)
    item = jnp.take(params['item_emb'], item_idx, axis=0) * math.sqrt(ITEM_DIM)         # (S,B,4)
    teams = jnp.dot(team_cont, params['team_w']) + params['team_b']                     # (S,B,2,4)
    player_proj = jnp.dot(player_cont, params['player_w']) + params['player_b']         # (S,B,10,8)
    champs = jnp.take(params['champ_emb'], champ_idx, axis=0) * math.sqrt(CHAMPION_DIM) # (S,B,10,8)
    # TODO(synk): the original runes loop is ill-formed (iterates tensors; torch.cat
    # would fail) — to honor input_dim we sum the 9 rune embeddings per player.
    runes = (jnp.take(params['runes_emb'], runes_idx, axis=0).sum(axis=3)
             * math.sqrt(RUNES_DIM))                                                    # (S,B,10,8)

    per_player = jnp.concatenate([player_proj, champs, runes], axis=-1)                 # (S,B,10,24)
    x = jnp.concatenate(
        [game, item,
         teams.reshape(S, B, 2 * TEAM_DIM),
         per_player.reshape(S, B, 10 * (PLAYER_DIM + CHAMPION_DIM + RUNES_DIM))],
        axis=-1)                                                                        # (S,B,256)
    return x


def transformer_forward(src, params):
    S = src.shape[0]
    x = embed_features(src, params)                 # (S, B, D)
    x = x + params['pe'][:S]                        # positional encoding (dropout = identity, eval)
    x = jnp.transpose(x, (1, 0, 2))                 # batch-major (B, S, D) for the kernel
    return fused_transformer(x, params)             # (B, OUTPUT_DIM)


# ---------------------------------------------------------------------------
if __name__ == "__main__":
    key = jax.random.PRNGKey(0)
    pkey, xkey, ikey, ckey, rkey = jax.random.split(key, 5)
    params = init_params(pkey)

    # build raw src: continuous features + integer-valued index columns
    src = jax.random.uniform(xkey, (SEQ, BATCH, RAW_FEAT), jnp.float32)
    item_idx = jax.random.randint(ikey, (SEQ, BATCH), 0, NITEMS)
    src = src.at[:, :, NGAME_CONT].set(item_idx.astype(jnp.float32))
    base = NGAME_CONT + 1 + 2 * NTEAM_CONT
    champ_idx = jax.random.randint(ckey, (SEQ, BATCH, 10), 0, NCHAMPIONS)
    rune_idx = jax.random.randint(rkey, (SEQ, BATCH, 10, 9), 0, NRUNES)
    for i in range(10):
        ccol = base + (i + 1) * (NPLAYER_CONT + 10) - 10
        src = src.at[:, :, ccol].set(champ_idx[:, :, i].astype(jnp.float32))
        rstart = base + (i + 1) * (NPLAYER_CONT + 10) - 9
        src = src.at[:, :, rstart:rstart + 9].set(rune_idx[:, :, i, :].astype(jnp.float32))

    fwd = jax.jit(transformer_forward)
    out = fwd(src, params)
    jax.block_until_ready(out)
    assert out.shape == (BATCH, OUTPUT_DIM) and out.dtype == jnp.float32
    print("KERNEL_OK")
</pallas_src>

<mosaic_0001>
module attributes {stable_mosaic.version = 11 : i64} {
  func.func @_fused_transformer_kernel(%arg0: i32, %arg1: memref<1x8x256xf32, #tpu.memory_space<vmem>>, %arg2: memref<2x256x768xf32, #tpu.memory_space<vmem>>, %arg3: memref<2x1x768xf32, #tpu.memory_space<vmem>>, %arg4: memref<2x256x256xf32, #tpu.memory_space<vmem>>, %arg5: memref<2x1x256xf32, #tpu.memory_space<vmem>>, %arg6: memref<2x256x64xf32, #tpu.memory_space<vmem>>, %arg7: memref<2x1x64xf32, #tpu.memory_space<vmem>>, %arg8: memref<2x64x256xf32, #tpu.memory_space<vmem>>, %arg9: memref<2x1x256xf32, #tpu.memory_space<vmem>>, %arg10: memref<2x1x256xf32, #tpu.memory_space<vmem>>, %arg11: memref<2x1x256xf32, #tpu.memory_space<vmem>>, %arg12: memref<2x1x256xf32, #tpu.memory_space<vmem>>, %arg13: memref<2x1x256xf32, #tpu.memory_space<vmem>>, %arg14: memref<256x8xf32, #tpu.memory_space<vmem>>, %arg15: memref<1x8xf32, #tpu.memory_space<vmem>>, %arg16: memref<1x1x8xf32, #tpu.memory_space<vmem>>) attributes {dimension_semantics = [#tpu.dimension_semantics<parallel>], iteration_bounds = array<i64: 2>, scalar_prefetch = 0 : i64, scratch_operands = 0 : i64, tpu.core_type = #tpu.core_type<tc>, window_params = [{transform_indices = @transform_0, window_bounds = array<i64: 1, 8, 256>}, {pipeline_mode = #tpu.pipeline_mode<synchronous>, transform_indices = @transform_1, window_bounds = array<i64: 2, 256, 768>}, {pipeline_mode = #tpu.pipeline_mode<synchronous>, transform_indices = @transform_2, window_bounds = array<i64: 2, 1, 768>}, {pipeline_mode = #tpu.pipeline_mode<synchronous>, transform_indices = @transform_3, window_bounds = array<i64: 2, 256, 256>}, {pipeline_mode = #tpu.pipeline_mode<synchronous>, transform_indices = @transform_4, window_bounds = array<i64: 2, 1, 256>}, {pipeline_mode = #tpu.pipeline_mode<synchronous>, transform_indices = @transform_5, window_bounds = array<i64: 2, 256, 64>}, {pipeline_mode = #tpu.pipeline_mode<synchronous>, transform_indices = @transform_6, window_bounds = array<i64: 2, 1, 64>}, {pipeline_mode = #tpu.pipeline_mode<synchronous>, transform_indices = @transform_7, window_bounds = array<i64: 2, 64, 256>}, {pipeline_mode = #tpu.pipeline_mode<synchronous>, transform_indices = @transform_8, window_bounds = array<i64: 2, 1, 256>}, {pipeline_mode = #tpu.pipeline_mode<synchronous>, transform_indices = @transform_9, window_bounds = array<i64: 2, 1, 256>}, {pipeline_mode = #tpu.pipeline_mode<synchronous>, transform_indices = @transform_10, window_bounds = array<i64: 2, 1, 256>}, {pipeline_mode = #tpu.pipeline_mode<synchronous>, transform_indices = @transform_11, window_bounds = array<i64: 2, 1, 256>}, {pipeline_mode = #tpu.pipeline_mode<synchronous>, transform_indices = @transform_12, window_bounds = array<i64: 2, 1, 256>}, {pipeline_mode = #tpu.pipeline_mode<synchronous>, transform_indices = @transform_13, window_bounds = array<i64: 256, 8>}, {pipeline_mode = #tpu.pipeline_mode<synchronous>, transform_indices = @transform_14, window_bounds = array<i64: 1, 8>}, {transform_indices = @transform_15, window_bounds = array<i64: 1, 1, 8>}]} {
    %c0 = arith.constant 0 : index
    %c0_0 = arith.constant 0 : index
    %c0_1 = arith.constant 0 : index
    %0 = vector.load %arg1[%c0, %c0_0, %c0_1] : memref<1x8x256xf32, #tpu.memory_space<vmem>>, vector<1x8x256xf32>
    %1 = vector.shape_cast %0 : vector<1x8x256xf32> to vector<8x256xf32>
    %2 = tpu.iota {dimensions = array<i32: 0>} : vector<8x8xi32>
    %3 = tpu.iota {dimensions = array<i32: 1>} : vector<8x8xi32>
    %4 = arith.cmpi sle, %3, %2 : vector<8x8xi32>
    %cst = arith.constant 0.000000e+00 : f32
    %cst_2 = arith.constant -1.000000e+09 : f32
    %5 = vector.broadcast %cst : f32 to vector<8x8xf32>
    %6 = vector.broadcast %cst_2 : f32 to vector<8x8xf32>
    %7 = arith.select %4, %5, %6 : vector<8x8xi1>, vector<8x8xf32>
    %c0_3 = arith.constant 0 : index
    %c0_4 = arith.constant 0 : index
    %c0_5 = arith.constant 0 : index
    %8 = vector.load %arg2[%c0_3, %c0_4, %c0_5] : memref<2x256x768xf32, #tpu.memory_space<vmem>>, vector<1x256x768xf32>
    %9 = vector.shape_cast %8 : vector<1x256x768xf32> to vector<256x768xf32>
    %cst_6 = arith.constant dense<0.000000e+00> : vector<8x768xf32>
    %10 = tpu.matmul %1, %9, %cst_6 {dimension_numbers = #tpu.dot_dimension_numbers<[1], [0], [0], [1], [0, 0, 1, 1], [], []>} : vector<8x256xf32>, vector<256x768xf32>, vector<8x768xf32> -> vector<8x768xf32>
    %c0_7 = arith.constant 0 : index
    %c0_8 = arith.constant 0 : index
    %c0_9 = arith.constant 0 : index
    %11 = vector.load %arg3[%c0_7, %c0_8, %c0_9] : memref<2x1x768xf32, #tpu.memory_space<vmem>>, vector<1x1x768xf32>
    %12 = vector.shape_cast %11 : vector<1x1x768xf32> to vector<1x768xf32>
    %13 = vector.broadcast %12 : vector<1x768xf32> to vector<8x768xf32>
    %14 = arith.addf %10, %13 : vector<8x768xf32>
    %15 = vector.extract_strided_slice %14 {offsets = [0, 0], sizes = [8, 256], strides = [1, 1]} : vector<8x768xf32> to vector<8x256xf32>
    %16 = vector.extract_strided_slice %14 {offsets = [0, 256], sizes = [8, 256], strides = [1, 1]} : vector<8x768xf32> to vector<8x256xf32>
    %17 = vector.extract_strided_slice %14 {offsets = [0, 512], sizes = [8, 256], strides = [1, 1]} : vector<8x768xf32> to vector<8x256xf32>
    %c0_10 = arith.constant 0 : index
    %c0_11 = arith.constant 0 : index
    %c0_12 = arith.constant 0 : index
    %18 = vector.load %arg4[%c0_10, %c0_11, %c0_12] : memref<2x256x256xf32, #tpu.memory_space<vmem>>, vector<1x256x256xf32>
    %19 = vector.shape_cast %18 : vector<1x256x256xf32> to vector<256x256xf32>
    %c0_13 = arith.constant 0 : index
    %c0_14 = arith.constant 0 : index
    %c0_15 = arith.constant 0 : index
    %20 = vector.load %arg5[%c0_13, %c0_14, %c0_15] : memref<2x1x256xf32, #tpu.memory_space<vmem>>, vector<1x1x256xf32>
    %21 = vector.shape_cast %20 : vector<1x1x256xf32> to vector<1x256xf32>
    %22 = vector.extract_strided_slice %15 {offsets = [0, 0], sizes = [8, 64], strides = [1, 1]} : vector<8x256xf32> to vector<8x64xf32>
    %23 = vector.extract_strided_slice %16 {offsets = [0, 0], sizes = [8, 64], strides = [1, 1]} : vector<8x256xf32> to vector<8x64xf32>
    %cst_16 = arith.constant dense<0.000000e+00> : vector<8x8xf32>
    %24 = tpu.matmul %22, %23, %cst_16 {dimension_numbers = #tpu.dot_dimension_numbers<[1], [1], [0], [0], [0, 0, 1, 0], [], []>} : vector<8x64xf32>, vector<8x64xf32>, vector<8x8xf32> -> vector<8x8xf32>
    %cst_17 = arith.constant 1.250000e-01 : f32
    %25 = vector.broadcast %cst_17 : f32 to vector<8x8xf32>
    %26 = arith.mulf %24, %25 : vector<8x8xf32>
    %27 = arith.addf %26, %7 : vector<8x8xf32>
    %cst_18 = arith.constant dense<0xFF800000> : vector<8xf32>
    %28 = vector.multi_reduction <maximumf>, %27, %cst_18 [1] : vector<8x8xf32> to vector<8xf32>
    %29 = vector.shape_cast %28 : vector<8xf32> to vector<8x1xf32>
    %30 = vector.broadcast %29 : vector<8x1xf32> to vector<8x8xf32>
    %31 = arith.subf %27, %30 : vector<8x8xf32>
    %32 = math.exp %31 : vector<8x8xf32>
    %cst_19 = arith.constant dense<0.000000e+00> : vector<8xf32>
    %33 = vector.multi_reduction <add>, %32, %cst_19 [1] : vector<8x8xf32> to vector<8xf32>
    %34 = vector.shape_cast %33 : vector<8xf32> to vector<8x1xf32>
    %35 = tpu.reciprocal %34 {approx = true} : vector<8x1xf32> -> vector<8x1xf32>
    %36 = vector.broadcast %35 : vector<8x1xf32> to vector<8x8xf32>
    %37 = arith.mulf %32, %36 : vector<8x8xf32>
    %38 = vector.extract_strided_slice %17 {offsets = [0, 0], sizes = [8, 64], strides = [1, 1]} : vector<8x256xf32> to vector<8x64xf32>
    %cst_20 = arith.constant dense<0.000000e+00> : vector<8x64xf32>
    %39 = tpu.matmul %37, %38, %cst_20 {dimension_numbers = #tpu.dot_dimension_numbers<[1], [0], [0], [1], [0, 0, 1, 1], [], []>} : vector<8x8xf32>, vector<8x64xf32>, vector<8x64xf32> -> vector<8x64xf32>
    %40 = vector.extract_strided_slice %19 {offsets = [0, 0], sizes = [64, 256], strides = [1, 1]} : vector<256x256xf32> to vector<64x256xf32>
    %cst_21 = arith.constant dense<0.000000e+00> : vector<8x256xf32>
    %41 = tpu.matmul %39, %40, %cst_21 {dimension_numbers = #tpu.dot_dimension_numbers<[1], [0], [0], [1], [0, 0, 1, 1], [], []>} : vector<8x64xf32>, vector<64x256xf32>, vector<8x256xf32> -> vector<8x256xf32>
    %42 = vector.broadcast %21 : vector<1x256xf32> to vector<8x256xf32>
    %43 = arith.addf %42, %41 : vector<8x256xf32>
    %44 = vector.extract_strided_slice %15 {offsets = [0, 64], sizes = [8, 64], strides = [1, 1]} : vector<8x256xf32> to vector<8x64xf32>
    %45 = vector.extract_strided_slice %16 {offsets = [0, 64], sizes = [8, 64], strides = [1, 1]} : vector<8x256xf32> to vector<8x64xf32>
    %cst_22 = arith.constant dense<0.000000e+00> : vector<8x8xf32>
    %46 = tpu.matmul %44, %45, %cst_22 {dimension_numbers = #tpu.dot_dimension_numbers<[1], [1], [0], [0], [0, 0, 1, 0], [], []>} : vector<8x64xf32>, vector<8x64xf32>, vector<8x8xf32> -> vector<8x8xf32>
    %cst_23 = arith.constant 1.250000e-01 : f32
    %47 = vector.broadcast %cst_23 : f32 to vector<8x8xf32>
    %48 = arith.mulf %46, %47 : vector<8x8xf32>
    %49 = arith.addf %48, %7 : vector<8x8xf32>
    %cst_24 = arith.constant dense<0xFF800000> : vector<8xf32>
    %50 = vector.multi_reduction <maximumf>, %49, %cst_24 [1] : vector<8x8xf32> to vector<8xf32>
    %51 = vector.shape_cast %50 : vector<8xf32> to vector<8x1xf32>
    %52 = vector.broadcast %51 : vector<8x1xf32> to vector<8x8xf32>
    %53 = arith.subf %49, %52 : vector<8x8xf32>
    %54 = math.exp %53 : vector<8x8xf32>
    %cst_25 = arith.constant dense<0.000000e+00> : vector<8xf32>
    %55 = vector.multi_reduction <add>, %54, %cst_25 [1] : vector<8x8xf32> to vector<8xf32>
    %56 = vector.shape_cast %55 : vector<8xf32> to vector<8x1xf32>
    %57 = tpu.reciprocal %56 {approx = true} : vector<8x1xf32> -> vector<8x1xf32>
    %58 = vector.broadcast %57 : vector<8x1xf32> to vector<8x8xf32>
    %59 = arith.mulf %54, %58 : vector<8x8xf32>
    %60 = vector.extract_strided_slice %17 {offsets = [0, 64], sizes = [8, 64], strides = [1, 1]} : vector<8x256xf32> to vector<8x64xf32>
    %cst_26 = arith.constant dense<0.000000e+00> : vector<8x64xf32>
    %61 = tpu.matmul %59, %60, %cst_26 {dimension_numbers = #tpu.dot_dimension_numbers<[1], [0], [0], [1], [0, 0, 1, 1], [], []>} : vector<8x8xf32>, vector<8x64xf32>, vector<8x64xf32> -> vector<8x64xf32>
    %62 = vector.extract_strided_slice %19 {offsets = [64, 0], sizes = [64, 256], strides = [1, 1]} : vector<256x256xf32> to vector<64x256xf32>
    %cst_27 = arith.constant dense<0.000000e+00> : vector<8x256xf32>
    %63 = tpu.matmul %61, %62, %cst_27 {dimension_numbers = #tpu.dot_dimension_numbers<[1], [0], [0], [1], [0, 0, 1, 1], [], []>} : vector<8x64xf32>, vector<64x256xf32>, vector<8x256xf32> -> vector<8x256xf32>
    %64 = arith.addf %43, %63 : vector<8x256xf32>
    %65 = vector.extract_strided_slice %15 {offsets = [0, 128], sizes = [8, 64], strides = [1, 1]} : vector<8x256xf32> to vector<8x64xf32>
    %66 = vector.extract_strided_slice %16 {offsets = [0, 128], sizes = [8, 64], strides = [1, 1]} : vector<8x256xf32> to vector<8x64xf32>
    %cst_28 = arith.constant dense<0.000000e+00> : vector<8x8xf32>
    %67 = tpu.matmul %65, %66, %cst_28 {dimension_numbers = #tpu.dot_dimension_numbers<[1], [1], [0], [0], [0, 0, 1, 0], [], []>} : vector<8x64xf32>, vector<8x64xf32>, vector<8x8xf32> -> vector<8x8xf32>
    %cst_29 = arith.constant 1.250000e-01 : f32
    %68 = vector.broadcast %cst_29 : f32 to vector<8x8xf32>
    %69 = arith.mulf %67, %68 : vector<8x8xf32>
    %70 = arith.addf %69, %7 : vector<8x8xf32>
    %cst_30 = arith.constant dense<0xFF800000> : vector<8xf32>
    %71 = vector.multi_reduction <maximumf>, %70, %cst_30 [1] : vector<8x8xf32> to vector<8xf32>
    %72 = vector.shape_cast %71 : vector<8xf32> to vector<8x1xf32>
    %73 = vector.broadcast %72 : vector<8x1xf32> to vector<8x8xf32>
    %74 = arith.subf %70, %73 : vector<8x8xf32>
    %75 = math.exp %74 : vector<8x8xf32>
    %cst_31 = arith.constant dense<0.000000e+00> : vector<8xf32>
    %76 = vector.multi_reduction <add>, %75, %cst_31 [1] : vector<8x8xf32> to vector<8xf32>
    %77 = vector.shape_cast %76 : vector<8xf32> to vector<8x1xf32>
    %78 = tpu.reciprocal %77 {approx = true} : vector<8x1xf32> -> vector<8x1xf32>
    %79 = vector.broadcast %78 : vector<8x1xf32> to vector<8x8xf32>
    %80 = arith.mulf %75, %79 : vector<8x8xf32>
    %81 = vector.extract_strided_slice %17 {offsets = [0, 128], sizes = [8, 64], strides = [1, 1]} : vector<8x256xf32> to vector<8x64xf32>
    %cst_32 = arith.constant dense<0.000000e+00> : vector<8x64xf32>
    %82 = tpu.matmul %80, %81, %cst_32 {dimension_numbers = #tpu.dot_dimension_numbers<[1], [0], [0], [1], [0, 0, 1, 1], [], []>} : vector<8x8xf32>, vector<8x64xf32>, vector<8x64xf32> -> vector<8x64xf32>
    %83 = vector.extract_strided_slice %19 {offsets = [128, 0], sizes = [64, 256], strides = [1, 1]} : vector<256x256xf32> to vector<64x256xf32>
    %cst_33 = arith.constant dense<0.000000e+00> : vector<8x256xf32>
    %84 = tpu.matmul %82, %83, %cst_33 {dimension_numbers = #tpu.dot_dimension_numbers<[1], [0], [0], [1], [0, 0, 1, 1], [], []>} : vector<8x64xf32>, vector<64x256xf32>, vector<8x256xf32> -> vector<8x256xf32>
    %85 = arith.addf %64, %84 : vector<8x256xf32>
    %86 = vector.extract_strided_slice %15 {offsets = [0, 192], sizes = [8, 64], strides = [1, 1]} : vector<8x256xf32> to vector<8x64xf32>
    %87 = vector.extract_strided_slice %16 {offsets = [0, 192], sizes = [8, 64], strides = [1, 1]} : vector<8x256xf32> to vector<8x64xf32>
    %cst_34 = arith.constant dense<0.000000e+00> : vector<8x8xf32>
    %88 = tpu.matmul %86, %87, %cst_34 {dimension_numbers = #tpu.dot_dimension_numbers<[1], [1], [0], [0], [0, 0, 1, 0], [], []>} : vector<8x64xf32>, vector<8x64xf32>, vector<8x8xf32> -> vector<8x8xf32>
    %cst_35 = arith.constant 1.250000e-01 : f32
    %89 = vector.broadcast %cst_35 : f32 to vector<8x8xf32>
    %90 = arith.mulf %88, %89 : vector<8x8xf32>
    %91 = arith.addf %90, %7 : vector<8x8xf32>
    %cst_36 = arith.constant dense<0xFF800000> : vector<8xf32>
    %92 = vector.multi_reduction <maximumf>, %91, %cst_36 [1] : vector<8x8xf32> to vector<8xf32>
    %93 = vector.shape_cast %92 : vector<8xf32> to vector<8x1xf32>
    %94 = vector.broadcast %93 : vector<8x1xf32> to vector<8x8xf32>
    %95 = arith.subf %91, %94 : vector<8x8xf32>
    %96 = math.exp %95 : vector<8x8xf32>
    %cst_37 = arith.constant dense<0.000000e+00> : vector<8xf32>
    %97 = vector.multi_reduction <add>, %96, %cst_37 [1] : vector<8x8xf32> to vector<8xf32>
    %98 = vector.shape_cast %97 : vector<8xf32> to vector<8x1xf32>
    %99 = tpu.reciprocal %98 {approx = true} : vector<8x1xf32> -> vector<8x1xf32>
    %100 = vector.broadcast %99 : vector<8x1xf32> to vector<8x8xf32>
    %101 = arith.mulf %96, %100 : vector<8x8xf32>
    %102 = vector.extract_strided_slice %17 {offsets = [0, 192], sizes = [8, 64], strides = [1, 1]} : vector<8x256xf32> to vector<8x64xf32>
    %cst_38 = arith.constant dense<0.000000e+00> : vector<8x64xf32>
    %103 = tpu.matmul %101, %102, %cst_38 {dimension_numbers = #tpu.dot_dimension_numbers<[1], [0], [0], [1], [0, 0, 1, 1], [], []>} : vector<8x8xf32>, vector<8x64xf32>, vector<8x64xf32> -> vector<8x64xf32>
    %104 = vector.extract_strided_slice %19 {offsets = [192, 0], sizes = [64, 256], strides = [1, 1]} : vector<256x256xf32> to vector<64x256xf32>
    %cst_39 = arith.constant dense<0.000000e+00> : vector<8x256xf32>
    %105 = tpu.matmul %103, %104, %cst_39 {dimension_numbers = #tpu.dot_dimension_numbers<[1], [0], [0], [1], [0, 0, 1, 1], [], []>} : vector<8x64xf32>, vector<64x256xf32>, vector<8x256xf32> -> vector<8x256xf32>
    %106 = arith.addf %85, %105 : vector<8x256xf32>
    %107 = arith.addf %1, %106 : vector<8x256xf32>
    %c0_40 = arith.constant 0 : index
    %c0_41 = arith.constant 0 : index
    %c0_42 = arith.constant 0 : index
    %108 = vector.load %arg10[%c0_40, %c0_41, %c0_42] : memref<2x1x256xf32, #tpu.memory_space<vmem>>, vector<1x1x256xf32>
    %109 = vector.shape_cast %108 : vector<1x1x256xf32> to vector<1x256xf32>
    %c0_43 = arith.constant 0 : index
    %c0_44 = arith.constant 0 : index
    %c0_45 = arith.constant 0 : index
    %110 = vector.load %arg11[%c0_43, %c0_44, %c0_45] : memref<2x1x256xf32, #tpu.memory_space<vmem>>, vector<1x1x256xf32>
    %111 = vector.shape_cast %110 : vector<1x1x256xf32> to vector<1x256xf32>
    %cst_46 = arith.constant dense<0.000000e+00> : vector<8xf32>
    %112 = vector.multi_reduction <add>, %107, %cst_46 [1] : vector<8x256xf32> to vector<8xf32>
    %113 = vector.shape_cast %112 : vector<8xf32> to vector<8x1xf32>
    %cst_47 = arith.constant 2.560000e+02 : f32
    %114 = vector.broadcast %cst_47 : f32 to vector<8x1xf32>
    %115 = arith.divf %113, %114 : vector<8x1xf32>
    %116 = vector.broadcast %115 : vector<8x1xf32> to vector<8x256xf32>
    %117 = arith.subf %107, %116 : vector<8x256xf32>
    %118 = arith.mulf %117, %117 : vector<8x256xf32>
    %cst_48 = arith.constant dense<0.000000e+00> : vector<8xf32>
    %119 = vector.multi_reduction <add>, %118, %cst_48 [1] : vector<8x256xf32> to vector<8xf32>
    %120 = vector.shape_cast %119 : vector<8xf32> to vector<8x1xf32>
    %cst_49 = arith.constant 2.560000e+02 : f32
    %121 = vector.broadcast %cst_49 : f32 to vector<8x1xf32>
    %122 = arith.divf %120, %121 : vector<8x1xf32>
    %123 = vector.broadcast %115 : vector<8x1xf32> to vector<8x256xf32>
    %124 = arith.subf %107, %123 : vector<8x256xf32>
    %cst_50 = arith.constant 9.99999974E-6 : f32
    %125 = vector.broadcast %cst_50 : f32 to vector<8x1xf32>
    %126 = arith.addf %122, %125 : vector<8x1xf32>
    %127 = math.rsqrt %126 : vector<8x1xf32>
    %128 = vector.broadcast %127 : vector<8x1xf32> to vector<8x256xf32>
    %129 = arith.mulf %124, %128 : vector<8x256xf32>
    %130 = vector.broadcast %109 : vector<1x256xf32> to vector<8x256xf32>
    %131 = arith.mulf %129, %130 : vector<8x256xf32>
    %132 = vector.broadcast %111 : vector<1x256xf32> to vector<8x256xf32>
    %133 = arith.addf %131, %132 : vector<8x256xf32>
    %c0_51 = arith.constant 0 : index
    %c0_52 = arith.constant 0 : index
    %c0_53 = arith.constant 0 : index
    %134 = vector.load %arg6[%c0_51, %c0_52, %c0_53] : memref<2x256x64xf32, #tpu.memory_space<vmem>>, vector<1x256x64xf32>
    %135 = vector.shape_cast %134 : vector<1x256x64xf32> to vector<256x64xf32>
    %cst_54 = arith.constant dense<0.000000e+00> : vector<8x64xf32>
    %136 = tpu.matmul %133, %135, %cst_54 {dimension_numbers = #tpu.dot_dimension_numbers<[1], [0], [0], [1], [0, 0, 1, 1], [], []>} : vector<8x256xf32>, vector<256x64xf32>, vector<8x64xf32> -> vector<8x64xf32>
    %c0_55 = arith.constant 0 : index
    %c0_56 = arith.constant 0 : index
    %c0_57 = arith.constant 0 : index
    %137 = vector.load %arg7[%c0_55, %c0_56, %c0_57] : memref<2x1x64xf32, #tpu.memory_space<vmem>>, vector<1x1x64xf32>
    %138 = vector.shape_cast %137 : vector<1x1x64xf32> to vector<1x64xf32>
    %139 = vector.broadcast %138 : vector<1x64xf32> to vector<8x64xf32>
    %140 = arith.addf %136, %139 : vector<8x64xf32>
    %cst_58 = arith.constant 0.000000e+00 : f32
    %141 = vector.broadcast %cst_58 : f32 to vector<8x64xf32>
    %142 = arith.maximumf %140, %141 : vector<8x64xf32>
    %c0_59 = arith.constant 0 : index
    %c0_60 = arith.constant 0 : index
    %c0_61 = arith.constant 0 : index
    %143 = vector.load %arg8[%c0_59, %c0_60, %c0_61] : memref<2x64x256xf32, #tpu.memory_space<vmem>>, vector<1x64x256xf32>
    %144 = vector.shape_cast %143 : vector<1x64x256xf32> to vector<64x256xf32>
    %cst_62 = arith.constant dense<0.000000e+00> : vector<8x256xf32>
    %145 = tpu.matmul %142, %144, %cst_62 {dimension_numbers = #tpu.dot_dimension_numbers<[1], [0], [0], [1], [0, 0, 1, 1], [], []>} : vector<8x64xf32>, vector<64x256xf32>, vector<8x256xf32> -> vector<8x256xf32>
    %c0_63 = arith.constant 0 : index
    %c0_64 = arith.constant 0 : index
    %c0_65 = arith.constant 0 : index
    %146 = vector.load %arg9[%c0_63, %c0_64, %c0_65] : memref<2x1x256xf32, #tpu.memory_space<vmem>>, vector<1x1x256xf32>
    %147 = vector.shape_cast %146 : vector<1x1x256xf32> to vector<1x256xf32>
    %148 = vector.broadcast %147 : vector<1x256xf32> to vector<8x256xf32>
    %149 = arith.addf %145, %148 : vector<8x256xf32>
    %150 = arith.addf %133, %149 : vector<8x256xf32>
    %c0_66 = arith.constant 0 : index
    %c0_67 = arith.constant 0 : index
    %c0_68 = arith.constant 0 : index
    %151 = vector.load %arg12[%c0_66, %c0_67, %c0_68] : memref<2x1x256xf32, #tpu.memory_space<vmem>>, vector<1x1x256xf32>
    %152 = vector.shape_cast %151 : vector<1x1x256xf32> to vector<1x256xf32>
    %c0_69 = arith.constant 0 : index
    %c0_70 = arith.constant 0 : index
    %c0_71 = arith.constant 0 : index
    %153 = vector.load %arg13[%c0_69, %c0_70, %c0_71] : memref<2x1x256xf32, #tpu.memory_space<vmem>>, vector<1x1x256xf32>
    %154 = vector.shape_cast %153 : vector<1x1x256xf32> to vector<1x256xf32>
    %cst_72 = arith.constant dense<0.000000e+00> : vector<8xf32>
    %155 = vector.multi_reduction <add>, %150, %cst_72 [1] : vector<8x256xf32> to vector<8xf32>
    %156 = vector.shape_cast %155 : vector<8xf32> to vector<8x1xf32>
    %cst_73 = arith.constant 2.560000e+02 : f32
    %157 = vector.broadcast %cst_73 : f32 to vector<8x1xf32>
    %158 = arith.divf %156, %157 : vector<8x1xf32>
    %159 = vector.broadcast %158 : vector<8x1xf32> to vector<8x256xf32>
    %160 = arith.subf %150, %159 : vector<8x256xf32>
    %161 = arith.mulf %160, %160 : vector<8x256xf32>
    %cst_74 = arith.constant dense<0.000000e+00> : vector<8xf32>
    %162 = vector.multi_reduction <add>, %161, %cst_74 [1] : vector<8x256xf32> to vector<8xf32>
    %163 = vector.shape_cast %162 : vector<8xf32> to vector<8x1xf32>
    %cst_75 = arith.constant 2.560000e+02 : f32
    %164 = vector.broadcast %cst_75 : f32 to vector<8x1xf32>
    %165 = arith.divf %163, %164 : vector<8x1xf32>
    %166 = vector.broadcast %158 : vector<8x1xf32> to vector<8x256xf32>
    %167 = arith.subf %150, %166 : vector<8x256xf32>
    %cst_76 = arith.constant 9.99999974E-6 : f32
    %168 = vector.broadcast %cst_76 : f32 to vector<8x1xf32>
    %169 = arith.addf %165, %168 : vector<8x1xf32>
    %170 = math.rsqrt %169 : vector<8x1xf32>
    %171 = vector.broadcast %170 : vector<8x1xf32> to vector<8x256xf32>
    %172 = arith.mulf %167, %171 : vector<8x256xf32>
    %173 = vector.broadcast %152 : vector<1x256xf32> to vector<8x256xf32>
    %174 = arith.mulf %172, %173 : vector<8x256xf32>
    %175 = vector.broadcast %154 : vector<1x256xf32> to vector<8x256xf32>
    %176 = arith.addf %174, %175 : vector<8x256xf32>
    %c1 = arith.constant 1 : index
    %c0_77 = arith.constant 0 : index
    %c0_78 = arith.constant 0 : index
    %177 = vector.load %arg2[%c1, %c0_77, %c0_78] : memref<2x256x768xf32, #tpu.memory_space<vmem>>, vector<1x256x768xf32>
    %178 = vector.shape_cast %177 : vector<1x256x768xf32> to vector<256x768xf32>
    %cst_79 = arith.constant dense<0.000000e+00> : vector<8x768xf32>
    %179 = tpu.matmul %176, %178, %cst_79 {dimension_numbers = #tpu.dot_dimension_numbers<[1], [0], [0], [1], [0, 0, 1, 1], [], []>} : vector<8x256xf32>, vector<256x768xf32>, vector<8x768xf32> -> vector<8x768xf32>
    %c1_80 = arith.constant 1 : index
    %c0_81 = arith.constant 0 : index
    %c0_82 = arith.constant 0 : index
    %180 = vector.load %arg3[%c1_80, %c0_81, %c0_82] : memref<2x1x768xf32, #tpu.memory_space<vmem>>, vector<1x1x768xf32>
    %181 = vector.shape_cast %180 : vector<1x1x768xf32> to vector<1x768xf32>
    %182 = vector.broadcast %181 : vector<1x768xf32> to vector<8x768xf32>
    %183 = arith.addf %179, %182 : vector<8x768xf32>
    %184 = vector.extract_strided_slice %183 {offsets = [0, 0], sizes = [8, 256], strides = [1, 1]} : vector<8x768xf32> to vector<8x256xf32>
    %185 = vector.extract_strided_slice %183 {offsets = [0, 256], sizes = [8, 256], strides = [1, 1]} : vector<8x768xf32> to vector<8x256xf32>
    %186 = vector.extract_strided_slice %183 {offsets = [0, 512], sizes = [8, 256], strides = [1, 1]} : vector<8x768xf32> to vector<8x256xf32>
    %c1_83 = arith.constant 1 : index
    %c0_84 = arith.constant 0 : index
    %c0_85 = arith.constant 0 : index
    %187 = vector.load %arg4[%c1_83, %c0_84, %c0_85] : memref<2x256x256xf32, #tpu.memory_space<vmem>>, vector<1x256x256xf32>
    %188 = vector.shape_cast %187 : vector<1x256x256xf32> to vector<256x256xf32>
    %c1_86 = arith.constant 1 : index
    %c0_87 = arith.constant 0 : index
    %c0_88 = arith.constant 0 : index
    %189 = vector.load %arg5[%c1_86, %c0_87, %c0_88] : memref<2x1x256xf32, #tpu.memory_space<vmem>>, vector<1x1x256xf32>
    %190 = vector.shape_cast %189 : vector<1x1x256xf32> to vector<1x256xf32>
    %191 = vector.extract_strided_slice %184 {offsets = [0, 0], sizes = [8, 64], strides = [1, 1]} : vector<8x256xf32> to vector<8x64xf32>
    %192 = vector.extract_strided_slice %185 {offsets = [0, 0], sizes = [8, 64], strides = [1, 1]} : vector<8x256xf32> to vector<8x64xf32>
    %cst_89 = arith.constant dense<0.000000e+00> : vector<8x8xf32>
    %193 = tpu.matmul %191, %192, %cst_89 {dimension_numbers = #tpu.dot_dimension_numbers<[1], [1], [0], [0], [0, 0, 1, 0], [], []>} : vector<8x64xf32>, vector<8x64xf32>, vector<8x8xf32> -> vector<8x8xf32>
    %cst_90 = arith.constant 1.250000e-01 : f32
    %194 = vector.broadcast %cst_90 : f32 to vector<8x8xf32>
    %195 = arith.mulf %193, %194 : vector<8x8xf32>
    %196 = arith.addf %195, %7 : vector<8x8xf32>
    %cst_91 = arith.constant dense<0xFF800000> : vector<8xf32>
    %197 = vector.multi_reduction <maximumf>, %196, %cst_91 [1] : vector<8x8xf32> to vector<8xf32>
    %198 = vector.shape_cast %197 : vector<8xf32> to vector<8x1xf32>
    %199 = vector.broadcast %198 : vector<8x1xf32> to vector<8x8xf32>
    %200 = arith.subf %196, %199 : vector<8x8xf32>
    %201 = math.exp %200 : vector<8x8xf32>
    %cst_92 = arith.constant dense<0.000000e+00> : vector<8xf32>
    %202 = vector.multi_reduction <add>, %201, %cst_92 [1] : vector<8x8xf32> to vector<8xf32>
    %203 = vector.shape_cast %202 : vector<8xf32> to vector<8x1xf32>
    %204 = tpu.reciprocal %203 {approx = true} : vector<8x1xf32> -> vector<8x1xf32>
    %205 = vector.broadcast %204 : vector<8x1xf32> to vector<8x8xf32>
    %206 = arith.mulf %201, %205 : vector<8x8xf32>
    %207 = vector.extract_strided_slice %186 {offsets = [0, 0], sizes = [8, 64], strides = [1, 1]} : vector<8x256xf32> to vector<8x64xf32>
    %cst_93 = arith.constant dense<0.000000e+00> : vector<8x64xf32>
    %208 = tpu.matmul %206, %207, %cst_93 {dimension_numbers = #tpu.dot_dimension_numbers<[1], [0], [0], [1], [0, 0, 1, 1], [], []>} : vector<8x8xf32>, vector<8x64xf32>, vector<8x64xf32> -> vector<8x64xf32>
    %209 = vector.extract_strided_slice %188 {offsets = [0, 0], sizes = [64, 256], strides = [1, 1]} : vector<256x256xf32> to vector<64x256xf32>
    %cst_94 = arith.constant dense<0.000000e+00> : vector<8x256xf32>
    %210 = tpu.matmul %208, %209, %cst_94 {dimension_numbers = #tpu.dot_dimension_numbers<[1], [0], [0], [1], [0, 0, 1, 1], [], []>} : vector<8x64xf32>, vector<64x256xf32>, vector<8x256xf32> -> vector<8x256xf32>
    %211 = vector.broadcast %190 : vector<1x256xf32> to vector<8x256xf32>
    %212 = arith.addf %211, %210 : vector<8x256xf32>
    %213 = vector.extract_strided_slice %184 {offsets = [0, 64], sizes = [8, 64], strides = [1, 1]} : vector<8x256xf32> to vector<8x64xf32>
    %214 = vector.extract_strided_slice %185 {offsets = [0, 64], sizes = [8, 64], strides = [1, 1]} : vector<8x256xf32> to vector<8x64xf32>
    %cst_95 = arith.constant dense<0.000000e+00> : vector<8x8xf32>
    %215 = tpu.matmul %213, %214, %cst_95 {dimension_numbers = #tpu.dot_dimension_numbers<[1], [1], [0], [0], [0, 0, 1, 0], [], []>} : vector<8x64xf32>, vector<8x64xf32>, vector<8x8xf32> -> vector<8x8xf32>
    %cst_96 = arith.constant 1.250000e-01 : f32
    %216 = vector.broadcast %cst_96 : f32 to vector<8x8xf32>
    %217 = arith.mulf %215, %216 : vector<8x8xf32>
    %218 = arith.addf %217, %7 : vector<8x8xf32>
    %cst_97 = arith.constant dense<0xFF800000> : vector<8xf32>
    %219 = vector.multi_reduction <maximumf>, %218, %cst_97 [1] : vector<8x8xf32> to vector<8xf32>
    %220 = vector.shape_cast %219 : vector<8xf32> to vector<8x1xf32>
    %221 = vector.broadcast %220 : vector<8x1xf32> to vector<8x8xf32>
    %222 = arith.subf %218, %221 : vector<8x8xf32>
    %223 = math.exp %222 : vector<8x8xf32>
    %cst_98 = arith.constant dense<0.000000e+00> : vector<8xf32>
    %224 = vector.multi_reduction <add>, %223, %cst_98 [1] : vector<8x8xf32> to vector<8xf32>
    %225 = vector.shape_cast %224 : vector<8xf32> to vector<8x1xf32>
    %226 = tpu.reciprocal %225 {approx = true} : vector<8x1xf32> -> vector<8x1xf32>
    %227 = vector.broadcast %226 : vector<8x1xf32> to vector<8x8xf32>
    %228 = arith.mulf %223, %227 : vector<8x8xf32>
    %229 = vector.extract_strided_slice %186 {offsets = [0, 64], sizes = [8, 64], strides = [1, 1]} : vector<8x256xf32> to vector<8x64xf32>
    %cst_99 = arith.constant dense<0.000000e+00> : vector<8x64xf32>
    %230 = tpu.matmul %228, %229, %cst_99 {dimension_numbers = #tpu.dot_dimension_numbers<[1], [0], [0], [1], [0, 0, 1, 1], [], []>} : vector<8x8xf32>, vector<8x64xf32>, vector<8x64xf32> -> vector<8x64xf32>
    %231 = vector.extract_strided_slice %188 {offsets = [64, 0], sizes = [64, 256], strides = [1, 1]} : vector<256x256xf32> to vector<64x256xf32>
    %cst_100 = arith.constant dense<0.000000e+00> : vector<8x256xf32>
    %232 = tpu.matmul %230, %231, %cst_100 {dimension_numbers = #tpu.dot_dimension_numbers<[1], [0], [0], [1], [0, 0, 1, 1], [], []>} : vector<8x64xf32>, vector<64x256xf32>, vector<8x256xf32> -> vector<8x256xf32>
    %233 = arith.addf %212, %232 : vector<8x256xf32>
    %234 = vector.extract_strided_slice %184 {offsets = [0, 128], sizes = [8, 64], strides = [1, 1]} : vector<8x256xf32> to vector<8x64xf32>
    %235 = vector.extract_strided_slice %185 {offsets = [0, 128], sizes = [8, 64], strides = [1, 1]} : vector<8x256xf32> to vector<8x64xf32>
    %cst_101 = arith.constant dense<0.000000e+00> : vector<8x8xf32>
    %236 = tpu.matmul %234, %235, %cst_101 {dimension_numbers = #tpu.dot_dimension_numbers<[1], [1], [0], [0], [0, 0, 1, 0], [], []>} : vector<8x64xf32>, vector<8x64xf32>, vector<8x8xf32> -> vector<8x8xf32>
    %cst_102 = arith.constant 1.250000e-01 : f32
    %237 = vector.broadcast %cst_102 : f32 to vector<8x8xf32>
    %238 = arith.mulf %236, %237 : vector<8x8xf32>
    %239 = arith.addf %238, %7 : vector<8x8xf32>
    %cst_103 = arith.constant dense<0xFF800000> : vector<8xf32>
    %240 = vector.multi_reduction <maximumf>, %239, %cst_103 [1] : vector<8x8xf32> to vector<8xf32>
    %241 = vector.shape_cast %240 : vector<8xf32> to vector<8x1xf32>
    %242 = vector.broadcast %241 : vector<8x1xf32> to vector<8x8xf32>
    %243 = arith.subf %239, %242 : vector<8x8xf32>
    %244 = math.exp %243 : vector<8x8xf32>
    %cst_104 = arith.constant dense<0.000000e+00> : vector<8xf32>
    %245 = vector.multi_reduction <add>, %244, %cst_104 [1] : vector<8x8xf32> to vector<8xf32>
    %246 = vector.shape_cast %245 : vector<8xf32> to vector<8x1xf32>
    %247 = tpu.reciprocal %246 {approx = true} : vector<8x1xf32> -> vector<8x1xf32>
    %248 = vector.broadcast %247 : vector<8x1xf32> to vector<8x8xf32>
    %249 = arith.mulf %244, %248 : vector<8x8xf32>
    %250 = vector.extract_strided_slice %186 {offsets = [0, 128], sizes = [8, 64], strides = [1, 1]} : vector<8x256xf32> to vector<8x64xf32>
    %cst_105 = arith.constant dense<0.000000e+00> : vector<8x64xf32>
    %251 = tpu.matmul %249, %250, %cst_105 {dimension_numbers = #tpu.dot_dimension_numbers<[1], [0], [0], [1], [0, 0, 1, 1], [], []>} : vector<8x8xf32>, vector<8x64xf32>, vector<8x64xf32> -> vector<8x64xf32>
    %252 = vector.extract_strided_slice %188 {offsets = [128, 0], sizes = [64, 256], strides = [1, 1]} : vector<256x256xf32> to vector<64x256xf32>
    %cst_106 = arith.constant dense<0.000000e+00> : vector<8x256xf32>
    %253 = tpu.matmul %251, %252, %cst_106 {dimension_numbers = #tpu.dot_dimension_numbers<[1], [0], [0], [1], [0, 0, 1, 1], [], []>} : vector<8x64xf32>, vector<64x256xf32>, vector<8x256xf32> -> vector<8x256xf32>
    %254 = arith.addf %233, %253 : vector<8x256xf32>
    %255 = vector.extract_strided_slice %184 {offsets = [0, 192], sizes = [8, 64], strides = [1, 1]} : vector<8x256xf32> to vector<8x64xf32>
    %256 = vector.extract_strided_slice %185 {offsets = [0, 192], sizes = [8, 64], strides = [1, 1]} : vector<8x256xf32> to vector<8x64xf32>
    %cst_107 = arith.constant dense<0.000000e+00> : vector<8x8xf32>
    %257 = tpu.matmul %255, %256, %cst_107 {dimension_numbers = #tpu.dot_dimension_numbers<[1], [1], [0], [0], [0, 0, 1, 0], [], []>} : vector<8x64xf32>, vector<8x64xf32>, vector<8x8xf32> -> vector<8x8xf32>
    %cst_108 = arith.constant 1.250000e-01 : f32
    %258 = vector.broadcast %cst_108 : f32 to vector<8x8xf32>
    %259 = arith.mulf %257, %258 : vector<8x8xf32>
    %260 = arith.addf %259, %7 : vector<8x8xf32>
    %cst_109 = arith.constant dense<0xFF800000> : vector<8xf32>
    %261 = vector.multi_reduction <maximumf>, %260, %cst_109 [1] : vector<8x8xf32> to vector<8xf32>
    %262 = vector.shape_cast %261 : vector<8xf32> to vector<8x1xf32>
    %263 = vector.broadcast %262 : vector<8x1xf32> to vector<8x8xf32>
    %264 = arith.subf %260, %263 : vector<8x8xf32>
    %265 = math.exp %264 : vector<8x8xf32>
    %cst_110 = arith.constant dense<0.000000e+00> : vector<8xf32>
    %266 = vector.multi_reduction <add>, %265, %cst_110 [1] : vector<8x8xf32> to vector<8xf32>
    %267 = vector.shape_cast %266 : vector<8xf32> to vector<8x1xf32>
    %268 = tpu.reciprocal %267 {approx = true} : vector<8x1xf32> -> vector<8x1xf32>
    %269 = vector.broadcast %268 : vector<8x1xf32> to vector<8x8xf32>
    %270 = arith.mulf %265, %269 : vector<8x8xf32>
    %271 = vector.extract_strided_slice %186 {offsets = [0, 192], sizes = [8, 64], strides = [1, 1]} : vector<8x256xf32> to vector<8x64xf32>
    %cst_111 = arith.constant dense<0.000000e+00> : vector<8x64xf32>
    %272 = tpu.matmul %270, %271, %cst_111 {dimension_numbers = #tpu.dot_dimension_numbers<[1], [0], [0], [1], [0, 0, 1, 1], [], []>} : vector<8x8xf32>, vector<8x64xf32>, vector<8x64xf32> -> vector<8x64xf32>
    %273 = vector.extract_strided_slice %188 {offsets = [192, 0], sizes = [64, 256], strides = [1, 1]} : vector<256x256xf32> to vector<64x256xf32>
    %cst_112 = arith.constant dense<0.000000e+00> : vector<8x256xf32>
    %274 = tpu.matmul %272, %273, %cst_112 {dimension_numbers = #tpu.dot_dimension_numbers<[1], [0], [0], [1], [0, 0, 1, 1], [], []>} : vector<8x64xf32>, vector<64x256xf32>, vector<8x256xf32> -> vector<8x256xf32>
    %275 = arith.addf %254, %274 : vector<8x256xf32>
    %276 = arith.addf %176, %275 : vector<8x256xf32>
    %c1_113 = arith.constant 1 : index
    %c0_114 = arith.constant 0 : index
    %c0_115 = arith.constant 0 : index
    %277 = vector.load %arg10[%c1_113, %c0_114, %c0_115] : memref<2x1x256xf32, #tpu.memory_space<vmem>>, vector<1x1x256xf32>
    %278 = vector.shape_cast %277 : vector<1x1x256xf32> to vector<1x256xf32>
    %c1_116 = arith.constant 1 : index
    %c0_117 = arith.constant 0 : index
    %c0_118 = arith.constant 0 : index
    %279 = vector.load %arg11[%c1_116, %c0_117, %c0_118] : memref<2x1x256xf32, #tpu.memory_space<vmem>>, vector<1x1x256xf32>
    %280 = vector.shape_cast %279 : vector<1x1x256xf32> to vector<1x256xf32>
    %cst_119 = arith.constant dense<0.000000e+00> : vector<8xf32>
    %281 = vector.multi_reduction <add>, %276, %cst_119 [1] : vector<8x256xf32> to vector<8xf32>
    %282 = vector.shape_cast %281 : vector<8xf32> to vector<8x1xf32>
    %cst_120 = arith.constant 2.560000e+02 : f32
    %283 = vector.broadcast %cst_120 : f32 to vector<8x1xf32>
    %284 = arith.divf %282, %283 : vector<8x1xf32>
    %285 = vector.broadcast %284 : vector<8x1xf32> to vector<8x256xf32>
    %286 = arith.subf %276, %285 : vector<8x256xf32>
    %287 = arith.mulf %286, %286 : vector<8x256xf32>
    %cst_121 = arith.constant dense<0.000000e+00> : vector<8xf32>
    %288 = vector.multi_reduction <add>, %287, %cst_121 [1] : vector<8x256xf32> to vector<8xf32>
    %289 = vector.shape_cast %288 : vector<8xf32> to vector<8x1xf32>
    %cst_122 = arith.constant 2.560000e+02 : f32
    %290 = vector.broadcast %cst_122 : f32 to vector<8x1xf32>
    %291 = arith.divf %289, %290 : vector<8x1xf32>
    %292 = vector.broadcast %284 : vector<8x1xf32> to vector<8x256xf32>
    %293 = arith.subf %276, %292 : vector<8x256xf32>
    %cst_123 = arith.constant 9.99999974E-6 : f32
    %294 = vector.broadcast %cst_123 : f32 to vector<8x1xf32>
    %295 = arith.addf %291, %294 : vector<8x1xf32>
    %296 = math.rsqrt %295 : vector<8x1xf32>
    %297 = vector.broadcast %296 : vector<8x1xf32> to vector<8x256xf32>
    %298 = arith.mulf %293, %297 : vector<8x256xf32>
    %299 = vector.broadcast %278 : vector<1x256xf32> to vector<8x256xf32>
    %300 = arith.mulf %298, %299 : vector<8x256xf32>
    %301 = vector.broadcast %280 : vector<1x256xf32> to vector<8x256xf32>
    %302 = arith.addf %300, %301 : vector<8x256xf32>
    %c1_124 = arith.constant 1 : index
    %c0_125 = arith.constant 0 : index
    %c0_126 = arith.constant 0 : index
    %303 = vector.load %arg6[%c1_124, %c0_125, %c0_126] : memref<2x256x64xf32, #tpu.memory_space<vmem>>, vector<1x256x64xf32>
    %304 = vector.shape_cast %303 : vector<1x256x64xf32> to vector<256x64xf32>
    %cst_127 = arith.constant dense<0.000000e+00> : vector<8x64xf32>
    %305 = tpu.matmul %302, %304, %cst_127 {dimension_numbers = #tpu.dot_dimension_numbers<[1], [0], [0], [1], [0, 0, 1, 1], [], []>} : vector<8x256xf32>, vector<256x64xf32>, vector<8x64xf32> -> vector<8x64xf32>
    %c1_128 = arith.constant 1 : index
    %c0_129 = arith.constant 0 : index
    %c0_130 = arith.constant 0 : index
    %306 = vector.load %arg7[%c1_128, %c0_129, %c0_130] : memref<2x1x64xf32, #tpu.memory_space<vmem>>, vector<1x1x64xf32>
    %307 = vector.shape_cast %306 : vector<1x1x64xf32> to vector<1x64xf32>
    %308 = vector.broadcast %307 : vector<1x64xf32> to vector<8x64xf32>
    %309 = arith.addf %305, %308 : vector<8x64xf32>
    %cst_131 = arith.constant 0.000000e+00 : f32
    %310 = vector.broadcast %cst_131 : f32 to vector<8x64xf32>
    %311 = arith.maximumf %309, %310 : vector<8x64xf32>
    %c1_132 = arith.constant 1 : index
    %c0_133 = arith.constant 0 : index
    %c0_134 = arith.constant 0 : index
    %312 = vector.load %arg8[%c1_132, %c0_133, %c0_134] : memref<2x64x256xf32, #tpu.memory_space<vmem>>, vector<1x64x256xf32>
    %313 = vector.shape_cast %312 : vector<1x64x256xf32> to vector<64x256xf32>
    %cst_135 = arith.constant dense<0.000000e+00> : vector<8x256xf32>
    %314 = tpu.matmul %311, %313, %cst_135 {dimension_numbers = #tpu.dot_dimension_numbers<[1], [0], [0], [1], [0, 0, 1, 1], [], []>} : vector<8x64xf32>, vector<64x256xf32>, vector<8x256xf32> -> vector<8x256xf32>
    %c1_136 = arith.constant 1 : index
    %c0_137 = arith.constant 0 : index
    %c0_138 = arith.constant 0 : index
    %315 = vector.load %arg9[%c1_136, %c0_137, %c0_138] : memref<2x1x256xf32, #tpu.memory_space<vmem>>, vector<1x1x256xf32>
    %316 = vector.shape_cast %315 : vector<1x1x256xf32> to vector<1x256xf32>
    %317 = vector.broadcast %316 : vector<1x256xf32> to vector<8x256xf32>
    %318 = arith.addf %314, %317 : vector<8x256xf32>
    %319 = arith.addf %302, %318 : vector<8x256xf32>
    %c1_139 = arith.constant 1 : index
    %c0_140 = arith.constant 0 : index
    %c0_141 = arith.constant 0 : index
    %320 = vector.load %arg12[%c1_139, %c0_140, %c0_141] : memref<2x1x256xf32, #tpu.memory_space<vmem>>, vector<1x1x256xf32>
    %321 = vector.shape_cast %320 : vector<1x1x256xf32> to vector<1x256xf32>
    %c1_142 = arith.constant 1 : index
    %c0_143 = arith.constant 0 : index
    %c0_144 = arith.constant 0 : index
    %322 = vector.load %arg13[%c1_142, %c0_143, %c0_144] : memref<2x1x256xf32, #tpu.memory_space<vmem>>, vector<1x1x256xf32>
    %323 = vector.shape_cast %322 : vector<1x1x256xf32> to vector<1x256xf32>
    %cst_145 = arith.constant dense<0.000000e+00> : vector<8xf32>
    %324 = vector.multi_reduction <add>, %319, %cst_145 [1] : vector<8x256xf32> to vector<8xf32>
    %325 = vector.shape_cast %324 : vector<8xf32> to vector<8x1xf32>
    %cst_146 = arith.constant 2.560000e+02 : f32
    %326 = vector.broadcast %cst_146 : f32 to vector<8x1xf32>
    %327 = arith.divf %325, %326 : vector<8x1xf32>
    %328 = vector.broadcast %327 : vector<8x1xf32> to vector<8x256xf32>
    %329 = arith.subf %319, %328 : vector<8x256xf32>
    %330 = arith.mulf %329, %329 : vector<8x256xf32>
    %cst_147 = arith.constant dense<0.000000e+00> : vector<8xf32>
    %331 = vector.multi_reduction <add>, %330, %cst_147 [1] : vector<8x256xf32> to vector<8xf32>
    %332 = vector.shape_cast %331 : vector<8xf32> to vector<8x1xf32>
    %cst_148 = arith.constant 2.560000e+02 : f32
    %333 = vector.broadcast %cst_148 : f32 to vector<8x1xf32>
    %334 = arith.divf %332, %333 : vector<8x1xf32>
    %335 = vector.broadcast %327 : vector<8x1xf32> to vector<8x256xf32>
    %336 = arith.subf %319, %335 : vector<8x256xf32>
    %cst_149 = arith.constant 9.99999974E-6 : f32
    %337 = vector.broadcast %cst_149 : f32 to vector<8x1xf32>
    %338 = arith.addf %334, %337 : vector<8x1xf32>
    %339 = math.rsqrt %338 : vector<8x1xf32>
    %340 = vector.broadcast %339 : vector<8x1xf32> to vector<8x256xf32>
    %341 = arith.mulf %336, %340 : vector<8x256xf32>
    %342 = vector.broadcast %321 : vector<1x256xf32> to vector<8x256xf32>
    %343 = arith.mulf %341, %342 : vector<8x256xf32>
    %344 = vector.broadcast %323 : vector<1x256xf32> to vector<8x256xf32>
    %345 = arith.addf %343, %344 : vector<8x256xf32>
    %346 = vector.extract_strided_slice %345 {offsets = [7, 0], sizes = [1, 256], strides = [1, 1]} : vector<8x256xf32> to vector<1x256xf32>
    %c0_150 = arith.constant 0 : index
    %c0_151 = arith.constant 0 : index
    %347 = vector.load %arg14[%c0_150, %c0_151] : memref<256x8xf32, #tpu.memory_space<vmem>>, vector<256x8xf32>
    %cst_152 = arith.constant dense<0.000000e+00> : vector<1x8xf32>
    %348 = tpu.matmul %346, %347, %cst_152 {dimension_numbers = #tpu.dot_dimension_numbers<[1], [0], [0], [1], [0, 0, 1, 1], [], []>} : vector<1x256xf32>, vector<256x8xf32>, vector<1x8xf32> -> vector<1x8xf32>
    %c0_153 = arith.constant 0 : index
    %c0_154 = arith.constant 0 : index
    %349 = vector.load %arg15[%c0_153, %c0_154] : memref<1x8xf32, #tpu.memory_space<vmem>>, vector<1x8xf32>
    %350 = arith.addf %348, %349 : vector<1x8xf32>
    %c0_155 = arith.constant 0 : index
    %c0_156 = arith.constant 0 : index
    %c0_157 = arith.constant 0 : index
    %351 = vector.load %arg16[%c0_155, %c0_156, %c0_157] : memref<1x1x8xf32, #tpu.memory_space<vmem>>, vector<1x1x8xf32>
    %352 = vector.shape_cast %351 : vector<1x1x8xf32> to vector<1x8xf32>
    %353 = vector.shape_cast %350 : vector<1x8xf32> to vector<1x1x8xf32>
    tpu.vector_store %arg16[%c0_155, %c0_156, %c0_157], %353 {strides = array<i32>} : memref<1x1x8xf32, #tpu.memory_space<vmem>>, vector<1x1x8xf32>,
    return
  }
  func.func @transform_0(%arg0: i32) -> (i32, i32, i32) {
    %c0_i32 = arith.constant 0 : i32
    %c0_i32_0 = arith.constant 0 : i32
    %c0_i32_1 = arith.constant 0 : i32
    return %arg0, %c0_i32, %c0_i32_0 : i32, i32, i32
  }
  func.func @transform_1(%arg0: i32) -> (i32, i32, i32) {
    %c0_i32 = arith.constant 0 : i32
    %c0_i32_0 = arith.constant 0 : i32
    %c0_i32_1 = arith.constant 0 : i32
    %c0_i32_2 = arith.constant 0 : i32
    return %c0_i32, %c0_i32_0, %c0_i32_1 : i32, i32, i32
  }
  func.func @transform_2(%arg0: i32) -> (i32, i32, i32) {
    %c0_i32 = arith.constant 0 : i32
    %c0_i32_0 = arith.constant 0 : i32
    %c0_i32_1 = arith.constant 0 : i32
    %c0_i32_2 = arith.constant 0 : i32
    return %c0_i32, %c0_i32_0, %c0_i32_1 : i32, i32, i32
  }
  func.func @transform_3(%arg0: i32) -> (i32, i32, i32) {
    %c0_i32 = arith.constant 0 : i32
    %c0_i32_0 = arith.constant 0 : i32
    %c0_i32_1 = arith.constant 0 : i32
    %c0_i32_2 = arith.constant 0 : i32
    return %c0_i32, %c0_i32_0, %c0_i32_1 : i32, i32, i32
  }
  func.func @transform_4(%arg0: i32) -> (i32, i32, i32) {
    %c0_i32 = arith.constant 0 : i32
    %c0_i32_0 = arith.constant 0 : i32
    %c0_i32_1 = arith.constant 0 : i32
    %c0_i32_2 = arith.constant 0 : i32
    return %c0_i32, %c0_i32_0, %c0_i32_1 : i32, i32, i32
  }
  func.func @transform_5(%arg0: i32) -> (i32, i32, i32) {
    %c0_i32 = arith.constant 0 : i32
    %c0_i32_0 = arith.constant 0 : i32
    %c0_i32_1 = arith.constant 0 : i32
    %c0_i32_2 = arith.constant 0 : i32
    return %c0_i32, %c0_i32_0, %c0_i32_1 : i32, i32, i32
  }
  func.func @transform_6(%arg0: i32) -> (i32, i32, i32) {
    %c0_i32 = arith.constant 0 : i32
    %c0_i32_0 = arith.constant 0 : i32
    %c0_i32_1 = arith.constant 0 : i32
    %c0_i32_2 = arith.constant 0 : i32
    return %c0_i32, %c0_i32_0, %c0_i32_1 : i32, i32, i32
  }
  func.func @transform_7(%arg0: i32) -> (i32, i32, i32) {
    %c0_i32 = arith.constant 0 : i32
    %c0_i32_0 = arith.constant 0 : i32
    %c0_i32_1 = arith.constant 0 : i32
    %c0_i32_2 = arith.constant 0 : i32
    return %c0_i32, %c0_i32_0, %c0_i32_1 : i32, i32, i32
  }
  func.func @transform_8(%arg0: i32) -> (i32, i32, i32) {
    %c0_i32 = arith.constant 0 : i32
    %c0_i32_0 = arith.constant 0 : i32
    %c0_i32_1 = arith.constant 0 : i32
    %c0_i32_2 = arith.constant 0 : i32
    return %c0_i32, %c0_i32_0, %c0_i32_1 : i32, i32, i32
  }
  func.func @transform_9(%arg0: i32) -> (i32, i32, i32) {
    %c0_i32 = arith.constant 0 : i32
    %c0_i32_0 = arith.constant 0 : i32
    %c0_i32_1 = arith.constant 0 : i32
    %c0_i32_2 = arith.constant 0 : i32
    return %c0_i32, %c0_i32_0, %c0_i32_1 : i32, i32, i32
  }
  func.func @transform_10(%arg0: i32) -> (i32, i32, i32) {
    %c0_i32 = arith.constant 0 : i32
    %c0_i32_0 = arith.constant 0 : i32
    %c0_i32_1 = arith.constant 0 : i32
    %c0_i32_2 = arith.constant 0 : i32
    return %c0_i32, %c0_i32_0, %c0_i32_1 : i32, i32, i32
  }
  func.func @transform_11(%arg0: i32) -> (i32, i32, i32) {
    %c0_i32 = arith.constant 0 : i32
    %c0_i32_0 = arith.constant 0 : i32
    %c0_i32_1 = arith.constant 0 : i32
    %c0_i32_2 = arith.constant 0 : i32
    return %c0_i32, %c0_i32_0, %c0_i32_1 : i32, i32, i32
  }
  func.func @transform_12(%arg0: i32) -> (i32, i32, i32) {
    %c0_i32 = arith.constant 0 : i32
    %c0_i32_0 = arith.constant 0 : i32
    %c0_i32_1 = arith.constant 0 : i32
    %c0_i32_2 = arith.constant 0 : i32
    return %c0_i32, %c0_i32_0, %c0_i32_1 : i32, i32, i32
  }
  func.func @transform_13(%arg0: i32) -> (i32, i32) {
    %c0_i32 = arith.constant 0 : i32
    %c0_i32_0 = arith.constant 0 : i32
    %c0_i32_1 = arith.constant 0 : i32
    return %c0_i32, %c0_i32_0 : i32, i32
  }
  func.func @transform_14(%arg0: i32) -> (i32, i32) {
    %c0_i32 = arith.constant 0 : i32
    %c0_i32_0 = arith.constant 0 : i32
    %c0_i32_1 = arith.constant 0 : i32
    return %c0_i32, %c0_i32_0 : i32, i32
  }
  func.func @transform_15(%arg0: i32) -> (i32, i32, i32) {
    %c0_i32 = arith.constant 0 : i32
    %c0_i32_0 = arith.constant 0 : i32
    %c0_i32_1 = arith.constant 0 : i32
    return %arg0, %c0_i32, %c0_i32_0 : i32, i32, i32
  }
}

</mosaic_0001>

<llo_original>
// kernel: transformer_forward.1
$region0: #{transformer_forward.1}
  #allocation0 [shape = 'u32[]', space=smem, size = 0x4, offset = 0x4, fixed_abs, tag = 'smem constant byte address 0x4 - core index']
  #allocation1 [shape = 'u32[144,128]{1,0:T(1,128)}', space=vmem, size = 0x12000, scoped, tag = 'internal scratch']
  %s0 = inlined_call_operand.vmem [shape: f32[2,8,256], index: 0, kind: input, shape index: {}]
  %s1 = inlined_call_operand.vmem [shape: f32[2,256,768], index: 1, kind: input, shape index: {}]
  %s2 = inlined_call_operand.vmem [shape: f32[2,1,768], index: 2, kind: input, shape index: {}]
  %s3 = inlined_call_operand.vmem [shape: f32[2,256,256], index: 3, kind: input, shape index: {}]
  %s4 = inlined_call_operand.vmem [shape: f32[2,1,256], index: 4, kind: input, shape index: {}]
  %s5 = inlined_call_operand.vmem [shape: f32[2,256,64], index: 5, kind: input, shape index: {}]
  %s6 = inlined_call_operand.vmem [shape: f32[2,1,64], index: 6, kind: input, shape index: {}]
  %s7 = inlined_call_operand.vmem [shape: f32[2,64,256], index: 7, kind: input, shape index: {}]
  %s8 = inlined_call_operand.vmem [shape: f32[2,1,256], index: 8, kind: input, shape index: {}]
  %s9 = inlined_call_operand.vmem [shape: f32[2,1,256], index: 9, kind: input, shape index: {}]
  %s10 = inlined_call_operand.vmem [shape: f32[2,1,256], index: 10, kind: input, shape index: {}]
  %s11 = inlined_call_operand.vmem [shape: f32[2,1,256], index: 11, kind: input, shape index: {}]
  %s12 = inlined_call_operand.vmem [shape: f32[2,1,256], index: 12, kind: input, shape index: {}]
  %s13 = inlined_call_operand.vmem [shape: f32[256,8], index: 13, kind: input, shape index: {}]
  %s14 = inlined_call_operand.vmem [shape: f32[1,8], index: 14, kind: input, shape index: {}]
  %s15 = inlined_call_operand.hbm [shape: f32[2,1,8], index: 15, kind: output, shape index: {}]
  %s16 = sld [smem:[#allocation0]]
  $region93: #{transformer_forward.1} parent=0
    _
  %s18 = ssub.s32 1, %s16
  %s19 = scalar_select 0, %s18, %s16
  $region1: #{transformer_forward.1} parent=0
    #allocation2 [shape = 'u8[1024]{0}', space=vmem, size = 0x400, scoped, tag = 'output window, operand 0']
    #allocation3 [shape = 's32[2]{0}', space=sflag, size = 0x8, scoped, tag = 'scoped memory for transformer_forward.1']
    %20 = vsyncpa [#allocation3], 0
    %s21 = scalar_lea.sflag [#allocation3], 1
    %22 = vsyncpa %s21, 0
    loop: start=0, step=1, limit=4
    $region2: #{transformer_forward.1} parent=1 // loop_pre_header
      _
    $region3: #{transformer_forward.1} parent=1 // loop_header
      %s24 = sphi 0, %s28
      %p25 = scmp.ge.s32.totalorder %s24, 4
      %s34 = sphi 0, %s36
      %s37 = sphi 0, %s34
      %s38 = sphi 0, %s37
      %s54 = sphi 0, %s38
      %s58 = sphi 0, %s58
      %s60 = sphi 0, %s58
      %s61 = sphi 0, %s60
      %s75 = sphi 0, %s61
      %s79 = sphi 0, %s79
      %s81 = sphi 0, %s79
      %s82 = sphi 0, %s81
      %s96 = sphi 0, %s82
      %s100 = sphi 0, %s100
      %s102 = sphi 0, %s100
      %s103 = sphi 0, %s102
      %s117 = sphi 0, %s103
      %s121 = sphi 0, %s121
      %s123 = sphi 0, %s121
      %s124 = sphi 0, %s123
      %s138 = sphi 0, %s124
      %s142 = sphi 0, %s142
      %s144 = sphi 0, %s142
      %s145 = sphi 0, %s144
      %s159 = sphi 0, %s145
      %s163 = sphi 0, %s163
      %s165 = sphi 0, %s163
      %s166 = sphi 0, %s165
      %s180 = sphi 0, %s166
      %s184 = sphi 0, %s184
      %s186 = sphi 0, %s184
      %s187 = sphi 0, %s186
      %s201 = sphi 0, %s187
      %s205 = sphi 0, %s205
      %s207 = sphi 0, %s205
      %s208 = sphi 0, %s207
      %s222 = sphi 0, %s208
      %s226 = sphi 0, %s226
      %s228 = sphi 0, %s226
      %s229 = sphi 0, %s228
      %s243 = sphi 0, %s229
      %s247 = sphi 0, %s247
      %s249 = sphi 0, %s247
      %s250 = sphi 0, %s249
      %s264 = sphi 0, %s250
      %s268 = sphi 0, %s268
      %s270 = sphi 0, %s268
      %s271 = sphi 0, %s270
      %s285 = sphi 0, %s271
      %s289 = sphi 0, %s289
      %s291 = sphi 0, %s289
      %s292 = sphi 0, %s291
      %s306 = sphi 0, %s292
      %s310 = sphi 0, %s310
      %s312 = sphi 0, %s310
      %s313 = sphi 0, %s312
      %s327 = sphi 0, %s313
      %s331 = sphi 0, %s331
      %s333 = sphi 0, %s331
      %s334 = sphi 0, %s333
      %s348 = sphi 0, %s334
      %s354 = sphi 0, %s356
      %s357 = sphi 0, %s354
      %s358 = sphi 0, %s357
      %s374 = sphi 0, %s358
    $region4: #{transformer_forward.1} parent=1 // loop_header_branch
      %27 = sbr.rel (%p25) target = $region8
    $region5: #{transformer_forward.1} parent=1 // loop_body
      %s29 = ssub.s32 %s24, 1
      %s30 = ssub.s32 %s24, 2
      %s31 = sadd.s32 %s24, 1
      %s32 = ssub.s32 %s24, %s31
      %p33 = scmp.eq.s32.totalorder %s32, 0
      %s35 = sadd.s32 %s34, 1
      %s36 = scalar_select %p33, %s34, %s35
      %p39 = pneg %p33
      %p40 = scmp.eq.s32.totalorder %s24, 1
      %p41 = por %p39, %p40
      %p42 = scmp.ne.s32.totalorder %s34, %s37
      %p43 = scmp.eq.s32.totalorder %s24, 0
      %p44 = por %p42, %p43
      %p45 = scmp.ne.s32.totalorder %s34, %s37
      %p46 = scmp.eq.s32.totalorder %s29, 1
      %p47 = por %p45, %p46
      %p48 = scmp.ne.s32.totalorder %s37, %s38
      %p49 = scmp.eq.s32.totalorder %s29, 0
      %p50 = por %p48, %p49
      %p51 = scmp.ne.s32.totalorder %s37, %s38
      %p52 = scmp.eq.s32.totalorder %s30, 1
      %p53 = por %p51, %p52
      %p55 = scmp.ne.s32.totalorder %s38, %s54
      %p56 = scmp.eq.s32.totalorder %s30, 0
      %p57 = por %p55, %p56
      %s59 = sadd.s32 %s58, 1
      %p62 = scmp.eq.s32.totalorder %s24, 1
      %p63 = scmp.ne.s32.totalorder %s58, %s60
      %p64 = scmp.eq.s32.totalorder %s24, 0
      %p65 = por %p63, %p64
      %p66 = scmp.ne.s32.totalorder %s58, %s60
      %p67 = scmp.eq.s32.totalorder %s29, 1
      %p68 = por %p66, %p67
      %p69 = scmp.ne.s32.totalorder %s60, %s61
      %p70 = scmp.eq.s32.totalorder %s29, 0
      %p71 = por %p69, %p70
      %p72 = scmp.ne.s32.totalorder %s60, %s61
      %p73 = scmp.eq.s32.totalorder %s30, 1
      %p74 = por %p72, %p73
      %p76 = scmp.ne.s32.totalorder %s61, %s75
      %p77 = scmp.eq.s32.totalorder %s30, 0
      %p78 = por %p76, %p77
      %s80 = sadd.s32 %s79, 1
      %p83 = scmp.eq.s32.totalorder %s24, 1
      %p84 = scmp.ne.s32.totalorder %s79, %s81
      %p85 = scmp.eq.s32.totalorder %s24, 0
      %p86 = por %p84, %p85
      %p87 = scmp.ne.s32.totalorder %s79, %s81
      %p88 = scmp.eq.s32.totalorder %s29, 1
      %p89 = por %p87, %p88
      %p90 = scmp.ne.s32.totalorder %s81, %s82
      %p91 = scmp.eq.s32.totalorder %s29, 0
      %p92 = por %p90, %p91
      %p93 = scmp.ne.s32.totalorder %s81, %s82
      %p94 = scmp.eq.s32.totalorder %s30, 1
      %p95 = por %p93, %p94
      %p97 = scmp.ne.s32.totalorder %s82, %s96
      %p98 = scmp.eq.s32.totalorder %s30, 0
      %p99 = por %p97, %p98
      %s101 = sadd.s32 %s100, 1
      %p104 = scmp.eq.s32.totalorder %s24, 1
      %p105 = scmp.ne.s32.totalorder %s100, %s102
      %p106 = scmp.eq.s32.totalorder %s24, 0
      %p107 = por %p105, %p106
      %p108 = scmp.ne.s32.totalorder %s100, %s102
      %p109 = scmp.eq.s32.totalorder %s29, 1
      %p110 = por %p108, %p109
      %p111 = scmp.ne.s32.totalorder %s102, %s103
      %p112 = scmp.eq.s32.totalorder %s29, 0
      %p113 = por %p111, %p112
      %p114 = scmp.ne.s32.totalorder %s102, %s103
      %p115 = scmp.eq.s32.totalorder %s30, 1
      %p116 = por %p114, %p115
      %p118 = scmp.ne.s32.totalorder %s103, %s117
      %p119 = scmp.eq.s32.totalorder %s30, 0
      %p120 = por %p118, %p119
      %s122 = sadd.s32 %s121, 1
      %p125 = scmp.eq.s32.totalorder %s24, 1
      %p126 = scmp.ne.s32.totalorder %s121, %s123
      %p127 = scmp.eq.s32.totalorder %s24, 0
      %p128 = por %p126, %p127
      %p129 = scmp.ne.s32.totalorder %s121, %s123
      %p130 = scmp.eq.s32.totalorder %s29, 1
      %p131 = por %p129, %p130
      %p132 = scmp.ne.s32.totalorder %s123, %s124
      %p133 = scmp.eq.s32.totalorder %s29, 0
      %p134 = por %p132, %p133
      %p135 = scmp.ne.s32.totalorder %s123, %s124
      %p136 = scmp.eq.s32.totalorder %s30, 1
      %p137 = por %p135, %p136
      %p139 = scmp.ne.s32.totalorder %s124, %s138
      %p140 = scmp.eq.s32.totalorder %s30, 0
      %p141 = por %p139, %p140
      %s143 = sadd.s32 %s142, 1
      %p146 = scmp.eq.s32.totalorder %s24, 1
      %p147 = scmp.ne.s32.totalorder %s142, %s144
      %p148 = scmp.eq.s32.totalorder %s24, 0
      %p149 = por %p147, %p148
      %p150 = scmp.ne.s32.totalorder %s142, %s144
      %p151 = scmp.eq.s32.totalorder %s29, 1
      %p152 = por %p150, %p151
      %p153 = scmp.ne.s32.totalorder %s144, %s145
      %p154 = scmp.eq.s32.totalorder %s29, 0
      %p155 = por %p153, %p154
      %p156 = scmp.ne.s32.totalorder %s144, %s145
      %p157 = scmp.eq.s32.totalorder %s30, 1
      %p158 = por %p156, %p157
      %p160 = scmp.ne.s32.totalorder %s145, %s159
      %p161 = scmp.eq.s32.totalorder %s30, 0
      %p162 = por %p160, %p161
      %s164 = sadd.s32 %s163, 1
      %p167 = scmp.eq.s32.totalorder %s24, 1
      %p168 = scmp.ne.s32.totalorder %s163, %s165
      %p169 = scmp.eq.s32.totalorder %s24, 0
      %p170 = por %p168, %p169
      %p171 = scmp.ne.s32.totalorder %s163, %s165
      %p172 = scmp.eq.s32.totalorder %s29, 1
      %p173 = por %p171, %p172
      %p174 = scmp.ne.s32.totalorder %s165, %s166
      %p175 = scmp.eq.s32.totalorder %s29, 0
      %p176 = por %p174, %p175
      %p177 = scmp.ne.s32.totalorder %s165, %s166
      %p178 = scmp.eq.s32.totalorder %s30, 1
      %p179 = por %p177, %p178
      %p181 = scmp.ne.s32.totalorder %s166, %s180
      %p182 = scmp.eq.s32.totalorder %s30, 0
      %p183 = por %p181, %p182
      %s185 = sadd.s32 %s184, 1
      %p188 = scmp.eq.s32.totalorder %s24, 1
      %p189 = scmp.ne.s32.totalorder %s184, %s186
      %p190 = scmp.eq.s32.totalorder %s24, 0
      %p191 = por %p189, %p190
      %p192 = scmp.ne.s32.totalorder %s184, %s186
      %p193 = scmp.eq.s32.totalorder %s29, 1
      %p194 = por %p192, %p193
      %p195 = scmp.ne.s32.totalorder %s186, %s187
      %p196 = scmp.eq.s32.totalorder %s29, 0
      %p197 = por %p195, %p196
      %p198 = scmp.ne.s32.totalorder %s186, %s187
      %p199 = scmp.eq.s32.totalorder %s30, 1
      %p200 = por %p198, %p199
      %p202 = scmp.ne.s32.totalorder %s187, %s201
      %p203 = scmp.eq.s32.totalorder %s30, 0
      %p204 = por %p202, %p203
      %s206 = sadd.s32 %s205, 1
      %p209 = scmp.eq.s32.totalorder %s24, 1
      %p210 = scmp.ne.s32.totalorder %s205, %s207
      %p211 = scmp.eq.s32.totalorder %s24, 0
      %p212 = por %p210, %p211
      %p213 = scmp.ne.s32.totalorder %s205, %s207
      %p214 = scmp.eq.s32.totalorder %s29, 1
      %p215 = por %p213, %p214
      %p216 = scmp.ne.s32.totalorder %s207, %s208
      %p217 = scmp.eq.s32.totalorder %s29, 0
      %p218 = por %p216, %p217
      %p219 = scmp.ne.s32.totalorder %s207, %s208
      %p220 = scmp.eq.s32.totalorder %s30, 1
      %p221 = por %p219, %p220
      %p223 = scmp.ne.s32.totalorder %s208, %s222
      %p224 = scmp.eq.s32.totalorder %s30, 0
      %p225 = por %p223, %p224
      %s227 = sadd.s32 %s226, 1
      %p230 = scmp.eq.s32.totalorder %s24, 1
      %p231 = scmp.ne.s32.totalorder %s226, %s228
      %p232 = scmp.eq.s32.totalorder %s24, 0
      %p233 = por %p231, %p232
      %p234 = scmp.ne.s32.totalorder %s226, %s228
      %p235 = scmp.eq.s32.totalorder %s29, 1
      %p236 = por %p234, %p235
      %p237 = scmp.ne.s32.totalorder %s228, %s229
      %p238 = scmp.eq.s32.totalorder %s29, 0
      %p239 = por %p237, %p238
      %p240 = scmp.ne.s32.totalorder %s228, %s229
      %p241 = scmp.eq.s32.totalorder %s30, 1
      %p242 = por %p240, %p241
      %p244 = scmp.ne.s32.totalorder %s229, %s243
      %p245 = scmp.eq.s32.totalorder %s30, 0
      %p246 = por %p244, %p245
      %s248 = sadd.s32 %s247, 1
      %p251 = scmp.eq.s32.totalorder %s24, 1
      %p252 = scmp.ne.s32.totalorder %s247, %s249
      %p253 = scmp.eq.s32.totalorder %s24, 0
      %p254 = por %p252, %p253
      %p255 = scmp.ne.s32.totalorder %s247, %s249
      %p256 = scmp.eq.s32.totalorder %s29, 1
      %p257 = por %p255, %p256
      %p258 = scmp.ne.s32.totalorder %s249, %s250
      %p259 = scmp.eq.s32.totalorder %s29, 0
      %p260 = por %p258, %p259
      %p261 = scmp.ne.s32.totalorder %s249, %s250
      %p262 = scmp.eq.s32.totalorder %s30, 1
      %p263 = por %p261, %p262
      %p265 = scmp.ne.s32.totalorder %s250, %s264
      %p266 = scmp.eq.s32.totalorder %s30, 0
      %p267 = por %p265, %p266
      %s269 = sadd.s32 %s268, 1
      %p272 = scmp.eq.s32.totalorder %s24, 1
      %p273 = scmp.ne.s32.totalorder %s268, %s270
      %p274 = scmp.eq.s32.totalorder %s24, 0
      %p275 = por %p273, %p274
      %p276 = scmp.ne.s32.totalorder %s268, %s270
      %p277 = scmp.eq.s32.totalorder %s29, 1
      %p278 = por %p276, %p277
      %p279 = scmp.ne.s32.totalorder %s270, %s271
      %p280 = scmp.eq.s32.totalorder %s29, 0
      %p281 = por %p279, %p280
      %p282 = scmp.ne.s32.totalorder %s270, %s271
      %p283 = scmp.eq.s32.totalorder %s30, 1
      %p284 = por %p282, %p283
      %p286 = scmp.ne.s32.totalorder %s271, %s285
      %p287 = scmp.eq.s32.totalorder %s30, 0
      %p288 = por %p286, %p287
      %s290 = sadd.s32 %s289, 1
      %p293 = scmp.eq.s32.totalorder %s24, 1
      %p294 = scmp.ne.s32.totalorder %s289, %s291
      %p295 = scmp.eq.s32.totalorder %s24, 0
      %p296 = por %p294, %p295
      %p297 = scmp.ne.s32.totalorder %s289, %s291
      %p298 = scmp.eq.s32.totalorder %s29, 1
      %p299 = por %p297, %p298
      %p300 = scmp.ne.s32.totalorder %s291, %s292
      %p301 = scmp.eq.s32.totalorder %s29, 0
      %p302 = por %p300, %p301
      %p303 = scmp.ne.s32.totalorder %s291, %s292
      %p304 = scmp.eq.s32.totalorder %s30, 1
      %p305 = por %p303, %p304
      %p307 = scmp.ne.s32.totalorder %s292, %s306
      %p308 = scmp.eq.s32.totalorder %s30, 0
      %p309 = por %p307, %p308
      %s311 = sadd.s32 %s310, 1
      %p314 = scmp.eq.s32.totalorder %s24, 1
      %p315 = scmp.ne.s32.totalorder %s310, %s312
      %p316 = scmp.eq.s32.totalorder %s24, 0
      %p317 = por %p315, %p316
      %p318 = scmp.ne.s32.totalorder %s310, %s312
      %p319 = scmp.eq.s32.totalorder %s29, 1
      %p320 = por %p318, %p319
      %p321 = scmp.ne.s32.totalorder %s312, %s313
      %p322 = scmp.eq.s32.totalorder %s29, 0
      %p323 = por %p321, %p322
      %p324 = scmp.ne.s32.totalorder %s312, %s313
      %p325 = scmp.eq.s32.totalorder %s30, 1
      %p326 = por %p324, %p325
      %p328 = scmp.ne.s32.totalorder %s313, %s327
      %p329 = scmp.eq.s32.totalorder %s30, 0
      %p330 = por %p328, %p329
      %s332 = sadd.s32 %s331, 1
      %p335 = scmp.eq.s32.totalorder %s24, 1
      %p336 = scmp.ne.s32.totalorder %s331, %s333
      %p337 = scmp.eq.s32.totalorder %s24, 0
      %p338 = por %p336, %p337
      %p339 = scmp.ne.s32.totalorder %s331, %s333
      %p340 = scmp.eq.s32.totalorder %s29, 1
      %p341 = por %p339, %p340
      %p342 = scmp.ne.s32.totalorder %s333, %s334
      %p343 = scmp.eq.s32.totalorder %s29, 0
      %p344 = por %p342, %p343
      %p345 = scmp.ne.s32.totalorder %s333, %s334
      %p346 = scmp.eq.s32.totalorder %s30, 1
      %p347 = por %p345, %p346
      %p349 = scmp.ne.s32.totalorder %s334, %s348
      %p350 = scmp.eq.s32.totalorder %s30, 0
      %p351 = por %p349, %p350
      %s352 = ssub.s32 %s24, %s31
      %p353 = scmp.eq.s32.totalorder %s352, 0
      %s355 = sadd.s32 %s354, 1
      %s356 = scalar_select %p353, %s354, %s355
      %p359 = pneg %p353
      %p360 = scmp.eq.s32.totalorder %s24, 1
      %p361 = por %p359, %p360
      %p362 = scmp.ne.s32.totalorder %s354, %s357
      %p363 = scmp.eq.s32.totalorder %s24, 0
      %p364 = por %p362, %p363
      %p365 = scmp.ne.s32.totalorder %s354, %s357
      %p366 = scmp.eq.s32.totalorder %s29, 1
      %p367 = por %p365, %p366
      %p368 = scmp.ne.s32.totalorder %s357, %s358
      %p369 = scmp.eq.s32.totalorder %s29, 0
      %p370 = por %p368, %p369
      %p371 = scmp.ne.s32.totalorder %s357, %s358
      %p372 = scmp.eq.s32.totalorder %s30, 1
      %p373 = por %p371, %p372
      %p375 = scmp.ne.s32.totalorder %s358, %s374
      %p376 = scmp.eq.s32.totalorder %s30, 0
      %p377 = por %p375, %p376
      %p378 = scmp.le.s32.totalorder 1, %s24
      %p379 = scmp.lt.s32.totalorder %s24, 3
      %p380 = pnand %p378, %p379
      %p381 = pneg %p380
      // Predicated region
      $region9: #{transformer_forward.1} parent=5 // pred_check
        _
      $region10: #{transformer_forward.1} parent=5 // pred_check_branch
        %383 = sbr.rel (%p380) target = $region12
      $region11: #{transformer_forward.1} parent=5 // pred_region
        %s384 = ssub.s32 %s24, 1
        // Predicated region
        $region13: #{transformer_forward.1} parent=11 // pred_check
          %p385 = pneg %p71
        $region14: #{transformer_forward.1} parent=11 // pred_check_branch
          %387 = sbr.rel (%p385) target = $region16
        $region15: #{transformer_forward.1} parent=11 // pred_region
          _
        $region16: #{transformer_forward.1} parent=11 // pred_fallthru
          _
        // Predicated region
        $region17: #{transformer_forward.1} parent=11 // pred_check
          %p388 = pneg %p92
        $region18: #{transformer_forward.1} parent=11 // pred_check_branch
          %390 = sbr.rel (%p388) target = $region20
        $region19: #{transformer_forward.1} parent=11 // pred_region
          _
        $region20: #{transformer_forward.1} parent=11 // pred_fallthru
          _
        // Predicated region
        $region21: #{transformer_forward.1} parent=11 // pred_check
          %p391 = pneg %p113
        $region22: #{transformer_forward.1} parent=11 // pred_check_branch
          %393 = sbr.rel (%p391) target = $region24
        $region23: #{transformer_forward.1} parent=11 // pred_region
          _
        $region24: #{transformer_forward.1} parent=11 // pred_fallthru
          _
        // Predicated region
        $region25: #{transformer_forward.1} parent=11 // pred_check
          %p394 = pneg %p134
        $region26: #{transformer_forward.1} parent=11 // pred_check_branch
          %396 = sbr.rel (%p394) target = $region28
        $region27: #{transformer_forward.1} parent=11 // pred_region
          _
        $region28: #{transformer_forward.1} parent=11 // pred_fallthru
          _
        // Predicated region
        $region29: #{transformer_forward.1} parent=11 // pred_check
          %p397 = pneg %p155
        $region30: #{transformer_forward.1} parent=11 // pred_check_branch
          %399 = sbr.rel (%p397) target = $region32
        $region31: #{transformer_forward.1} parent=11 // pred_region
          _
        $region32: #{transformer_forward.1} parent=11 // pred_fallthru
          _
        // Predicated region
        $region33: #{transformer_forward.1} parent=11 // pred_check
          %p400 = pneg %p176
        $region34: #{transformer_forward.1} parent=11 // pred_check_branch
          %402 = sbr.rel (%p400) target = $region36
        $region35: #{transformer_forward.1} parent=11 // pred_region
          _
        $region36: #{transformer_forward.1} parent=11 // pred_fallthru
          _
        // Predicated region
        $region37: #{transformer_forward.1} parent=11 // pred_check
          %p403 = pneg %p197
        $region38: #{transformer_forward.1} parent=11 // pred_check_branch
          %405 = sbr.rel (%p403) target = $region40
        $region39: #{transformer_forward.1} parent=11 // pred_region
          _
        $region40: #{transformer_forward.1} parent=11 // pred_fallthru
          _
        // Predicated region
        $region41: #{transformer_forward.1} parent=11 // pred_check
          %p406 = pneg %p218
        $region42: #{transformer_forward.1} parent=11 // pred_check_branch
          %408 = sbr.rel (%p406) target = $region44
        $region43: #{transformer_forward.1} parent=11 // pred_region
          _
        $region44: #{transformer_forward.1} parent=11 // pred_fallthru
          _
        // Predicated region
        $region45: #{transformer_forward.1} parent=11 // pred_check
          %p409 = pneg %p239
        $region46: #{transformer_forward.1} parent=11 // pred_check_branch
          %411 = sbr.rel (%p409) target = $region48
        $region47: #{transformer_forward.1} parent=11 // pred_region
          _
        $region48: #{transformer_forward.1} parent=11 // pred_fallthru
          _
        // Predicated region
        $region49: #{transformer_forward.1} parent=11 // pred_check
          %p412 = pneg %p260
        $region50: #{transformer_forward.1} parent=11 // pred_check_branch
          %414 = sbr.rel (%p412) target = $region52
        $region51: #{transformer_forward.1} parent=11 // pred_region
          _
        $region52: #{transformer_forward.1} parent=11 // pred_fallthru
          _
        // Predicated region
        $region53: #{transformer_forward.1} parent=11 // pred_check
          %p415 = pneg %p281
        $region54: #{transformer_forward.1} parent=11 // pred_check_branch
          %417 = sbr.rel (%p415) target = $region56
        $region55: #{transformer_forward.1} parent=11 // pred_region
          _
        $region56: #{transformer_forward.1} parent=11 // pred_fallthru
          _
        // Predicated region
        $region57: #{transformer_forward.1} parent=11 // pred_check
          %p418 = pneg %p302
        $region58: #{transformer_forward.1} parent=11 // pred_check_branch
          %420 = sbr.rel (%p418) target = $region60
        $region59: #{transformer_forward.1} parent=11 // pred_region
          _
        $region60: #{transformer_forward.1} parent=11 // pred_fallthru
          _
        // Predicated region
        $region61: #{transformer_forward.1} parent=11 // pred_check
          %p421 = pneg %p323
        $region62: #{transformer_forward.1} parent=11 // pred_check_branch
          %423 = sbr.rel (%p421) target = $region64
        $region63: #{transformer_forward.1} parent=11 // pred_region
          _
        $region64: #{transformer_forward.1} parent=11 // pred_fallthru
          _
        // Predicated region
        $region65: #{transformer_forward.1} parent=11 // pred_check
          %p424 = pneg %p344
        $region66: #{transformer_forward.1} parent=11 // pred_check_branch
          %426 = sbr.rel (%p424) target = $region68
        $region67: #{transformer_forward.1} parent=11 // pred_region
          _
        $region68: #{transformer_forward.1} parent=11 // pred_fallthru
          _
      $region12: #{transformer_forward.1} parent=5 // pred_fallthru
        _
      %p427 = scmp.lt.s32.totalorder %s24, 2
      // Predicated region
      $region69: #{transformer_forward.1} parent=5 // pred_check
        %p428 = pneg %p427
      $region70: #{transformer_forward.1} parent=5 // pred_check_branch
        %430 = sbr.rel (%p428) target = $region72
      $region71: #{transformer_forward.1} parent=5 // pred_region
        // Predicated region
        $region73: #{transformer_forward.1} parent=71 // pred_check
          %p431 = pneg %p44
        $region74: #{transformer_forward.1} parent=71 // pred_check_branch
          %433 = sbr.rel (%p431) target = $region76
        $region75: #{transformer_forward.1} parent=71 // pred_region
          %p434 = scmp.lt.s32.totalorder %s24, 1
          %s435 = scalar_select %p434, %s24, 1
          %s436 = smul.addr %s435, 2
          %s437 = smul.addr %s436, 8
          %s438 = scalar_lea.vmem %s0, %s437
        $region76: #{transformer_forward.1} parent=71 // pred_fallthru
          _
      $region72: #{transformer_forward.1} parent=5 // pred_fallthru
        _
      %p439 = scmp.le.s32.totalorder 1, %s24
      %p440 = scmp.lt.s32.totalorder %s24, 3
      %p441 = pnand %p439, %p440
      %p442 = pneg %p441
      // Predicated region
      $region77: #{transformer_forward.1} parent=5 // pred_check
        _
      $region78: #{transformer_forward.1} parent=5 // pred_check_branch
        %444 = sbr.rel (%p441) target = $region80
      $region79: #{transformer_forward.1} parent=5 // pred_region
        %s445 = ssub.s32 %s24, 1
        %p446 = scmp.lt.s32.totalorder %s29, 1
        %s447 = scalar_select %p446, %s29, 1
        %s448 = smul.addr %s447, 2
        %s449 = smul.addr %s448, 8
        %s450 = scalar_lea.vmem %s0, %s449
        %p451 = pneg %p50
        %p452 = pneg %p47
        %p453 = pneg %p71
        %p454 = pneg %p68
        %p455 = pneg %p92
        %p456 = pneg %p89
        %p457 = pneg %p113
        %p458 = pneg %p110
        %p459 = pneg %p134
        %p460 = pneg %p131
        %p461 = pneg %p155
        %p462 = pneg %p152
        %p463 = pneg %p176
        %p464 = pneg %p173
        %p465 = pneg %p197
        %p466 = pneg %p194
        %p467 = pneg %p218
        %p468 = pneg %p215
        %p469 = pneg %p239
        %p470 = pneg %p236
        %p471 = pneg %p260
        %p472 = pneg %p257
        %p473 = pneg %p281
        %p474 = pneg %p278
        %p475 = pneg %p302
        %p476 = pneg %p299
        %p477 = pneg %p323
        %p478 = pneg %p320
        %p479 = pneg %p344
        %p480 = pneg %p341
        %p481 = pneg %p370
        %p482 = pneg %p367
        %s483 = sand.u32 %s357, 1
        %s484 = scalar_lea.sflag [#allocation3], %s483
        %s485 = sand.u32 %s357, 1
        %s486 = scalar_lea.vmem [#allocation2], %s485
        %p487 = scmp.lt.s32.totalorder %s29, 1
        %s488 = scalar_select %p487, %s29, 1
        %s489 = smul.addr %s488, 2
        %s490 = smul.addr %s489, 8
        %s491 = scalar_lea.vmem %s0, %s490
        %v492 = vld [vmem:[%s491] sm:$0xff]
        %v493 = vld [vmem:[%s491 + $0x8] sm:$0xff]
        %v494 = vlaneseq
        %v495 = vshrl.u32 %v494, 7
        %v496 = vlaneseq
        %v497 = vand.u32 %v496, 127
        %vm498 = vcmp.le.s32.totalorder %v497, %v495
        %v499 = vsel %vm498, 0.0, -1e+09
        %v500 = vld [vmem:[%s1] sm:$0xff]
        %v501 = vld [vmem:[%s1 + $0x8] sm:$0xff]
        %v502 = vld [vmem:[%s1 + $0x10] sm:$0xff]
        %v503 = vld [vmem:[%s1 + $0x18] sm:$0xff]
        %v504 = vld [vmem:[%s1 + $0x20] sm:$0xff]
        %v505 = vld [vmem:[%s1 + $0x28] sm:$0xff]
        %v506 = vld [vmem:[%s1 + $0x30] sm:$0xff]
        %v507 = vld [vmem:[%s1 + $0x38] sm:$0xff]
        %v508 = vld [vmem:[%s1 + $0x40] sm:$0xff]
        %v509 = vld [vmem:[%s1 + $0x48] sm:$0xff]
        %v510 = vld [vmem:[%s1 + $0x50] sm:$0xff]
        %v511 = vld [vmem:[%s1 + $0x58] sm:$0xff]
        %v512 = vld [vmem:[%s1 + $0x60] sm:$0xff]
        %v513 = vld [vmem:[%s1 + $0x68] sm:$0xff]
        %v514 = vld [vmem:[%s1 + $0x70] sm:$0xff]
        %v515 = vld [vmem:[%s1 + $0x78] sm:$0xff]
        %v516 = vld [vmem:[%s1 + $0x80] sm:$0xff]
        %v517 = vld [vmem:[%s1 + $0x88] sm:$0xff]
        %v518 = vld [vmem:[%s1 + $0x90] sm:$0xff]
        %v519 = vld [vmem:[%s1 + $0x98] sm:$0xff]
        %v520 = vld [vmem:[%s1 + $0xa0] sm:$0xff]
        %v521 = vld [vmem:[%s1 + $0xa8] sm:$0xff]
        %v522 = vld [vmem:[%s1 + $0xb0] sm:$0xff]
        %v523 = vld [vmem:[%s1 + $0xb8] sm:$0xff]
        %v524 = vld [vmem:[%s1 + $0xc0] sm:$0xff]
        %v525 = vld [vmem:[%s1 + $0xc8] sm:$0xff]
        %v526 = vld [vmem:[%s1 + $0xd0] sm:$0xff]
        %v527 = vld [vmem:[%s1 + $0xd8] sm:$0xff]
        %v528 = vld [vmem:[%s1 + $0xe0] sm:$0xff]
        %v529 = vld [vmem:[%s1 + $0xe8] sm:$0xff]
        %v530 = vld [vmem:[%s1 + $0xf0] sm:$0xff]
        %v531 = vld [vmem:[%s1 + $0xf8] sm:$0xff]
        %v532 = vld [vmem:[%s1 + $0x100] sm:$0xff]
        %v533 = vld [vmem:[%s1 + $0x108] sm:$0xff]
        %v534 = vld [vmem:[%s1 + $0x110] sm:$0xff]
        %v535 = vld [vmem:[%s1 + $0x118] sm:$0xff]
        %v536 = vld [vmem:[%s1 + $0x120] sm:$0xff]
        %v537 = vld [vmem:[%s1 + $0x128] sm:$0xff]
        %v538 = vld [vmem:[%s1 + $0x130] sm:$0xff]
        %v539 = vld [vmem:[%s1 + $0x138] sm:$0xff]
        %v540 = vld [vmem:[%s1 + $0x140] sm:$0xff]
        %v541 = vld [vmem:[%s1 + $0x148] sm:$0xff]
        %v542 = vld [vmem:[%s1 + $0x150] sm:$0xff]
        %v543 = vld [vmem:[%s1 + $0x158] sm:$0xff]
        %v544 = vld [vmem:[%s1 + $0x160] sm:$0xff]
        %v545 = vld [vmem:[%s1 + $0x168] sm:$0xff]
        %v546 = vld [vmem:[%s1 + $0x170] sm:$0xff]
        %v547 = vld [vmem:[%s1 + $0x178] sm:$0xff]
        %v548 = vld [vmem:[%s1 + $0x180] sm:$0xff]
        %v549 = vld [vmem:[%s1 + $0x188] sm:$0xff]
        %v550 = vld [vmem:[%s1 + $0x190] sm:$0xff]
        %v551 = vld [vmem:[%s1 + $0x198] sm:$0xff]
        %v552 = vld [vmem:[%s1 + $0x1a0] sm:$0xff]
        %v553 = vld [vmem:[%s1 + $0x1a8] sm:$0xff]
        %v554 = vld [vmem:[%s1 + $0x1b0] sm:$0xff]
        %v555 = vld [vmem:[%s1 + $0x1b8] sm:$0xff]
        %v556 = vld [vmem:[%s1 + $0x1c0] sm:$0xff]
        %v557 = vld [vmem:[%s1 + $0x1c8] sm:$0xff]
        %v558 = vld [vmem:[%s1 + $0x1d0] sm:$0xff]
        %v559 = vld [vmem:[%s1 + $0x1d8] sm:$0xff]
        %v560 = vld [vmem:[%s1 + $0x1e0] sm:$0xff]
        %v561 = vld [vmem:[%s1 + $0x1e8] sm:$0xff]
        %v562 = vld [vmem:[%s1 + $0x1f0] sm:$0xff]
        %v563 = vld [vmem:[%s1 + $0x1f8] sm:$0xff]
        %v564 = vld [vmem:[%s1 + $0x200] sm:$0xff]
        %v565 = vld [vmem:[%s1 + $0x208] sm:$0xff]
        %v566 = vld [vmem:[%s1 + $0x210] sm:$0xff]
        %v567 = vld [vmem:[%s1 + $0x218] sm:$0xff]
        %v568 = vld [vmem:[%s1 + $0x220] sm:$0xff]
        %v569 = vld [vmem:[%s1 + $0x228] sm:$0xff]
        %v570 = vld [vmem:[%s1 + $0x230] sm:$0xff]
        %v571 = vld [vmem:[%s1 + $0x238] sm:$0xff]
        %v572 = vld [vmem:[%s1 + $0x240] sm:$0xff]
        %v573 = vld [vmem:[%s1 + $0x248] sm:$0xff]
        %v574 = vld [vmem:[%s1 + $0x250] sm:$0xff]
        %v575 = vld [vmem:[%s1 + $0x258] sm:$0xff]
        %v576 = vld [vmem:[%s1 + $0x260] sm:$0xff]
        %v577 = vld [vmem:[%s1 + $0x268] sm:$0xff]
        %v578 = vld [vmem:[%s1 + $0x270] sm:$0xff]
        %v579 = vld [vmem:[%s1 + $0x278] sm:$0xff]
        %v580 = vld [vmem:[%s1 + $0x280] sm:$0xff]
        %v581 = vld [vmem:[%s1 + $0x288] sm:$0xff]
        %v582 = vld [vmem:[%s1 + $0x290] sm:$0xff]
        %v583 = vld [vmem:[%s1 + $0x298] sm:$0xff]
        %v584 = vld [vmem:[%s1 + $0x2a0] sm:$0xff]
        %v585 = vld [vmem:[%s1 + $0x2a8] sm:$0xff]
        %v586 = vld [vmem:[%s1 + $0x2b0] sm:$0xff]
        %v587 = vld [vmem:[%s1 + $0x2b8] sm:$0xff]
        %v588 = vld [vmem:[%s1 + $0x2c0] sm:$0xff]
        %v589 = vld [vmem:[%s1 + $0x2c8] sm:$0xff]
        %v590 = vld [vmem:[%s1 + $0x2d0] sm:$0xff]
        %v591 = vld [vmem:[%s1 + $0x2d8] sm:$0xff]
        %v592 = vld [vmem:[%s1 + $0x2e0] sm:$0xff]
        %v593 = vld [vmem:[%s1 + $0x2e8] sm:$0xff]
        %v594 = vld [vmem:[%s1 + $0x2f0] sm:$0xff]
        %v595 = vld [vmem:[%s1 + $0x2f8] sm:$0xff]
        %v596 = vld [vmem:[%s1 + $0x300] sm:$0xff]
        %v597 = vld [vmem:[%s1 + $0x308] sm:$0xff]
        %v598 = vld [vmem:[%s1 + $0x310] sm:$0xff]
        %v599 = vld [vmem:[%s1 + $0x318] sm:$0xff]
        %v600 = vld [vmem:[%s1 + $0x320] sm:$0xff]
        %v601 = vld [vmem:[%s1 + $0x328] sm:$0xff]
        %v602 = vld [vmem:[%s1 + $0x330] sm:$0xff]
        %v603 = vld [vmem:[%s1 + $0x338] sm:$0xff]
        %v604 = vld [vmem:[%s1 + $0x340] sm:$0xff]
        %v605 = vld [vmem:[%s1 + $0x348] sm:$0xff]
        %v606 = vld [vmem:[%s1 + $0x350] sm:$0xff]
        %v607 = vld [vmem:[%s1 + $0x358] sm:$0xff]
        %v608 = vld [vmem:[%s1 + $0x360] sm:$0xff]
        %v609 = vld [vmem:[%s1 + $0x368] sm:$0xff]
        %v610 = vld [vmem:[%s1 + $0x370] sm:$0xff]
        %v611 = vld [vmem:[%s1 + $0x378] sm:$0xff]
        %v612 = vld [vmem:[%s1 + $0x380] sm:$0xff]
        %v613 = vld [vmem:[%s1 + $0x388] sm:$0xff]
        %v614 = vld [vmem:[%s1 + $0x390] sm:$0xff]
        %v615 = vld [vmem:[%s1 + $0x398] sm:$0xff]
        %v616 = vld [vmem:[%s1 + $0x3a0] sm:$0xff]
        %v617 = vld [vmem:[%s1 + $0x3a8] sm:$0xff]
        %v618 = vld [vmem:[%s1 + $0x3b0] sm:$0xff]
        %v619 = vld [vmem:[%s1 + $0x3b8] sm:$0xff]
        %v620 = vld [vmem:[%s1 + $0x3c0] sm:$0xff]
        %v621 = vld [vmem:[%s1 + $0x3c8] sm:$0xff]
        %v622 = vld [vmem:[%s1 + $0x3d0] sm:$0xff]
        %v623 = vld [vmem:[%s1 + $0x3d8] sm:$0xff]
        %v624 = vld [vmem:[%s1 + $0x3e0] sm:$0xff]
        %v625 = vld [vmem:[%s1 + $0x3e8] sm:$0xff]
        %v626 = vld [vmem:[%s1 + $0x3f0] sm:$0xff]
        %v627 = vld [vmem:[%s1 + $0x3f8] sm:$0xff]
        %v628 = vld [vmem:[%s1 + $0x400] sm:$0xff]
        %v629 = vld [vmem:[%s1 + $0x408] sm:$0xff]
        %v630 = vld [vmem:[%s1 + $0x410] sm:$0xff]
        %v631 = vld [vmem:[%s1 + $0x418] sm:$0xff]
        %v632 = vld [vmem:[%s1 + $0x420] sm:$0xff]
        %v633 = vld [vmem:[%s1 + $0x428] sm:$0xff]
        %v634 = vld [vmem:[%s1 + $0x430] sm:$0xff]
        %v635 = vld [vmem:[%s1 + $0x438] sm:$0xff]
        %v636 = vld [vmem:[%s1 + $0x440] sm:$0xff]
        %v637 = vld [vmem:[%s1 + $0x448] sm:$0xff]
        %v638 = vld [vmem:[%s1 + $0x450] sm:$0xff]
        %v639 = vld [vmem:[%s1 + $0x458] sm:$0xff]
        %v640 = vld [vmem:[%s1 + $0x460] sm:$0xff]
        %v641 = vld [vmem:[%s1 + $0x468] sm:$0xff]
        %v642 = vld [vmem:[%s1 + $0x470] sm:$0xff]
        %v643 = vld [vmem:[%s1 + $0x478] sm:$0xff]
        %v644 = vld [vmem:[%s1 + $0x480] sm:$0xff]
        %v645 = vld [vmem:[%s1 + $0x488] sm:$0xff]
        %v646 = vld [vmem:[%s1 + $0x490] sm:$0xff]
        %v647 = vld [vmem:[%s1 + $0x498] sm:$0xff]
        %v648 = vld [vmem:[%s1 + $0x4a0] sm:$0xff]
        %v649 = vld [vmem:[%s1 + $0x4a8] sm:$0xff]
        %v650 = vld [vmem:[%s1 + $0x4b0] sm:$0xff]
        %v651 = vld [vmem:[%s1 + $0x4b8] sm:$0xff]
        %v652 = vld [vmem:[%s1 + $0x4c0] sm:$0xff]
        %v653 = vld [vmem:[%s1 + $0x4c8] sm:$0xff]
        %v654 = vld [vmem:[%s1 + $0x4d0] sm:$0xff]
        %v655 = vld [vmem:[%s1 + $0x4d8] sm:$0xff]
        %v656 = vld [vmem:[%s1 + $0x4e0] sm:$0xff]
        %v657 = vld [vmem:[%s1 + $0x4e8] sm:$0xff]
        %v658 = vld [vmem:[%s1 + $0x4f0] sm:$0xff]
        %v659 = vld [vmem:[%s1 + $0x4f8] sm:$0xff]
        %v660 = vld [vmem:[%s1 + $0x500] sm:$0xff]
        %v661 = vld [vmem:[%s1 + $0x508] sm:$0xff]
        %v662 = vld [vmem:[%s1 + $0x510] sm:$0xff]
        %v663 = vld [vmem:[%s1 + $0x518] sm:$0xff]
        %v664 = vld [vmem:[%s1 + $0x520] sm:$0xff]
        %v665 = vld [vmem:[%s1 + $0x528] sm:$0xff]
        %v666 = vld [vmem:[%s1 + $0x530] sm:$0xff]
        %v667 = vld [vmem:[%s1 + $0x538] sm:$0xff]
        %v668 = vld [vmem:[%s1 + $0x540] sm:$0xff]
        %v669 = vld [vmem:[%s1 + $0x548] sm:$0xff]
        %v670 = vld [vmem:[%s1 + $0x550] sm:$0xff]
        %v671 = vld [vmem:[%s1 + $0x558] sm:$0xff]
        %v672 = vld [vmem:[%s1 + $0x560] sm:$0xff]
        %v673 = vld [vmem:[%s1 + $0x568] sm:$0xff]
        %v674 = vld [vmem:[%s1 + $0x570] sm:$0xff]
        %v675 = vld [vmem:[%s1 + $0x578] sm:$0xff]
        %v676 = vld [vmem:[%s1 + $0x580] sm:$0xff]
        %v677 = vld [vmem:[%s1 + $0x588] sm:$0xff]
        %v678 = vld [vmem:[%s1 + $0x590] sm:$0xff]
        %v679 = vld [vmem:[%s1 + $0x598] sm:$0xff]
        %v680 = vld [vmem:[%s1 + $0x5a0] sm:$0xff]
        %v681 = vld [vmem:[%s1 + $0x5a8] sm:$0xff]
        %v682 = vld [vmem:[%s1 + $0x5b0] sm:$0xff]
        %v683 = vld [vmem:[%s1 + $0x5b8] sm:$0xff]
        %v684 = vld [vmem:[%s1 + $0x5c0] sm:$0xff]
        %v685 = vld [vmem:[%s1 + $0x5c8] sm:$0xff]
        %v686 = vld [vmem:[%s1 + $0x5d0] sm:$0xff]
        %v687 = vld [vmem:[%s1 + $0x5d8] sm:$0xff]
        %v688 = vld [vmem:[%s1 + $0x5e0] sm:$0xff]
        %v689 = vld [vmem:[%s1 + $0x5e8] sm:$0xff]
        %v690 = vld [vmem:[%s1 + $0x5f0] sm:$0xff]
        %v691 = vld [vmem:[%s1 + $0x5f8] sm:$0xff]
        %v692 = vld [vmem:[%s2] sm:$0x3f]
        %v694 = vlaneseq
        %v695 = vshrl.u32 %v694, 7
        %v696 = vsub.s32 0, %v695
        %v697 = vrot.slane %v692, %v696
        %v698 = vlaneseq
        %v699 = vshrl.u32 %v698, 7
        %v700 = vsub.s32 1, %v699
        %v701 = vrot.slane %v692, %v700
        %v702 = vlaneseq
        %v703 = vshrl.u32 %v702, 7
        %v704 = vsub.s32 2, %v703
        %v705 = vrot.slane %v692, %v704
        %v706 = vlaneseq
        %v707 = vshrl.u32 %v706, 7
        %v708 = vsub.s32 3, %v707
        %v709 = vrot.slane %v692, %v708
        %v710 = vlaneseq
        %v711 = vshrl.u32 %v710, 7
        %v712 = vsub.s32 4, %v711
        %v713 = vrot.slane %v692, %v712
        %v714 = vlaneseq
        %v715 = vshrl.u32 %v714, 7
        %v716 = vsub.s32 5, %v715
        %v717 = vrot.slane %v692, %v716
        %724 = vmatprep.subr.mxu0 %v501
        %725 = vmatpush1.msra.mxu0 %v500
        %726 = vmatprep.subr.mxu0 %v507
        %727 = vmatpush1.msra.mxu0 %v506
        %728 = vmatprep.subr.mxu0 %v513
        %729 = vmatpush1.msra.mxu0 %v512
        %730 = vmatprep.subr.mxu0 %v519
        %731 = vmatpush1.msra.mxu0 %v518
        %732 = vmatprep.subr.mxu0 %v525
        %733 = vmatpush1.msra.mxu0 %v524
        %734 = vmatprep.subr.mxu0 %v531
        %735 = vmatpush1.msra.mxu0 %v530
        %736 = vmatprep.subr.mxu0 %v537
        %737 = vmatpush1.msra.mxu0 %v536
        %738 = vmatprep.subr.mxu0 %v543
        %739 = vmatpush1.msra.mxu0 %v542
        %740 = vmatprep.subr.mxu0 %v549
        %741 = vmatpush1.msra.mxu0 %v548
        %742 = vmatprep.subr.mxu0 %v555
        %743 = vmatpush1.msra.mxu0 %v554
        %744 = vmatprep.subr.mxu0 %v561
        %745 = vmatpush1.msra.mxu0 %v560
        %746 = vmatprep.subr.mxu0 %v567
        %747 = vmatpush1.msra.mxu0 %v566
        %748 = vmatprep.subr.mxu0 %v573
        %749 = vmatpush1.msra.mxu0 %v572
        %750 = vmatprep.subr.mxu0 %v579
        %751 = vmatpush1.msra.mxu0 %v578
        %752 = vmatprep.subr.mxu0 %v585
        %753 = vmatpush1.msra.mxu0 %v584
        %754 = vmatprep.subr.mxu0 %v591
        %755 = vmatpush1.msra.mxu0 %v590
        %756 = vmatprep.subr.mxu0 %v597
        %757 = vmatpush1.msra.mxu0 %v596
        %758 = vmatprep.subr.mxu0 %v603
        %759 = vmatpush1.msra.mxu0 %v602
        %760 = vmatprep.subr.mxu0 %v609
        %761 = vmatpush1.msra.mxu0 %v608
        %762 = vmatprep.subr.mxu0 %v615
        %763 = vmatpush1.msra.mxu0 %v614
        %764 = vmatprep.subr.mxu0 %v621
        %765 = vmatpush1.msra.mxu0 %v620
        %766 = vmatprep.subr.mxu0 %v627
        %767 = vmatpush1.msra.mxu0 %v626
        %768 = vmatprep.subr.mxu0 %v633
        %769 = vmatpush1.msra.mxu0 %v632
        %770 = vmatprep.subr.mxu0 %v639
        %771 = vmatpush1.msra.mxu0 %v638
        %772 = vmatprep.subr.mxu0 %v645
        %773 = vmatpush1.msra.mxu0 %v644
        %774 = vmatprep.subr.mxu0 %v651
        %775 = vmatpush1.msra.mxu0 %v650
        %776 = vmatprep.subr.mxu0 %v657
        %777 = vmatpush1.msra.mxu0 %v656
        %778 = vmatprep.subr.mxu0 %v663
        %779 = vmatpush1.msra.mxu0 %v662
        %780 = vmatprep.subr.mxu0 %v669
        %781 = vmatpush1.msra.mxu0 %v668
        %782 = vmatprep.subr.mxu0 %v675
        %783 = vmatpush1.msra.mxu0 %v674
        %784 = vmatprep.subr.mxu0 %v681
        %785 = vmatpush1.msra.mxu0 %v680
        %786 = vmatprep.subr.mxu0 %v687
        %787 = vmatpush1.msra.mxu0 %v686
        %788 = vmatprep.mubr.f32.mxu0 %v493
        %789 = vmatmul.mubr.f32.gmra.mrb[0].mxu0 %v492
        %v790 = vpop.f32.mrb[0].mxu0
        %v791 = vadd.f32 %v697, %v790
        %v792 = vpop.f32.mrb[0].mxu0
        %v793 = vadd.f32 %v701, %v792
        %794 = vdwg.mxu0
        %795 = vmatprep.subr.mxu0 %v503
        %796 = vmatpush1.msra.mxu0 %v502
        %797 = vmatprep.subr.mxu0 %v509
        %798 = vmatpush1.msra.mxu0 %v508
        %799 = vmatprep.subr.mxu0 %v515
        %800 = vmatpush1.msra.mxu0 %v514
        %801 = vmatprep.subr.mxu0 %v521
        %802 = vmatpush1.msra.mxu0 %v520
        %803 = vmatprep.subr.mxu0 %v527
        %804 = vmatpush1.msra.mxu0 %v526
        %805 = vmatprep.subr.mxu0 %v533
        %806 = vmatpush1.msra.mxu0 %v532
        %807 = vmatprep.subr.mxu0 %v539
        %808 = vmatpush1.msra.mxu0 %v538
        %809 = vmatprep.subr.mxu0 %v545
        %810 = vmatpush1.msra.mxu0 %v544
        %811 = vmatprep.subr.mxu0 %v551
        %812 = vmatpush1.msra.mxu0 %v550
        %813 = vmatprep.subr.mxu0 %v557
        %814 = vmatpush1.msra.mxu0 %v556
        %815 = vmatprep.subr.mxu0 %v563
        %816 = vmatpush1.msra.mxu0 %v562
        %817 = vmatprep.subr.mxu0 %v569
        %818 = vmatpush1.msra.mxu0 %v568
        %819 = vmatprep.subr.mxu0 %v575
        %820 = vmatpush1.msra.mxu0 %v574
        %821 = vmatprep.subr.mxu0 %v581
        %822 = vmatpush1.msra.mxu0 %v580
        %823 = vmatprep.subr.mxu0 %v587
        %824 = vmatpush1.msra.mxu0 %v586
        %825 = vmatprep.subr.mxu0 %v593
        %826 = vmatpush1.msra.mxu0 %v592
        %827 = vmatprep.subr.mxu0 %v599
        %828 = vmatpush1.msra.mxu0 %v598
        %829 = vmatprep.subr.mxu0 %v605
        %830 = vmatpush1.msra.mxu0 %v604
        %831 = vmatprep.subr.mxu0 %v611
        %832 = vmatpush1.msra.mxu0 %v610
        %833 = vmatprep.subr.mxu0 %v617
        %834 = vmatpush1.msra.mxu0 %v616
        %835 = vmatprep.subr.mxu0 %v623
        %836 = vmatpush1.msra.mxu0 %v622
        %837 = vmatprep.subr.mxu0 %v629
        %838 = vmatpush1.msra.mxu0 %v628
        %839 = vmatprep.subr.mxu0 %v635
        %840 = vmatpush1.msra.mxu0 %v634
        %841 = vmatprep.subr.mxu0 %v641
        %842 = vmatpush1.msra.mxu0 %v640
        %843 = vmatprep.subr.mxu0 %v647
        %844 = vmatpush1.msra.mxu0 %v646
        %845 = vmatprep.subr.mxu0 %v653
        %846 = vmatpush1.msra.mxu0 %v652
        %847 = vmatprep.subr.mxu0 %v659
        %848 = vmatpush1.msra.mxu0 %v658
        %849 = vmatprep.subr.mxu0 %v665
        %850 = vmatpush1.msra.mxu0 %v664
        %851 = vmatprep.subr.mxu0 %v671
        %852 = vmatpush1.msra.mxu0 %v670
        %853 = vmatprep.subr.mxu0 %v677
        %854 = vmatpush1.msra.mxu0 %v676
        %855 = vmatprep.subr.mxu0 %v683
        %856 = vmatpush1.msra.mxu0 %v682
        %857 = vmatprep.subr.mxu0 %v689
        %858 = vmatpush1.msra.mxu0 %v688
        %859 = vmatprep.mubr.f32.mxu0 %v493
        %860 = vmatmul.mubr.f32.gmra.mrb[0].mxu0 %v492
        %v861 = vpop.f32.mrb[0].mxu0
        %v862 = vadd.f32 %v705, %v861
        %v863 = vpop.f32.mrb[0].mxu0
        %v864 = vadd.f32 %v709, %v863
        %865 = vdwg.mxu0
        %866 = vmatprep.subr.mxu0 %v505
        %867 = vmatpush1.msra.mxu0 %v504
        %868 = vmatprep.subr.mxu0 %v511
        %869 = vmatpush1.msra.mxu0 %v510
        %870 = vmatprep.subr.mxu0 %v517
        %871 = vmatpush1.msra.mxu0 %v516
        %872 = vmatprep.subr.mxu0 %v523
        %873 = vmatpush1.msra.mxu0 %v522
        %874 = vmatprep.subr.mxu0 %v529
        %875 = vmatpush1.msra.mxu0 %v528
        %876 = vmatprep.subr.mxu0 %v535
        %877 = vmatpush1.msra.mxu0 %v534
        %878 = vmatprep.subr.mxu0 %v541
        %879 = vmatpush1.msra.mxu0 %v540
        %880 = vmatprep.subr.mxu0 %v547
        %881 = vmatpush1.msra.mxu0 %v546
        %882 = vmatprep.subr.mxu0 %v553
        %883 = vmatpush1.msra.mxu0 %v552
        %884 = vmatprep.subr.mxu0 %v559
        %885 = vmatpush1.msra.mxu0 %v558
        %886 = vmatprep.subr.mxu0 %v565
        %887 = vmatpush1.msra.mxu0 %v564
        %888 = vmatprep.subr.mxu0 %v571
        %889 = vmatpush1.msra.mxu0 %v570
        %890 = vmatprep.subr.mxu0 %v577
        %891 = vmatpush1.msra.mxu0 %v576
        %892 = vmatprep.subr.mxu0 %v583
        %893 = vmatpush1.msra.mxu0 %v582
        %894 = vmatprep.subr.mxu0 %v589
        %895 = vmatpush1.msra.mxu0 %v588
        %896 = vmatprep.subr.mxu0 %v595
        %897 = vmatpush1.msra.mxu0 %v594
        %898 = vmatprep.subr.mxu0 %v601
        %899 = vmatpush1.msra.mxu0 %v600
        %900 = vmatprep.subr.mxu0 %v607
        %901 = vmatpush1.msra.mxu0 %v606
        %902 = vmatprep.subr.mxu0 %v613
        %903 = vmatpush1.msra.mxu0 %v612
        %904 = vmatprep.subr.mxu0 %v619
        %905 = vmatpush1.msra.mxu0 %v618
        %906 = vmatprep.subr.mxu0 %v625
        %907 = vmatpush1.msra.mxu0 %v624
        %908 = vmatprep.subr.mxu0 %v631
        %909 = vmatpush1.msra.mxu0 %v630
        %910 = vmatprep.subr.mxu0 %v637
        %911 = vmatpush1.msra.mxu0 %v636
        %912 = vmatprep.subr.mxu0 %v643
        %913 = vmatpush1.msra.mxu0 %v642
        %914 = vmatprep.subr.mxu0 %v649
        %915 = vmatpush1.msra.mxu0 %v648
        %916 = vmatprep.subr.mxu0 %v655
        %917 = vmatpush1.msra.mxu0 %v654
        %918 = vmatprep.subr.mxu0 %v661
        %919 = vmatpush1.msra.mxu0 %v660
        %920 = vmatprep.subr.mxu0 %v667
        %921 = vmatpush1.msra.mxu0 %v666
        %922 = vmatprep.subr.mxu0 %v673
        %923 = vmatpush1.msra.mxu0 %v672
        %924 = vmatprep.subr.mxu0 %v679
        %925 = vmatpush1.msra.mxu0 %v678
        %926 = vmatprep.subr.mxu0 %v685
        %927 = vmatpush1.msra.mxu0 %v684
        %928 = vmatprep.subr.mxu0 %v691
        %929 = vmatpush1.msra.mxu0 %v690
        %930 = vmatprep.mubr.f32.mxu0 %v493
        %931 = vmatmul.mubr.f32.gmra.mrb[0].mxu0 %v492
        %v932 = vpop.f32.mrb[0].mxu0
        %v933 = vadd.f32 %v713, %v932
        %v934 = vpop.f32.mrb[0].mxu0
        %v935 = vadd.f32 %v717, %v934
        %936 = vdwg.mxu0
        %v937 = vld [vmem:[%s3] sm:$0xff]
        %v938 = vld [vmem:[%s3 + $0x8] sm:$0xff]
        %v939 = vld [vmem:[%s3 + $0x10] sm:$0xff]
        %v940 = vld [vmem:[%s3 + $0x18] sm:$0xff]
        %v941 = vld [vmem:[%s3 + $0x20] sm:$0xff]
        %v942 = vld [vmem:[%s3 + $0x28] sm:$0xff]
        %v943 = vld [vmem:[%s3 + $0x30] sm:$0xff]
        %v944 = vld [vmem:[%s3 + $0x38] sm:$0xff]
        %v945 = vld [vmem:[%s3 + $0x40] sm:$0xff]
        %v946 = vld [vmem:[%s3 + $0x48] sm:$0xff]
        %v947 = vld [vmem:[%s3 + $0x50] sm:$0xff]
        %v948 = vld [vmem:[%s3 + $0x58] sm:$0xff]
        %v949 = vld [vmem:[%s3 + $0x60] sm:$0xff]
        %v950 = vld [vmem:[%s3 + $0x68] sm:$0xff]
        %v951 = vld [vmem:[%s3 + $0x70] sm:$0xff]
        %v952 = vld [vmem:[%s3 + $0x78] sm:$0xff]
        %v953 = vld [vmem:[%s3 + $0x80] sm:$0xff]
        %v954 = vld [vmem:[%s3 + $0x88] sm:$0xff]
        %v955 = vld [vmem:[%s3 + $0x90] sm:$0xff]
        %v956 = vld [vmem:[%s3 + $0x98] sm:$0xff]
        %v957 = vld [vmem:[%s3 + $0xa0] sm:$0xff]
        %v958 = vld [vmem:[%s3 + $0xa8] sm:$0xff]
        %v959 = vld [vmem:[%s3 + $0xb0] sm:$0xff]
        %v960 = vld [vmem:[%s3 + $0xb8] sm:$0xff]
        %v961 = vld [vmem:[%s3 + $0xc0] sm:$0xff]
        %v962 = vld [vmem:[%s3 + $0xc8] sm:$0xff]
        %v963 = vld [vmem:[%s3 + $0xd0] sm:$0xff]
        %v964 = vld [vmem:[%s3 + $0xd8] sm:$0xff]
        %v965 = vld [vmem:[%s3 + $0xe0] sm:$0xff]
        %v966 = vld [vmem:[%s3 + $0xe8] sm:$0xff]
        %v967 = vld [vmem:[%s3 + $0xf0] sm:$0xff]
        %v968 = vld [vmem:[%s3 + $0xf8] sm:$0xff]
        %v969 = vld [vmem:[%s3 + $0x100] sm:$0xff]
        %v970 = vld [vmem:[%s3 + $0x108] sm:$0xff]
        %v971 = vld [vmem:[%s3 + $0x110] sm:$0xff]
        %v972 = vld [vmem:[%s3 + $0x118] sm:$0xff]
        %v973 = vld [vmem:[%s3 + $0x120] sm:$0xff]
        %v974 = vld [vmem:[%s3 + $0x128] sm:$0xff]
        %v975 = vld [vmem:[%s3 + $0x130] sm:$0xff]
        %v976 = vld [vmem:[%s3 + $0x138] sm:$0xff]
        %v977 = vld [vmem:[%s3 + $0x140] sm:$0xff]
        %v978 = vld [vmem:[%s3 + $0x148] sm:$0xff]
        %v979 = vld [vmem:[%s3 + $0x150] sm:$0xff]
        %v980 = vld [vmem:[%s3 + $0x158] sm:$0xff]
        %v981 = vld [vmem:[%s3 + $0x160] sm:$0xff]
        %v982 = vld [vmem:[%s3 + $0x168] sm:$0xff]
        %v983 = vld [vmem:[%s3 + $0x170] sm:$0xff]
        %v984 = vld [vmem:[%s3 + $0x178] sm:$0xff]
        %v985 = vld [vmem:[%s3 + $0x180] sm:$0xff]
        %v986 = vld [vmem:[%s3 + $0x188] sm:$0xff]
        %v987 = vld [vmem:[%s3 + $0x190] sm:$0xff]
        %v988 = vld [vmem:[%s3 + $0x198] sm:$0xff]
        %v989 = vld [vmem:[%s3 + $0x1a0] sm:$0xff]
        %v990 = vld [vmem:[%s3 + $0x1a8] sm:$0xff]
        %v991 = vld [vmem:[%s3 + $0x1b0] sm:$0xff]
        %v992 = vld [vmem:[%s3 + $0x1b8] sm:$0xff]
        %v993 = vld [vmem:[%s3 + $0x1c0] sm:$0xff]
        %v994 = vld [vmem:[%s3 + $0x1c8] sm:$0xff]
        %v995 = vld [vmem:[%s3 + $0x1d0] sm:$0xff]
        %v996 = vld [vmem:[%s3 + $0x1d8] sm:$0xff]
        %v997 = vld [vmem:[%s3 + $0x1e0] sm:$0xff]
        %v998 = vld [vmem:[%s3 + $0x1e8] sm:$0xff]
        %v999 = vld [vmem:[%s3 + $0x1f0] sm:$0xff]
        %v1000 = vld [vmem:[%s3 + $0x1f8] sm:$0xff]
        %v1001 = vld [vmem:[%s4] sm:$0x3]
        %vm1002 = vcmask 523264
        %v1004 = vsel %vm1002, %v791, 0
        %v1007 = vsel %vm1002, %v862, 0
        %1009 = vmatprep.subr.mxu0 0.0
        %1010 = vmatpush1.xpose.msra.mxu0 %v1007
        %1011 = vmatprep.subr.mxu0 0.0
        %1012 = vmatpush1.xpose.msra.mxu0 0.0
        %1013 = vmatprep.subr.mxu0 0.0
        %1014 = vmatpush1.xpose.msra.mxu0 0.0
        %1015 = vmatprep.subr.mxu0 0.0
        %1016 = vmatpush1.xpose.msra.mxu0 0.0
        %1017 = vmatprep.subr.mxu0 0.0
        %1018 = vmatpush1.xpose.msra.mxu0 0.0
        %1019 = vmatprep.subr.mxu0 0.0
        %1020 = vmatpush1.xpose.msra.mxu0 0.0
        %1021 = vmatprep.subr.mxu0 0.0
        %1022 = vmatpush1.xpose.msra.mxu0 0.0
        %1023 = vmatprep.subr.mxu0 0.0
        %1024 = vmatpush1.xpose.msra.mxu0 0.0
        %1025 = vmatprep.subr.mxu0 0.0
        %1026 = vmatpush1.xpose.msra.mxu0 0.0
        %1027 = vmatprep.subr.mxu0 0.0
        %1028 = vmatpush1.xpose.msra.mxu0 0.0
        %1029 = vmatprep.subr.mxu0 0.0
        %1030 = vmatpush1.xpose.msra.mxu0 0.0
        %1031 = vmatprep.subr.mxu0 0.0
        %1032 = vmatpush1.xpose.msra.mxu0 0.0
        %1033 = vmatprep.subr.mxu0 0.0
        %1034 = vmatpush1.xpose.msra.mxu0 0.0
        %1035 = vmatprep.subr.mxu0 0.0
        %1036 = vmatpush1.xpose.msra.mxu0 0.0
        %1037 = vmatprep.subr.mxu0 0.0
        %1038 = vmatpush1.xpose.msra.mxu0 0.0
        %1039 = vmatprep.subr.mxu0 0.0
        %1040 = vmatpush1.xpose.msra.mxu0 0.0
        %1041 = vmatprep.subr.mxu0 0.0
        %1042 = vmatpush1.xpose.msra.mxu0 0.0
        %1043 = vmatprep.subr.mxu0 0.0
        %1044 = vmatpush1.xpose.msra.mxu0 0.0
        %1045 = vmatprep.subr.mxu0 0.0
        %1046 = vmatpush1.xpose.msra.mxu0 0.0
        %1047 = vmatprep.subr.mxu0 0.0
        %1048 = vmatpush1.xpose.msra.mxu0 0.0
        %1049 = vmatprep.subr.mxu0 0.0
        %1050 = vmatpush1.xpose.msra.mxu0 0.0
        %1051 = vmatprep.subr.mxu0 0.0
        %1052 = vmatpush1.xpose.msra.mxu0 0.0
        %1053 = vmatprep.subr.mxu0 0.0
        %1054 = vmatpush1.xpose.msra.mxu0 0.0
        %1055 = vmatprep.subr.mxu0 0.0
        %1056 = vmatpush1.xpose.msra.mxu0 0.0
        %1057 = vmatprep.subr.mxu0 0.0
        %1058 = vmatpush1.xpose.msra.mxu0 0.0
        %1059 = vmatprep.subr.mxu0 0.0
        %1060 = vmatpush1.xpose.msra.mxu0 0.0
        %1061 = vmatprep.subr.mxu0 0.0
        %1062 = vmatpush1.xpose.msra.mxu0 0.0
        %1063 = vmatprep.subr.mxu0 0.0
        %1064 = vmatpush1.xpose.msra.mxu0 0.0
        %1065 = vmatprep.subr.mxu0 0.0
        %1066 = vmatpush1.xpose.msra.mxu0 0.0
        %1067 = vmatprep.subr.mxu0 0.0
        %1068 = vmatpush1.xpose.msra.mxu0 0.0
        %1069 = vmatprep.subr.mxu0 0.0
        %1070 = vmatpush1.xpose.msra.mxu0 0.0
        %1071 = vmatprep.subr.mxu0 0.0
        %1072 = vmatpush1.xpose.msra.mxu0 0.0
        %1073 = vmatprep.mubr.f32.mxu0 0.0
        %1074 = vmatmul.mubr.f32.gmra.mrb[0].mxu0 %v1004
        %v1075 = vpop.f32.mrb[0].mxu0
        %v1076 = vadd.f32 0.0, %v1075
        %v1077 = vpop.f32.mrb[0].mxu0
        %1078 = vdwg.mxu0
        %v1079 = vmul.f32 %v1076, 0.125
        %v1080 = vadd.f32 %v1079, %v499
        %vm1081 = vcmask 64512
        %v1082 = vsel %vm1081, %v1080, -inf
        %1083 = vmax.xlane.f32.xlu0 %v1082
        %v1084 = vpop.xlane.xlu0 %1083
        %v1085 = vsub.f32 %v1080, %v1084
        %v1086 = vmul.f32 %v1085, 1.442695
        %v1087 = vpow.pop %v1086
        %v1088 = vsel %vm1081, %v1087, 0.0
        %1089 = vadd.xlane.f32.xlu0 %v1088
        %v1090 = vpop.xlane.xlu0 %1089
        %v1091 = vrcp.pop %v1090
        %v1092 = vmul.f32 %v1087, %v1091
        %v1094 = vsel %vm1081, %v1092, 0
        %1096 = vmatprep.subr.mxu0 0.0
        %1097 = vmatpush1.msra.mxu0 %v933
        %1098 = vmatprep.subr.mxu0 0.0
        %1099 = vmatpush1.msra.mxu0 0.0
        %1100 = vmatprep.subr.mxu0 0.0
        %1101 = vmatpush1.msra.mxu0 0.0
        %1102 = vmatprep.subr.mxu0 0.0
        %1103 = vmatpush1.msra.mxu0 0.0
        %1104 = vmatprep.subr.mxu0 0.0
        %1105 = vmatpush1.msra.mxu0 0.0
        %1106 = vmatprep.subr.mxu0 0.0
        %1107 = vmatpush1.msra.mxu0 0.0
        %1108 = vmatprep.subr.mxu0 0.0
        %1109 = vmatpush1.msra.mxu0 0.0
        %1110 = vmatprep.subr.mxu0 0.0
        %1111 = vmatpush1.msra.mxu0 0.0
        %1112 = vmatprep.subr.mxu0 0.0
        %1113 = vmatpush1.msra.mxu0 0.0
        %1114 = vmatprep.subr.mxu0 0.0
        %1115 = vmatpush1.msra.mxu0 0.0
        %1116 = vmatprep.subr.mxu0 0.0
        %1117 = vmatpush1.msra.mxu0 0.0
        %1118 = vmatprep.subr.mxu0 0.0
        %1119 = vmatpush1.msra.mxu0 0.0
        %1120 = vmatprep.subr.mxu0 0.0
        %1121 = vmatpush1.msra.mxu0 0.0
        %1122 = vmatprep.subr.mxu0 0.0
        %1123 = vmatpush1.msra.mxu0 0.0
        %1124 = vmatprep.subr.mxu0 0.0
        %1125 = vmatpush1.msra.mxu0 0.0
        %1126 = vmatprep.subr.mxu0 0.0
        %1127 = vmatpush1.msra.mxu0 0.0
        %1128 = vmatprep.subr.mxu0 0.0
        %1129 = vmatpush1.msra.mxu0 0.0
        %1130 = vmatprep.subr.mxu0 0.0
        %1131 = vmatpush1.msra.mxu0 0.0
        %1132 = vmatprep.subr.mxu0 0.0
        %1133 = vmatpush1.msra.mxu0 0.0
        %1134 = vmatprep.subr.mxu0 0.0
        %1135 = vmatpush1.msra.mxu0 0.0
        %1136 = vmatprep.subr.mxu0 0.0
        %1137 = vmatpush1.msra.mxu0 0.0
        %1138 = vmatprep.subr.mxu0 0.0
        %1139 = vmatpush1.msra.mxu0 0.0
        %1140 = vmatprep.subr.mxu0 0.0
        %1141 = vmatpush1.msra.mxu0 0.0
        %1142 = vmatprep.subr.mxu0 0.0
        %1143 = vmatpush1.msra.mxu0 0.0
        %1144 = vmatprep.subr.mxu0 0.0
        %1145 = vmatpush1.msra.mxu0 0.0
        %1146 = vmatprep.subr.mxu0 0.0
        %1147 = vmatpush1.msra.mxu0 0.0
        %1148 = vmatprep.subr.mxu0 0.0
        %1149 = vmatpush1.msra.mxu0 0.0
        %1150 = vmatprep.subr.mxu0 0.0
        %1151 = vmatpush1.msra.mxu0 0.0
        %1152 = vmatprep.subr.mxu0 0.0
        %1153 = vmatpush1.msra.mxu0 0.0
        %1154 = vmatprep.subr.mxu0 0.0
        %1155 = vmatpush1.msra.mxu0 0.0
        %1156 = vmatprep.subr.mxu0 0.0
        %1157 = vmatpush1.msra.mxu0 0.0
        %1158 = vmatprep.subr.mxu0 0.0
        %1159 = vmatpush1.msra.mxu0 0.0
        %1160 = vmatprep.mubr.f32.mxu0 0.0
        %1161 = vmatmul.mubr.f32.gmra.mrb[0].mxu0 %v1094
        %v1162 = vpop.f32.mrb[0].mxu0
        %v1163 = vadd.f32 0.0, %v1162
        %v1164 = vpop.f32.mrb[0].mxu0
        %1165 = vdwg.mxu0
        %v1167 = vsel %vm1002, %v1163, 0
        %1169 = vmatprep.subr.mxu0 %v938
        %1170 = vmatpush1.msra.mxu0 %v937
        %1171 = vmatprep.subr.mxu0 %v940
        %1172 = vmatpush1.msra.mxu0 %v939
        %1173 = vmatprep.subr.mxu0 %v942
        %1174 = vmatpush1.msra.mxu0 %v941
        %1175 = vmatprep.subr.mxu0 %v944
        %1176 = vmatpush1.msra.mxu0 %v943
        %1177 = vmatprep.subr.mxu0 %v946
        %1178 = vmatpush1.msra.mxu0 %v945
        %1179 = vmatprep.subr.mxu0 %v948
        %1180 = vmatpush1.msra.mxu0 %v947
        %1181 = vmatprep.subr.mxu0 %v950
        %1182 = vmatpush1.msra.mxu0 %v949
        %1183 = vmatprep.subr.mxu0 %v952
        %1184 = vmatpush1.msra.mxu0 %v951
        %1185 = vmatprep.subr.mxu0 0.0
        %1186 = vmatpush1.msra.mxu0 0.0
        %1187 = vmatprep.subr.mxu0 0.0
        %1188 = vmatpush1.msra.mxu0 0.0
        %1189 = vmatprep.subr.mxu0 0.0
        %1190 = vmatpush1.msra.mxu0 0.0
        %1191 = vmatprep.subr.mxu0 0.0
        %1192 = vmatpush1.msra.mxu0 0.0
        %1193 = vmatprep.subr.mxu0 0.0
        %1194 = vmatpush1.msra.mxu0 0.0
        %1195 = vmatprep.subr.mxu0 0.0
        %1196 = vmatpush1.msra.mxu0 0.0
        %1197 = vmatprep.subr.mxu0 0.0
        %1198 = vmatpush1.msra.mxu0 0.0
        %1199 = vmatprep.subr.mxu0 0.0
        %1200 = vmatpush1.msra.mxu0 0.0
        %1201 = vmatprep.subr.mxu0 0.0
        %1202 = vmatpush1.msra.mxu0 0.0
        %1203 = vmatprep.subr.mxu0 0.0
        %1204 = vmatpush1.msra.mxu0 0.0
        %1205 = vmatprep.subr.mxu0 0.0
        %1206 = vmatpush1.msra.mxu0 0.0
        %1207 = vmatprep.subr.mxu0 0.0
        %1208 = vmatpush1.msra.mxu0 0.0
        %1209 = vmatprep.subr.mxu0 0.0
        %1210 = vmatpush1.msra.mxu0 0.0
        %1211 = vmatprep.subr.mxu0 0.0
        %1212 = vmatpush1.msra.mxu0 0.0
        %1213 = vmatprep.subr.mxu0 0.0
        %1214 = vmatpush1.msra.mxu0 0.0
        %1215 = vmatprep.subr.mxu0 0.0
        %1216 = vmatpush1.msra.mxu0 0.0
        %1217 = vmatprep.subr.mxu0 0.0
        %1218 = vmatpush1.msra.mxu0 0.0
        %1219 = vmatprep.subr.mxu0 0.0
        %1220 = vmatpush1.msra.mxu0 0.0
        %1221 = vmatprep.subr.mxu0 0.0
        %1222 = vmatpush1.msra.mxu0 0.0
        %1223 = vmatprep.subr.mxu0 0.0
        %1224 = vmatpush1.msra.mxu0 0.0
        %1225 = vmatprep.subr.mxu0 0.0
        %1226 = vmatpush1.msra.mxu0 0.0
        %1227 = vmatprep.subr.mxu0 0.0
        %1228 = vmatpush1.msra.mxu0 0.0
        %1229 = vmatprep.subr.mxu0 0.0
        %1230 = vmatpush1.msra.mxu0 0.0
        %1231 = vmatprep.subr.mxu0 0.0
        %1232 = vmatpush1.msra.mxu0 0.0
        %1233 = vmatprep.mubr.f32.mxu0 0.0
        %1234 = vmatmul.mubr.f32.gmra.mrb[0].mxu0 %v1167
        %v1235 = vpop.f32.mrb[0].mxu0
        %v1236 = vadd.f32 0.0, %v1235
        %v1237 = vpop.f32.mrb[0].mxu0
        %v1238 = vadd.f32 0.0, %v1237
        %1239 = vdwg.mxu0
        %v1241 = vlaneseq
        %v1242 = vshrl.u32 %v1241, 7
        %v1243 = vsub.s32 0, %v1242
        %v1244 = vrot.slane %v1001, %v1243
        %v1245 = vlaneseq
        %v1246 = vshrl.u32 %v1245, 7
        %v1247 = vsub.s32 1, %v1246
        %v1248 = vrot.slane %v1001, %v1247
        %v1251 = vadd.f32 %v1244, %v1236
        %v1252 = vadd.f32 %v1248, %v1238
        %1253 = vrot.lane.b32.xlu0 %v791, 64
        %v1254 = vpop.permute.xlu0 %1253
        %1255 = vrot.lane.b32.xlu0 %v862, 64
        %v1256 = vpop.permute.xlu0 %1255
        %v1257 = vsel %vm1002, %v1254, 0
        %v1259 = vsel %vm1002, %v1256, 0
        %1261 = vmatprep.subr.mxu0 0.0
        %1262 = vmatpush1.xpose.msra.mxu0 %v1259
        %1263 = vmatprep.subr.mxu0 0.0
        %1264 = vmatpush1.xpose.msra.mxu0 0.0
        %1265 = vmatprep.subr.mxu0 0.0
        %1266 = vmatpush1.xpose.msra.mxu0 0.0
        %1267 = vmatprep.subr.mxu0 0.0
        %1268 = vmatpush1.xpose.msra.mxu0 0.0
        %1269 = vmatprep.subr.mxu0 0.0
        %1270 = vmatpush1.xpose.msra.mxu0 0.0
        %1271 = vmatprep.subr.mxu0 0.0
        %1272 = vmatpush1.xpose.msra.mxu0 0.0
        %1273 = vmatprep.subr.mxu0 0.0
        %1274 = vmatpush1.xpose.msra.mxu0 0.0
        %1275 = vmatprep.subr.mxu0 0.0
        %1276 = vmatpush1.xpose.msra.mxu0 0.0
        %1277 = vmatprep.subr.mxu0 0.0
        %1278 = vmatpush1.xpose.msra.mxu0 0.0
        %1279 = vmatprep.subr.mxu0 0.0
        %1280 = vmatpush1.xpose.msra.mxu0 0.0
        %1281 = vmatprep.subr.mxu0 0.0
        %1282 = vmatpush1.xpose.msra.mxu0 0.0
        %1283 = vmatprep.subr.mxu0 0.0
        %1284 = vmatpush1.xpose.msra.mxu0 0.0
        %1285 = vmatprep.subr.mxu0 0.0
        %1286 = vmatpush1.xpose.msra.mxu0 0.0
        %1287 = vmatprep.subr.mxu0 0.0
        %1288 = vmatpush1.xpose.msra.mxu0 0.0
        %1289 = vmatprep.subr.mxu0 0.0
        %1290 = vmatpush1.xpose.msra.mxu0 0.0
        %1291 = vmatprep.subr.mxu0 0.0
        %1292 = vmatpush1.xpose.msra.mxu0 0.0
        %1293 = vmatprep.subr.mxu0 0.0
        %1294 = vmatpush1.xpose.msra.mxu0 0.0
        %1295 = vmatprep.subr.mxu0 0.0
        %1296 = vmatpush1.xpose.msra.mxu0 0.0
        %1297 = vmatprep.subr.mxu0 0.0
        %1298 = vmatpush1.xpose.msra.mxu0 0.0
        %1299 = vmatprep.subr.mxu0 0.0
        %1300 = vmatpush1.xpose.msra.mxu0 0.0
        %1301 = vmatprep.subr.mxu0 0.0
        %1302 = vmatpush1.xpose.msra.mxu0 0.0
        %1303 = vmatprep.subr.mxu0 0.0
        %1304 = vmatpush1.xpose.msra.mxu0 0.0
        %1305 = vmatprep.subr.mxu0 0.0
        %1306 = vmatpush1.xpose.msra.mxu0 0.0
        %1307 = vmatprep.subr.mxu0 0.0
        %1308 = vmatpush1.xpose.msra.mxu0 0.0
        %1309 = vmatprep.subr.mxu0 0.0
        %1310 = vmatpush1.xpose.msra.mxu0 0.0
        %1311 = vmatprep.subr.mxu0 0.0
        %1312 = vmatpush1.xpose.msra.mxu0 0.0
        %1313 = vmatprep.subr.mxu0 0.0
        %1314 = vmatpush1.xpose.msra.mxu0 0.0
        %1315 = vmatprep.subr.mxu0 0.0
        %1316 = vmatpush1.xpose.msra.mxu0 0.0
        %1317 = vmatprep.subr.mxu0 0.0
        %1318 = vmatpush1.xpose.msra.mxu0 0.0
        %1319 = vmatprep.subr.mxu0 0.0
        %1320 = vmatpush1.xpose.msra.mxu0 0.0
        %1321 = vmatprep.subr.mxu0 0.0
        %1322 = vmatpush1.xpose.msra.mxu0 0.0
        %1323 = vmatprep.subr.mxu0 0.0
        %1324 = vmatpush1.xpose.msra.mxu0 0.0
        %1325 = vmatprep.mubr.f32.mxu0 0.0
        %1326 = vmatmul.mubr.f32.gmra.mrb[0].mxu0 %v1257
        %v1327 = vpop.f32.mrb[0].mxu0
        %v1328 = vadd.f32 0.0, %v1327
        %v1329 = vpop.f32.mrb[0].mxu0
        %1330 = vdwg.mxu0
        %v1331 = vmul.f32 %v1328, 0.125
        %v1332 = vadd.f32 %v1331, %v499
        %v1333 = vsel %vm1081, %v1332, -inf
        %1334 = vmax.xlane.f32.xlu0 %v1333
        %v1335 = vpop.xlane.xlu0 %1334
        %v1336 = vsub.f32 %v1332, %v1335
        %v1337 = vmul.f32 %v1336, 1.442695
        %v1338 = vpow.pop %v1337
        %v1339 = vsel %vm1081, %v1338, 0.0
        %1340 = vadd.xlane.f32.xlu0 %v1339
        %v1341 = vpop.xlane.xlu0 %1340
        %v1342 = vrcp.pop %v1341
        %v1343 = vmul.f32 %v1338, %v1342
        %1345 = vrot.lane.b32.xlu0 %v933, 64
        %v1346 = vpop.permute.xlu0 %1345
        %v1349 = vsel %vm1081, %v1343, 0
        %1351 = vmatprep.subr.mxu0 0.0
        %1352 = vmatpush1.msra.mxu0 %v1346
        %1353 = vmatprep.subr.mxu0 0.0
        %1354 = vmatpush1.msra.mxu0 0.0
        %1355 = vmatprep.subr.mxu0 0.0
        %1356 = vmatpush1.msra.mxu0 0.0
        %1357 = vmatprep.subr.mxu0 0.0
        %1358 = vmatpush1.msra.mxu0 0.0
        %1359 = vmatprep.subr.mxu0 0.0
        %1360 = vmatpush1.msra.mxu0 0.0
        %1361 = vmatprep.subr.mxu0 0.0
        %1362 = vmatpush1.msra.mxu0 0.0
        %1363 = vmatprep.subr.mxu0 0.0
        %1364 = vmatpush1.msra.mxu0 0.0
        %1365 = vmatprep.subr.mxu0 0.0
        %1366 = vmatpush1.msra.mxu0 0.0
        %1367 = vmatprep.subr.mxu0 0.0
        %1368 = vmatpush1.msra.mxu0 0.0
        %1369 = vmatprep.subr.mxu0 0.0
        %1370 = vmatpush1.msra.mxu0 0.0
        %1371 = vmatprep.subr.mxu0 0.0
        %1372 = vmatpush1.msra.mxu0 0.0
        %1373 = vmatprep.subr.mxu0 0.0
        %1374 = vmatpush1.msra.mxu0 0.0
        %1375 = vmatprep.subr.mxu0 0.0
        %1376 = vmatpush1.msra.mxu0 0.0
        %1377 = vmatprep.subr.mxu0 0.0
        %1378 = vmatpush1.msra.mxu0 0.0
        %1379 = vmatprep.subr.mxu0 0.0
        %1380 = vmatpush1.msra.mxu0 0.0
        %1381 = vmatprep.subr.mxu0 0.0
        %1382 = vmatpush1.msra.mxu0 0.0
        %1383 = vmatprep.subr.mxu0 0.0
        %1384 = vmatpush1.msra.mxu0 0.0
        %1385 = vmatprep.subr.mxu0 0.0
        %1386 = vmatpush1.msra.mxu0 0.0
        %1387 = vmatprep.subr.mxu0 0.0
        %1388 = vmatpush1.msra.mxu0 0.0
        %1389 = vmatprep.subr.mxu0 0.0
        %1390 = vmatpush1.msra.mxu0 0.0
        %1391 = vmatprep.subr.mxu0 0.0
        %1392 = vmatpush1.msra.mxu0 0.0
        %1393 = vmatprep.subr.mxu0 0.0
        %1394 = vmatpush1.msra.mxu0 0.0
        %1395 = vmatprep.subr.mxu0 0.0
        %1396 = vmatpush1.msra.mxu0 0.0
        %1397 = vmatprep.subr.mxu0 0.0
        %1398 = vmatpush1.msra.mxu0 0.0
        %1399 = vmatprep.subr.mxu0 0.0
        %1400 = vmatpush1.msra.mxu0 0.0
        %1401 = vmatprep.subr.mxu0 0.0
        %1402 = vmatpush1.msra.mxu0 0.0
        %1403 = vmatprep.subr.mxu0 0.0
        %1404 = vmatpush1.msra.mxu0 0.0
        %1405 = vmatprep.subr.mxu0 0.0
        %1406 = vmatpush1.msra.mxu0 0.0
        %1407 = vmatprep.subr.mxu0 0.0
        %1408 = vmatpush1.msra.mxu0 0.0
        %1409 = vmatprep.subr.mxu0 0.0
        %1410 = vmatpush1.msra.mxu0 0.0
        %1411 = vmatprep.subr.mxu0 0.0
        %1412 = vmatpush1.msra.mxu0 0.0
        %1413 = vmatprep.subr.mxu0 0.0
        %1414 = vmatpush1.msra.mxu0 0.0
        %1415 = vmatprep.mubr.f32.mxu0 0.0
        %1416 = vmatmul.mubr.f32.gmra.mrb[0].mxu0 %v1349
        %v1417 = vpop.f32.mrb[0].mxu0
        %v1418 = vadd.f32 0.0, %v1417
        %v1419 = vpop.f32.mrb[0].mxu0
        %1420 = vdwg.mxu0
        %v1422 = vsel %vm1002, %v1418, 0
        %1424 = vmatprep.subr.mxu0 %v954
        %1425 = vmatpush1.msra.mxu0 %v953
        %1426 = vmatprep.subr.mxu0 %v956
        %1427 = vmatpush1.msra.mxu0 %v955
        %1428 = vmatprep.subr.mxu0 %v958
        %1429 = vmatpush1.msra.mxu0 %v957
        %1430 = vmatprep.subr.mxu0 %v960
        %1431 = vmatpush1.msra.mxu0 %v959
        %1432 = vmatprep.subr.mxu0 %v962
        %1433 = vmatpush1.msra.mxu0 %v961
        %1434 = vmatprep.subr.mxu0 %v964
        %1435 = vmatpush1.msra.mxu0 %v963
        %1436 = vmatprep.subr.mxu0 %v966
        %1437 = vmatpush1.msra.mxu0 %v965
        %1438 = vmatprep.subr.mxu0 %v968
        %1439 = vmatpush1.msra.mxu0 %v967
        %1440 = vmatprep.subr.mxu0 0.0
        %1441 = vmatpush1.msra.mxu0 0.0
        %1442 = vmatprep.subr.mxu0 0.0
        %1443 = vmatpush1.msra.mxu0 0.0
        %1444 = vmatprep.subr.mxu0 0.0
        %1445 = vmatpush1.msra.mxu0 0.0
        %1446 = vmatprep.subr.mxu0 0.0
        %1447 = vmatpush1.msra.mxu0 0.0
        %1448 = vmatprep.subr.mxu0 0.0
        %1449 = vmatpush1.msra.mxu0 0.0
        %1450 = vmatprep.subr.mxu0 0.0
        %1451 = vmatpush1.msra.mxu0 0.0
        %1452 = vmatprep.subr.mxu0 0.0
        %1453 = vmatpush1.msra.mxu0 0.0
        %1454 = vmatprep.subr.mxu0 0.0
        %1455 = vmatpush1.msra.mxu0 0.0
        %1456 = vmatprep.subr.mxu0 0.0
        %1457 = vmatpush1.msra.mxu0 0.0
        %1458 = vmatprep.subr.mxu0 0.0
        %1459 = vmatpush1.msra.mxu0 0.0
        %1460 = vmatprep.subr.mxu0 0.0
        %1461 = vmatpush1.msra.mxu0 0.0
        %1462 = vmatprep.subr.mxu0 0.0
        %1463 = vmatpush1.msra.mxu0 0.0
        %1464 = vmatprep.subr.mxu0 0.0
        %1465 = vmatpush1.msra.mxu0 0.0
        %1466 = vmatprep.subr.mxu0 0.0
        %1467 = vmatpush1.msra.mxu0 0.0
        %1468 = vmatprep.subr.mxu0 0.0
        %1469 = vmatpush1.msra.mxu0 0.0
        %1470 = vmatprep.subr.mxu0 0.0
        %1471 = vmatpush1.msra.mxu0 0.0
        %1472 = vmatprep.subr.mxu0 0.0
        %1473 = vmatpush1.msra.mxu0 0.0
        %1474 = vmatprep.subr.mxu0 0.0
        %1475 = vmatpush1.msra.mxu0 0.0
        %1476 = vmatprep.subr.mxu0 0.0
        %1477 = vmatpush1.msra.mxu0 0.0
        %1478 = vmatprep.subr.mxu0 0.0
        %1479 = vmatpush1.msra.mxu0 0.0
        %1480 = vmatprep.subr.mxu0 0.0
        %1481 = vmatpush1.msra.mxu0 0.0
        %1482 = vmatprep.subr.mxu0 0.0
        %1483 = vmatpush1.msra.mxu0 0.0
        %1484 = vmatprep.subr.mxu0 0.0
        %1485 = vmatpush1.msra.mxu0 0.0
        %1486 = vmatprep.subr.mxu0 0.0
        %1487 = vmatpush1.msra.mxu0 0.0
        %1488 = vmatprep.mubr.f32.mxu0 0.0
        %1489 = vmatmul.mubr.f32.gmra.mrb[0].mxu0 %v1422
        %v1490 = vpop.f32.mrb[0].mxu0
        %v1491 = vadd.f32 0.0, %v1490
        %v1492 = vpop.f32.mrb[0].mxu0
        %v1493 = vadd.f32 0.0, %v1492
        %1494 = vdwg.mxu0
        %v1495 = vadd.f32 %v1251, %v1491
        %v1496 = vadd.f32 %v1252, %v1493
        %v1498 = vsel %vm1002, %v793, 0
        %v1501 = vsel %vm1002, %v864, 0
        %1503 = vmatprep.subr.mxu0 0.0
        %1504 = vmatpush1.xpose.msra.mxu0 %v1501
        %1505 = vmatprep.subr.mxu0 0.0
        %1506 = vmatpush1.xpose.msra.mxu0 0.0
        %1507 = vmatprep.subr.mxu0 0.0
        %1508 = vmatpush1.xpose.msra.mxu0 0.0
        %1509 = vmatprep.subr.mxu0 0.0
        %1510 = vmatpush1.xpose.msra.mxu0 0.0
        %1511 = vmatprep.subr.mxu0 0.0
        %1512 = vmatpush1.xpose.msra.mxu0 0.0
        %1513 = vmatprep.subr.mxu0 0.0
        %1514 = vmatpush1.xpose.msra.mxu0 0.0
        %1515 = vmatprep.subr.mxu0 0.0
        %1516 = vmatpush1.xpose.msra.mxu0 0.0
        %1517 = vmatprep.subr.mxu0 0.0
        %1518 = vmatpush1.xpose.msra.mxu0 0.0
        %1519 = vmatprep.subr.mxu0 0.0
        %1520 = vmatpush1.xpose.msra.mxu0 0.0
        %1521 = vmatprep.subr.mxu0 0.0
        %1522 = vmatpush1.xpose.msra.mxu0 0.0
        %1523 = vmatprep.subr.mxu0 0.0
        %1524 = vmatpush1.xpose.msra.mxu0 0.0
        %1525 = vmatprep.subr.mxu0 0.0
        %1526 = vmatpush1.xpose.msra.mxu0 0.0
        %1527 = vmatprep.subr.mxu0 0.0
        %1528 = vmatpush1.xpose.msra.mxu0 0.0
        %1529 = vmatprep.subr.mxu0 0.0
        %1530 = vmatpush1.xpose.msra.mxu0 0.0
        %1531 = vmatprep.subr.mxu0 0.0
        %1532 = vmatpush1.xpose.msra.mxu0 0.0
        %1533 = vmatprep.subr.mxu0 0.0
        %1534 = vmatpush1.xpose.msra.mxu0 0.0
        %1535 = vmatprep.subr.mxu0 0.0
        %1536 = vmatpush1.xpose.msra.mxu0 0.0
        %1537 = vmatprep.subr.mxu0 0.0
        %1538 = vmatpush1.xpose.msra.mxu0 0.0
        %1539 = vmatprep.subr.mxu0 0.0
        %1540 = vmatpush1.xpose.msra.mxu0 0.0
        %1541 = vmatprep.subr.mxu0 0.0
        %1542 = vmatpush1.xpose.msra.mxu0 0.0
        %1543 = vmatprep.subr.mxu0 0.0
        %1544 = vmatpush1.xpose.msra.mxu0 0.0
        %1545 = vmatprep.subr.mxu0 0.0
        %1546 = vmatpush1.xpose.msra.mxu0 0.0
        %1547 = vmatprep.subr.mxu0 0.0
        %1548 = vmatpush1.xpose.msra.mxu0 0.0
        %1549 = vmatprep.subr.mxu0 0.0
        %1550 = vmatpush1.xpose.msra.mxu0 0.0
        %1551 = vmatprep.subr.mxu0 0.0
        %1552 = vmatpush1.xpose.msra.mxu0 0.0
        %1553 = vmatprep.subr.mxu0 0.0
        %1554 = vmatpush1.xpose.msra.mxu0 0.0
        %1555 = vmatprep.subr.mxu0 0.0
        %1556 = vmatpush1.xpose.msra.mxu0 0.0
        %1557 = vmatprep.subr.mxu0 0.0
        %1558 = vmatpush1.xpose.msra.mxu0 0.0
        %1559 = vmatprep.subr.mxu0 0.0
        %1560 = vmatpush1.xpose.msra.mxu0 0.0
        %1561 = vmatprep.subr.mxu0 0.0
        %1562 = vmatpush1.xpose.msra.mxu0 0.0
        %1563 = vmatprep.subr.mxu0 0.0
        %1564 = vmatpush1.xpose.msra.mxu0 0.0
        %1565 = vmatprep.subr.mxu0 0.0
        %1566 = vmatpush1.xpose.msra.mxu0 0.0
        %1567 = vmatprep.mubr.f32.mxu0 0.0
        %1568 = vmatmul.mubr.f32.gmra.mrb[0].mxu0 %v1498
        %v1569 = vpop.f32.mrb[0].mxu0
        %v1570 = vadd.f32 0.0, %v1569
        %v1571 = vpop.f32.mrb[0].mxu0
        %1572 = vdwg.mxu0
        %v1573 = vmul.f32 %v1570, 0.125
        %v1574 = vadd.f32 %v1573, %v499
        %v1575 = vsel %vm1081, %v1574, -inf
        %1576 = vmax.xlane.f32.xlu0 %v1575
        %v1577 = vpop.xlane.xlu0 %1576
        %v1578 = vsub.f32 %v1574, %v1577
        %v1579 = vmul.f32 %v1578, 1.442695
        %v1580 = vpow.pop %v1579
        %v1581 = vsel %vm1081, %v1580, 0.0
        %1582 = vadd.xlane.f32.xlu0 %v1581
        %v1583 = vpop.xlane.xlu0 %1582
        %v1584 = vrcp.pop %v1583
        %v1585 = vmul.f32 %v1580, %v1584
        %v1587 = vsel %vm1081, %v1585, 0
        %1589 = vmatprep.subr.mxu0 0.0
        %1590 = vmatpush1.msra.mxu0 %v935
        %1591 = vmatprep.subr.mxu0 0.0
        %1592 = vmatpush1.msra.mxu0 0.0
        %1593 = vmatprep.subr.mxu0 0.0
        %1594 = vmatpush1.msra.mxu0 0.0
        %1595 = vmatprep.subr.mxu0 0.0
        %1596 = vmatpush1.msra.mxu0 0.0
        %1597 = vmatprep.subr.mxu0 0.0
        %1598 = vmatpush1.msra.mxu0 0.0
        %1599 = vmatprep.subr.mxu0 0.0
        %1600 = vmatpush1.msra.mxu0 0.0
        %1601 = vmatprep.subr.mxu0 0.0
        %1602 = vmatpush1.msra.mxu0 0.0
        %1603 = vmatprep.subr.mxu0 0.0
        %1604 = vmatpush1.msra.mxu0 0.0
        %1605 = vmatprep.subr.mxu0 0.0
        %1606 = vmatpush1.msra.mxu0 0.0
        %1607 = vmatprep.subr.mxu0 0.0
        %1608 = vmatpush1.msra.mxu0 0.0
        %1609 = vmatprep.subr.mxu0 0.0
        %1610 = vmatpush1.msra.mxu0 0.0
        %1611 = vmatprep.subr.mxu0 0.0
        %1612 = vmatpush1.msra.mxu0 0.0
        %1613 = vmatprep.subr.mxu0 0.0
        %1614 = vmatpush1.msra.mxu0 0.0
        %1615 = vmatprep.subr.mxu0 0.0
        %1616 = vmatpush1.msra.mxu0 0.0
        %1617 = vmatprep.subr.mxu0 0.0
        %1618 = vmatpush1.msra.mxu0 0.0
        %1619 = vmatprep.subr.mxu0 0.0
        %1620 = vmatpush1.msra.mxu0 0.0
        %1621 = vmatprep.subr.mxu0 0.0
        %1622 = vmatpush1.msra.mxu0 0.0
        %1623 = vmatprep.subr.mxu0 0.0
        %1624 = vmatpush1.msra.mxu0 0.0
        %1625 = vmatprep.subr.mxu0 0.0
        %1626 = vmatpush1.msra.mxu0 0.0
        %1627 = vmatprep.subr.mxu0 0.0
        %1628 = vmatpush1.msra.mxu0 0.0
        %1629 = vmatprep.subr.mxu0 0.0
        %1630 = vmatpush1.msra.mxu0 0.0
        %1631 = vmatprep.subr.mxu0 0.0
        %1632 = vmatpush1.msra.mxu0 0.0
        %1633 = vmatprep.subr.mxu0 0.0
        %1634 = vmatpush1.msra.mxu0 0.0
        %1635 = vmatprep.subr.mxu0 0.0
        %1636 = vmatpush1.msra.mxu0 0.0
        %1637 = vmatprep.subr.mxu0 0.0
        %1638 = vmatpush1.msra.mxu0 0.0
        %1639 = vmatprep.subr.mxu0 0.0
        %1640 = vmatpush1.msra.mxu0 0.0
        %1641 = vmatprep.subr.mxu0 0.0
        %1642 = vmatpush1.msra.mxu0 0.0
        %1643 = vmatprep.subr.mxu0 0.0
        %1644 = vmatpush1.msra.mxu0 0.0
        %1645 = vmatprep.subr.mxu0 0.0
        %1646 = vmatpush1.msra.mxu0 0.0
        %1647 = vmatprep.subr.mxu0 0.0
        %1648 = vmatpush1.msra.mxu0 0.0
        %1649 = vmatprep.subr.mxu0 0.0
        %1650 = vmatpush1.msra.mxu0 0.0
        %1651 = vmatprep.subr.mxu0 0.0
        %1652 = vmatpush1.msra.mxu0 0.0
        %1653 = vmatprep.mubr.f32.mxu0 0.0
        %1654 = vmatmul.mubr.f32.gmra.mrb[0].mxu0 %v1587
        %v1655 = vpop.f32.mrb[0].mxu0
        %v1656 = vadd.f32 0.0, %v1655
        %v1657 = vpop.f32.mrb[0].mxu0
        %1658 = vdwg.mxu0
        %v1660 = vsel %vm1002, %v1656, 0
        %1662 = vmatprep.subr.mxu0 %v970
        %1663 = vmatpush1.msra.mxu0 %v969
        %1664 = vmatprep.subr.mxu0 %v972
        %1665 = vmatpush1.msra.mxu0 %v971
        %1666 = vmatprep.subr.mxu0 %v974
        %1667 = vmatpush1.msra.mxu0 %v973
        %1668 = vmatprep.subr.mxu0 %v976
        %1669 = vmatpush1.msra.mxu0 %v975
        %1670 = vmatprep.subr.mxu0 %v978
        %1671 = vmatpush1.msra.mxu0 %v977
        %1672 = vmatprep.subr.mxu0 %v980
        %1673 = vmatpush1.msra.mxu0 %v979
        %1674 = vmatprep.subr.mxu0 %v982
        %1675 = vmatpush1.msra.mxu0 %v981
        %1676 = vmatprep.subr.mxu0 %v984
        %1677 = vmatpush1.msra.mxu0 %v983
        %1678 = vmatprep.subr.mxu0 0.0
        %1679 = vmatpush1.msra.mxu0 0.0
        %1680 = vmatprep.subr.mxu0 0.0
        %1681 = vmatpush1.msra.mxu0 0.0
        %1682 = vmatprep.subr.mxu0 0.0
        %1683 = vmatpush1.msra.mxu0 0.0
        %1684 = vmatprep.subr.mxu0 0.0
        %1685 = vmatpush1.msra.mxu0 0.0
        %1686 = vmatprep.subr.mxu0 0.0
        %1687 = vmatpush1.msra.mxu0 0.0
        %1688 = vmatprep.subr.mxu0 0.0
        %1689 = vmatpush1.msra.mxu0 0.0
        %1690 = vmatprep.subr.mxu0 0.0
        %1691 = vmatpush1.msra.mxu0 0.0
        %1692 = vmatprep.subr.mxu0 0.0
        %1693 = vmatpush1.msra.mxu0 0.0
        %1694 = vmatprep.subr.mxu0 0.0
        %1695 = vmatpush1.msra.mxu0 0.0
        %1696 = vmatprep.subr.mxu0 0.0
        %1697 = vmatpush1.msra.mxu0 0.0
        %1698 = vmatprep.subr.mxu0 0.0
        %1699 = vmatpush1.msra.mxu0 0.0
        %1700 = vmatprep.subr.mxu0 0.0
        %1701 = vmatpush1.msra.mxu0 0.0
        %1702 = vmatprep.subr.mxu0 0.0
        %1703 = vmatpush1.msra.mxu0 0.0
        %1704 = vmatprep.subr.mxu0 0.0
        %1705 = vmatpush1.msra.mxu0 0.0
        %1706 = vmatprep.subr.mxu0 0.0
        %1707 = vmatpush1.msra.mxu0 0.0
        %1708 = vmatprep.subr.mxu0 0.0
        %1709 = vmatpush1.msra.mxu0 0.0
        %1710 = vmatprep.subr.mxu0 0.0
        %1711 = vmatpush1.msra.mxu0 0.0
        %1712 = vmatprep.subr.mxu0 0.0
        %1713 = vmatpush1.msra.mxu0 0.0
        %1714 = vmatprep.subr.mxu0 0.0
        %1715 = vmatpush1.msra.mxu0 0.0
        %1716 = vmatprep.subr.mxu0 0.0
        %1717 = vmatpush1.msra.mxu0 0.0
        %1718 = vmatprep.subr.mxu0 0.0
        %1719 = vmatpush1.msra.mxu0 0.0
        %1720 = vmatprep.subr.mxu0 0.0
        %1721 = vmatpush1.msra.mxu0 0.0
        %1722 = vmatprep.subr.mxu0 0.0
        %1723 = vmatpush1.msra.mxu0 0.0
        %1724 = vmatprep.subr.mxu0 0.0
        %1725 = vmatpush1.msra.mxu0 0.0
        %1726 = vmatprep.mubr.f32.mxu0 0.0
        %1727 = vmatmul.mubr.f32.gmra.mrb[0].mxu0 %v1660
        %v1728 = vpop.f32.mrb[0].mxu0
        %v1729 = vadd.f32 0.0, %v1728
        %v1730 = vpop.f32.mrb[0].mxu0
        %v1731 = vadd.f32 0.0, %v1730
        %1732 = vdwg.mxu0
        %v1733 = vadd.f32 %v1495, %v1729
        %v1734 = vadd.f32 %v1496, %v1731
        %1735 = vrot.lane.b32.xlu0 %v793, 64
        %v1736 = vpop.permute.xlu0 %1735
        %1737 = vrot.lane.b32.xlu0 %v864, 64
        %v1738 = vpop.permute.xlu0 %1737
        %v1739 = vsel %vm1002, %v1736, 0
        %v1741 = vsel %vm1002, %v1738, 0
        %1743 = vmatprep.subr.mxu0 0.0
        %1744 = vmatpush1.xpose.msra.mxu0 %v1741
        %1745 = vmatprep.subr.mxu0 0.0
        %1746 = vmatpush1.xpose.msra.mxu0 0.0
        %1747 = vmatprep.subr.mxu0 0.0
        %1748 = vmatpush1.xpose.msra.mxu0 0.0
        %1749 = vmatprep.subr.mxu0 0.0
        %1750 = vmatpush1.xpose.msra.mxu0 0.0
        %1751 = vmatprep.subr.mxu0 0.0
        %1752 = vmatpush1.xpose.msra.mxu0 0.0
        %1753 = vmatprep.subr.mxu0 0.0
        %1754 = vmatpush1.xpose.msra.mxu0 0.0
        %1755 = vmatprep.subr.mxu0 0.0
        %1756 = vmatpush1.xpose.msra.mxu0 0.0
        %1757 = vmatprep.subr.mxu0 0.0
        %1758 = vmatpush1.xpose.msra.mxu0 0.0
        %1759 = vmatprep.subr.mxu0 0.0
        %1760 = vmatpush1.xpose.msra.mxu0 0.0
        %1761 = vmatprep.subr.mxu0 0.0
        %1762 = vmatpush1.xpose.msra.mxu0 0.0
        %1763 = vmatprep.subr.mxu0 0.0
        %1764 = vmatpush1.xpose.msra.mxu0 0.0
        %1765 = vmatprep.subr.mxu0 0.0
        %1766 = vmatpush1.xpose.msra.mxu0 0.0
        %1767 = vmatprep.subr.mxu0 0.0
        %1768 = vmatpush1.xpose.msra.mxu0 0.0
        %1769 = vmatprep.subr.mxu0 0.0
        %1770 = vmatpush1.xpose.msra.mxu0 0.0
        %1771 = vmatprep.subr.mxu0 0.0
        %1772 = vmatpush1.xpose.msra.mxu0 0.0
        %1773 = vmatprep.subr.mxu0 0.0
        %1774 = vmatpush1.xpose.msra.mxu0 0.0
        %1775 = vmatprep.subr.mxu0 0.0
        %1776 = vmatpush1.xpose.msra.mxu0 0.0
        %1777 = vmatprep.subr.mxu0 0.0
        %1778 = vmatpush1.xpose.msra.mxu0 0.0
        %1779 = vmatprep.subr.mxu0 0.0
        %1780 = vmatpush1.xpose.msra.mxu0 0.0
        %1781 = vmatprep.subr.mxu0 0.0
        %1782 = vmatpush1.xpose.msra.mxu0 0.0
        %1783 = vmatprep.subr.mxu0 0.0
        %1784 = vmatpush1.xpose.msra.mxu0 0.0
        %1785 = vmatprep.subr.mxu0 0.0
        %1786 = vmatpush1.xpose.msra.mxu0 0.0
        %1787 = vmatprep.subr.mxu0 0.0
        %1788 = vmatpush1.xpose.msra.mxu0 0.0
        %1789 = vmatprep.subr.mxu0 0.0
        %1790 = vmatpush1.xpose.msra.mxu0 0.0
        %1791 = vmatprep.subr.mxu0 0.0
        %1792 = vmatpush1.xpose.msra.mxu0 0.0
        %1793 = vmatprep.subr.mxu0 0.0
        %1794 = vmatpush1.xpose.msra.mxu0 0.0
        %1795 = vmatprep.subr.mxu0 0.0
        %1796 = vmatpush1.xpose.msra.mxu0 0.0
        %1797 = vmatprep.subr.mxu0 0.0
        %1798 = vmatpush1.xpose.msra.mxu0 0.0
        %1799 = vmatprep.subr.mxu0 0.0
        %1800 = vmatpush1.xpose.msra.mxu0 0.0
        %1801 = vmatprep.subr.mxu0 0.0
        %1802 = vmatpush1.xpose.msra.mxu0 0.0
        %1803 = vmatprep.subr.mxu0 0.0
        %1804 = vmatpush1.xpose.msra.mxu0 0.0
        %1805 = vmatprep.subr.mxu0 0.0
        %1806 = vmatpush1.xpose.msra.mxu0 0.0
        %1807 = vmatprep.mubr.f32.mxu0 0.0
        %1808 = vmatmul.mubr.f32.gmra.mrb[0].mxu0 %v1739
        %v1809 = vpop.f32.mrb[0].mxu0
        %v1810 = vadd.f32 0.0, %v1809
        %v1811 = vpop.f32.mrb[0].mxu0
        %1812 = vdwg.mxu0
        %v1813 = vmul.f32 %v1810, 0.125
        %v1814 = vadd.f32 %v1813, %v499
        %v1815 = vsel %vm1081, %v1814, -inf
        %1816 = vmax.xlane.f32.xlu0 %v1815
        %v1817 = vpop.xlane.xlu0 %1816
        %v1818 = vsub.f32 %v1814, %v1817
        %v1819 = vmul.f32 %v1818, 1.442695
        %v1820 = vpow.pop %v1819
        %v1821 = vsel %vm1081, %v1820, 0.0
        %1822 = vadd.xlane.f32.xlu0 %v1821
        %v1823 = vpop.xlane.xlu0 %1822
        %v1824 = vrcp.pop %v1823
        %v1825 = vmul.f32 %v1820, %v1824
        %1827 = vrot.lane.b32.xlu0 %v935, 64
        %v1828 = vpop.permute.xlu0 %1827
        %v1831 = vsel %vm1081, %v1825, 0
        %1833 = vmatprep.subr.mxu0 0.0
        %1834 = vmatpush1.msra.mxu0 %v1828
        %1835 = vmatprep.subr.mxu0 0.0
        %1836 = vmatpush1.msra.mxu0 0.0
        %1837 = vmatprep.subr.mxu0 0.0
        %1838 = vmatpush1.msra.mxu0 0.0
        %1839 = vmatprep.subr.mxu0 0.0
        %1840 = vmatpush1.msra.mxu0 0.0
        %1841 = vmatprep.subr.mxu0 0.0
        %1842 = vmatpush1.msra.mxu0 0.0
        %1843 = vmatprep.subr.mxu0 0.0
        %1844 = vmatpush1.msra.mxu0 0.0
        %1845 = vmatprep.subr.mxu0 0.0
        %1846 = vmatpush1.msra.mxu0 0.0
        %1847 = vmatprep.subr.mxu0 0.0
        %1848 = vmatpush1.msra.mxu0 0.0
        %1849 = vmatprep.subr.mxu0 0.0
        %1850 = vmatpush1.msra.mxu0 0.0
        %1851 = vmatprep.subr.mxu0 0.0
        %1852 = vmatpush1.msra.mxu0 0.0
        %1853 = vmatprep.subr.mxu0 0.0
        %1854 = vmatpush1.msra.mxu0 0.0
        %1855 = vmatprep.subr.mxu0 0.0
        %1856 = vmatpush1.msra.mxu0 0.0
        %1857 = vmatprep.subr.mxu0 0.0
        %1858 = vmatpush1.msra.mxu0 0.0
        %1859 = vmatprep.subr.mxu0 0.0
        %1860 = vmatpush1.msra.mxu0 0.0
        %1861 = vmatprep.subr.mxu0 0.0
        %1862 = vmatpush1.msra.mxu0 0.0
        %1863 = vmatprep.subr.mxu0 0.0
        %1864 = vmatpush1.msra.mxu0 0.0
        %1865 = vmatprep.subr.mxu0 0.0
        %1866 = vmatpush1.msra.mxu0 0.0
        %1867 = vmatprep.subr.mxu0 0.0
        %1868 = vmatpush1.msra.mxu0 0.0
        %1869 = vmatprep.subr.mxu0 0.0
        %1870 = vmatpush1.msra.mxu0 0.0
        %1871 = vmatprep.subr.mxu0 0.0
        %1872 = vmatpush1.msra.mxu0 0.0
        %1873 = vmatprep.subr.mxu0 0.0
        %1874 = vmatpush1.msra.mxu0 0.0
        %1875 = vmatprep.subr.mxu0 0.0
        %1876 = vmatpush1.msra.mxu0 0.0
        %1877 = vmatprep.subr.mxu0 0.0
        %1878 = vmatpush1.msra.mxu0 0.0
        %1879 = vmatprep.subr.mxu0 0.0
        %1880 = vmatpush1.msra.mxu0 0.0
        %1881 = vmatprep.subr.mxu0 0.0
        %1882 = vmatpush1.msra.mxu0 0.0
        %1883 = vmatprep.subr.mxu0 0.0
        %1884 = vmatpush1.msra.mxu0 0.0
        %1885 = vmatprep.subr.mxu0 0.0
        %1886 = vmatpush1.msra.mxu0 0.0
        %1887 = vmatprep.subr.mxu0 0.0
        %1888 = vmatpush1.msra.mxu0 0.0
        %1889 = vmatprep.subr.mxu0 0.0
        %1890 = vmatpush1.msra.mxu0 0.0
        %1891 = vmatprep.subr.mxu0 0.0
        %1892 = vmatpush1.msra.mxu0 0.0
        %1893 = vmatprep.subr.mxu0 0.0
        %1894 = vmatpush1.msra.mxu0 0.0
        %1895 = vmatprep.subr.mxu0 0.0
        %1896 = vmatpush1.msra.mxu0 0.0
        %1897 = vmatprep.mubr.f32.mxu0 0.0
        %1898 = vmatmul.mubr.f32.gmra.mrb[0].mxu0 %v1831
        %v1899 = vpop.f32.mrb[0].mxu0
        %v1900 = vadd.f32 0.0, %v1899
        %v1901 = vpop.f32.mrb[0].mxu0
        %1902 = vdwg.mxu0
        %v1904 = vsel %vm1002, %v1900, 0
        %1906 = vmatprep.subr.mxu0 %v986
        %1907 = vmatpush1.msra.mxu0 %v985
        %1908 = vmatprep.subr.mxu0 %v988
        %1909 = vmatpush1.msra.mxu0 %v987
        %1910 = vmatprep.subr.mxu0 %v990
        %1911 = vmatpush1.msra.mxu0 %v989
        %1912 = vmatprep.subr.mxu0 %v992
        %1913 = vmatpush1.msra.mxu0 %v991
        %1914 = vmatprep.subr.mxu0 %v994
        %1915 = vmatpush1.msra.mxu0 %v993
        %1916 = vmatprep.subr.mxu0 %v996
        %1917 = vmatpush1.msra.mxu0 %v995
        %1918 = vmatprep.subr.mxu0 %v998
        %1919 = vmatpush1.msra.mxu0 %v997
        %1920 = vmatprep.subr.mxu0 %v1000
        %1921 = vmatpush1.msra.mxu0 %v999
        %1922 = vmatprep.subr.mxu0 0.0
        %1923 = vmatpush1.msra.mxu0 0.0
        %1924 = vmatprep.subr.mxu0 0.0
        %1925 = vmatpush1.msra.mxu0 0.0
        %1926 = vmatprep.subr.mxu0 0.0
        %1927 = vmatpush1.msra.mxu0 0.0
        %1928 = vmatprep.subr.mxu0 0.0
        %1929 = vmatpush1.msra.mxu0 0.0
        %1930 = vmatprep.subr.mxu0 0.0
        %1931 = vmatpush1.msra.mxu0 0.0
        %1932 = vmatprep.subr.mxu0 0.0
        %1933 = vmatpush1.msra.mxu0 0.0
        %1934 = vmatprep.subr.mxu0 0.0
        %1935 = vmatpush1.msra.mxu0 0.0
        %1936 = vmatprep.subr.mxu0 0.0
        %1937 = vmatpush1.msra.mxu0 0.0
        %1938 = vmatprep.subr.mxu0 0.0
        %1939 = vmatpush1.msra.mxu0 0.0
        %1940 = vmatprep.subr.mxu0 0.0
        %1941 = vmatpush1.msra.mxu0 0.0
        %1942 = vmatprep.subr.mxu0 0.0
        %1943 = vmatpush1.msra.mxu0 0.0
        %1944 = vmatprep.subr.mxu0 0.0
        %1945 = vmatpush1.msra.mxu0 0.0
        %1946 = vmatprep.subr.mxu0 0.0
        %1947 = vmatpush1.msra.mxu0 0.0
        %1948 = vmatprep.subr.mxu0 0.0
        %1949 = vmatpush1.msra.mxu0 0.0
        %1950 = vmatprep.subr.mxu0 0.0
        %1951 = vmatpush1.msra.mxu0 0.0
        %1952 = vmatprep.subr.mxu0 0.0
        %1953 = vmatpush1.msra.mxu0 0.0
        %1954 = vmatprep.subr.mxu0 0.0
        %1955 = vmatpush1.msra.mxu0 0.0
        %1956 = vmatprep.subr.mxu0 0.0
        %1957 = vmatpush1.msra.mxu0 0.0
        %1958 = vmatprep.subr.mxu0 0.0
        %1959 = vmatpush1.msra.mxu0 0.0
        %1960 = vmatprep.subr.mxu0 0.0
        %1961 = vmatpush1.msra.mxu0 0.0
        %1962 = vmatprep.subr.mxu0 0.0
        %1963 = vmatpush1.msra.mxu0 0.0
        %1964 = vmatprep.subr.mxu0 0.0
        %1965 = vmatpush1.msra.mxu0 0.0
        %1966 = vmatprep.subr.mxu0 0.0
        %1967 = vmatpush1.msra.mxu0 0.0
        %1968 = vmatprep.subr.mxu0 0.0
        %1969 = vmatpush1.msra.mxu0 0.0
        %1970 = vmatprep.mubr.f32.mxu0 0.0
        %1971 = vmatmul.mubr.f32.gmra.mrb[0].mxu0 %v1904
        %v1972 = vpop.f32.mrb[0].mxu0
        %v1973 = vadd.f32 0.0, %v1972
        %v1974 = vpop.f32.mrb[0].mxu0
        %v1975 = vadd.f32 0.0, %v1974
        %1976 = vdwg.mxu0
        %v1977 = vadd.f32 %v1733, %v1973
        %v1978 = vadd.f32 %v1734, %v1975
        %v1979 = vadd.f32 %v492, %v1977
        %v1980 = vadd.f32 %v493, %v1978
        %v1981 = vld [vmem:[%s9] sm:$0x3]
        %v1982 = vld [vmem:[%s10] sm:$0x3]
        %v1983 = vadd.f32 %v1979, %v1980
        %1984 = vadd.xlane.f32.xlu0 %v1983
        %v1985 = vpop.xlane.xlu0 %1984
        %v1986 = vrcp.pop 256.0
        %v1987 = vmul.f32 %v1985, %v1986
        %v1988 = vsub.f32 %v1979, %v1987
        %v1989 = vsub.f32 %v1980, %v1987
        %v1990 = vmul.f32 %v1988, %v1988
        %v1991 = vmul.f32 %v1989, %v1989
        %v1992 = vadd.f32 %v1990, %v1991
        %1993 = vadd.xlane.f32.xlu0 %v1992
        %v1994 = vpop.xlane.xlu0 %1993
        %v1995 = vmul.f32 %v1994, %v1986
        %v1996 = vadd.f32 %v1995, 1e-05
        %v1997 = vrsqrt.pop %v1996
        %v1998 = vmul.f32 %v1988, %v1997
        %v1999 = vmul.f32 %v1989, %v1997
        %v2001 = vlaneseq
        %v2002 = vshrl.u32 %v2001, 7
        %v2003 = vsub.s32 0, %v2002
        %v2004 = vrot.slane %v1981, %v2003
        %v2005 = vlaneseq
        %v2006 = vshrl.u32 %v2005, 7
        %v2007 = vsub.s32 1, %v2006
        %v2008 = vrot.slane %v1981, %v2007
        %v2011 = vmul.f32 %v1998, %v2004
        %v2012 = vmul.f32 %v1999, %v2008
        %v2014 = vlaneseq
        %v2015 = vshrl.u32 %v2014, 7
        %v2016 = vsub.s32 0, %v2015
        %v2017 = vrot.slane %v1982, %v2016
        %v2018 = vlaneseq
        %v2019 = vshrl.u32 %v2018, 7
        %v2020 = vsub.s32 1, %v2019
        %v2021 = vrot.slane %v1982, %v2020
        %v2024 = vadd.f32 %v2011, %v2017
        %v2025 = vadd.f32 %v2012, %v2021
        %v2026 = vld [vmem:[%s5] sm:$0xff]
        %v2027 = vld [vmem:[%s5 + $0x8] sm:$0xff]
        %v2028 = vld [vmem:[%s5 + $0x10] sm:$0xff]
        %v2029 = vld [vmem:[%s5 + $0x18] sm:$0xff]
        %v2030 = vld [vmem:[%s5 + $0x20] sm:$0xff]
        %v2031 = vld [vmem:[%s5 + $0x28] sm:$0xff]
        %v2032 = vld [vmem:[%s5 + $0x30] sm:$0xff]
        %v2033 = vld [vmem:[%s5 + $0x38] sm:$0xff]
        %v2034 = vld [vmem:[%s5 + $0x40] sm:$0xff]
        %v2035 = vld [vmem:[%s5 + $0x48] sm:$0xff]
        %v2036 = vld [vmem:[%s5 + $0x50] sm:$0xff]
        %v2037 = vld [vmem:[%s5 + $0x58] sm:$0xff]
        %v2038 = vld [vmem:[%s5 + $0x60] sm:$0xff]
        %v2039 = vld [vmem:[%s5 + $0x68] sm:$0xff]
        %v2040 = vld [vmem:[%s5 + $0x70] sm:$0xff]
        %v2041 = vld [vmem:[%s5 + $0x78] sm:$0xff]
        %v2042 = vld [vmem:[%s5 + $0x80] sm:$0xff]
        %v2043 = vld [vmem:[%s5 + $0x88] sm:$0xff]
        %v2044 = vld [vmem:[%s5 + $0x90] sm:$0xff]
        %v2045 = vld [vmem:[%s5 + $0x98] sm:$0xff]
        %v2046 = vld [vmem:[%s5 + $0xa0] sm:$0xff]
        %v2047 = vld [vmem:[%s5 + $0xa8] sm:$0xff]
        %v2048 = vld [vmem:[%s5 + $0xb0] sm:$0xff]
        %v2049 = vld [vmem:[%s5 + $0xb8] sm:$0xff]
        %v2050 = vld [vmem:[%s5 + $0xc0] sm:$0xff]
        %v2051 = vld [vmem:[%s5 + $0xc8] sm:$0xff]
        %v2052 = vld [vmem:[%s5 + $0xd0] sm:$0xff]
        %v2053 = vld [vmem:[%s5 + $0xd8] sm:$0xff]
        %v2054 = vld [vmem:[%s5 + $0xe0] sm:$0xff]
        %v2055 = vld [vmem:[%s5 + $0xe8] sm:$0xff]
        %v2056 = vld [vmem:[%s5 + $0xf0] sm:$0xff]
        %v2057 = vld [vmem:[%s5 + $0xf8] sm:$0xff]
        %v2058 = vld [vmem:[%s6] sm:$0x1]
        %v2060 = vlaneseq
        %v2061 = vshrl.u32 %v2060, 7
        %v2062 = vsub.s32 0, %v2061
        %v2063 = vrot.slane %v2058, %v2062
        %2065 = vmatprep.subr.mxu0 0.0
        %2066 = vmatpush1.msra.mxu0 %v2026
        %2067 = vmatprep.subr.mxu0 0.0
        %2068 = vmatpush1.msra.mxu0 %v2027
        %2069 = vmatprep.subr.mxu0 0.0
        %2070 = vmatpush1.msra.mxu0 %v2028
        %2071 = vmatprep.subr.mxu0 0.0
        %2072 = vmatpush1.msra.mxu0 %v2029
        %2073 = vmatprep.subr.mxu0 0.0
        %2074 = vmatpush1.msra.mxu0 %v2030
        %2075 = vmatprep.subr.mxu0 0.0
        %2076 = vmatpush1.msra.mxu0 %v2031
        %2077 = vmatprep.subr.mxu0 0.0
        %2078 = vmatpush1.msra.mxu0 %v2032
        %2079 = vmatprep.subr.mxu0 0.0
        %2080 = vmatpush1.msra.mxu0 %v2033
        %2081 = vmatprep.subr.mxu0 0.0
        %2082 = vmatpush1.msra.mxu0 %v2034
        %2083 = vmatprep.subr.mxu0 0.0
        %2084 = vmatpush1.msra.mxu0 %v2035
        %2085 = vmatprep.subr.mxu0 0.0
        %2086 = vmatpush1.msra.mxu0 %v2036
        %2087 = vmatprep.subr.mxu0 0.0
        %2088 = vmatpush1.msra.mxu0 %v2037
        %2089 = vmatprep.subr.mxu0 0.0
        %2090 = vmatpush1.msra.mxu0 %v2038
        %2091 = vmatprep.subr.mxu0 0.0
        %2092 = vmatpush1.msra.mxu0 %v2039
        %2093 = vmatprep.subr.mxu0 0.0
        %2094 = vmatpush1.msra.mxu0 %v2040
        %2095 = vmatprep.subr.mxu0 0.0
        %2096 = vmatpush1.msra.mxu0 %v2041
        %2097 = vmatprep.subr.mxu0 0.0
        %2098 = vmatpush1.msra.mxu0 %v2042
        %2099 = vmatprep.subr.mxu0 0.0
        %2100 = vmatpush1.msra.mxu0 %v2043
        %2101 = vmatprep.subr.mxu0 0.0
        %2102 = vmatpush1.msra.mxu0 %v2044
        %2103 = vmatprep.subr.mxu0 0.0
        %2104 = vmatpush1.msra.mxu0 %v2045
        %2105 = vmatprep.subr.mxu0 0.0
        %2106 = vmatpush1.msra.mxu0 %v2046
        %2107 = vmatprep.subr.mxu0 0.0
        %2108 = vmatpush1.msra.mxu0 %v2047
        %2109 = vmatprep.subr.mxu0 0.0
        %2110 = vmatpush1.msra.mxu0 %v2048
        %2111 = vmatprep.subr.mxu0 0.0
        %2112 = vmatpush1.msra.mxu0 %v2049
        %2113 = vmatprep.subr.mxu0 0.0
        %2114 = vmatpush1.msra.mxu0 %v2050
        %2115 = vmatprep.subr.mxu0 0.0
        %2116 = vmatpush1.msra.mxu0 %v2051
        %2117 = vmatprep.subr.mxu0 0.0
        %2118 = vmatpush1.msra.mxu0 %v2052
        %2119 = vmatprep.subr.mxu0 0.0
        %2120 = vmatpush1.msra.mxu0 %v2053
        %2121 = vmatprep.subr.mxu0 0.0
        %2122 = vmatpush1.msra.mxu0 %v2054
        %2123 = vmatprep.subr.mxu0 0.0
        %2124 = vmatpush1.msra.mxu0 %v2055
        %2125 = vmatprep.subr.mxu0 0.0
        %2126 = vmatpush1.msra.mxu0 %v2056
        %2127 = vmatprep.subr.mxu0 0.0
        %2128 = vmatpush1.msra.mxu0 %v2057
        %2129 = vmatprep.mubr.f32.mxu0 %v2025
        %2130 = vmatmul.mubr.f32.gmra.mrb[0].mxu0 %v2024
        %v2131 = vpop.f32.mrb[0].mxu0
        %v2132 = vadd.f32 %v2063, %v2131
        %v2133 = vpop.f32.mrb[0].mxu0
        %2134 = vdwg.mxu0
        %v2135 = vmax.f32 %v2132, 0.0
        %v2136 = vld [vmem:[%s7] sm:$0xff]
        %v2137 = vld [vmem:[%s7 + $0x8] sm:$0xff]
        %v2138 = vld [vmem:[%s7 + $0x10] sm:$0xff]
        %v2139 = vld [vmem:[%s7 + $0x18] sm:$0xff]
        %v2140 = vld [vmem:[%s7 + $0x20] sm:$0xff]
        %v2141 = vld [vmem:[%s7 + $0x28] sm:$0xff]
        %v2142 = vld [vmem:[%s7 + $0x30] sm:$0xff]
        %v2143 = vld [vmem:[%s7 + $0x38] sm:$0xff]
        %v2144 = vld [vmem:[%s7 + $0x40] sm:$0xff]
        %v2145 = vld [vmem:[%s7 + $0x48] sm:$0xff]
        %v2146 = vld [vmem:[%s7 + $0x50] sm:$0xff]
        %v2147 = vld [vmem:[%s7 + $0x58] sm:$0xff]
        %v2148 = vld [vmem:[%s7 + $0x60] sm:$0xff]
        %v2149 = vld [vmem:[%s7 + $0x68] sm:$0xff]
        %v2150 = vld [vmem:[%s7 + $0x70] sm:$0xff]
        %v2151 = vld [vmem:[%s7 + $0x78] sm:$0xff]
        %v2152 = vld [vmem:[%s8] sm:$0x3]
        %v2154 = vlaneseq
        %v2155 = vshrl.u32 %v2154, 7
        %v2156 = vsub.s32 0, %v2155
        %v2157 = vrot.slane %v2152, %v2156
        %v2158 = vlaneseq
        %v2159 = vshrl.u32 %v2158, 7
        %v2160 = vsub.s32 1, %v2159
        %v2161 = vrot.slane %v2152, %v2160
        %v2165 = vsel %vm1002, %v2135, 0
        %2167 = vmatprep.subr.mxu0 %v2137
        %2168 = vmatpush1.msra.mxu0 %v2136
        %2169 = vmatprep.subr.mxu0 %v2139
        %2170 = vmatpush1.msra.mxu0 %v2138
        %2171 = vmatprep.subr.mxu0 %v2141
        %2172 = vmatpush1.msra.mxu0 %v2140
        %2173 = vmatprep.subr.mxu0 %v2143
        %2174 = vmatpush1.msra.mxu0 %v2142
        %2175 = vmatprep.subr.mxu0 %v2145
        %2176 = vmatpush1.msra.mxu0 %v2144
        %2177 = vmatprep.subr.mxu0 %v2147
        %2178 = vmatpush1.msra.mxu0 %v2146
        %2179 = vmatprep.subr.mxu0 %v2149
        %2180 = vmatpush1.msra.mxu0 %v2148
        %2181 = vmatprep.subr.mxu0 %v2151
        %2182 = vmatpush1.msra.mxu0 %v2150
        %2183 = vmatprep.subr.mxu0 0.0
        %2184 = vmatpush1.msra.mxu0 0.0
        %2185 = vmatprep.subr.mxu0 0.0
        %2186 = vmatpush1.msra.mxu0 0.0
        %2187 = vmatprep.subr.mxu0 0.0
        %2188 = vmatpush1.msra.mxu0 0.0
        %2189 = vmatprep.subr.mxu0 0.0
        %2190 = vmatpush1.msra.mxu0 0.0
        %2191 = vmatprep.subr.mxu0 0.0
        %2192 = vmatpush1.msra.mxu0 0.0
        %2193 = vmatprep.subr.mxu0 0.0
        %2194 = vmatpush1.msra.mxu0 0.0
        %2195 = vmatprep.subr.mxu0 0.0
        %2196 = vmatpush1.msra.mxu0 0.0
        %2197 = vmatprep.subr.mxu0 0.0
        %2198 = vmatpush1.msra.mxu0 0.0
        %2199 = vmatprep.subr.mxu0 0.0
        %2200 = vmatpush1.msra.mxu0 0.0
        %2201 = vmatprep.subr.mxu0 0.0
        %2202 = vmatpush1.msra.mxu0 0.0
        %2203 = vmatprep.subr.mxu0 0.0
        %2204 = vmatpush1.msra.mxu0 0.0
        %2205 = vmatprep.subr.mxu0 0.0
        %2206 = vmatpush1.msra.mxu0 0.0
        %2207 = vmatprep.subr.mxu0 0.0
        %2208 = vmatpush1.msra.mxu0 0.0
        %2209 = vmatprep.subr.mxu0 0.0
        %2210 = vmatpush1.msra.mxu0 0.0
        %2211 = vmatprep.subr.mxu0 0.0
        %2212 = vmatpush1.msra.mxu0 0.0
        %2213 = vmatprep.subr.mxu0 0.0
        %2214 = vmatpush1.msra.mxu0 0.0
        %2215 = vmatprep.subr.mxu0 0.0
        %2216 = vmatpush1.msra.mxu0 0.0
        %2217 = vmatprep.subr.mxu0 0.0
        %2218 = vmatpush1.msra.mxu0 0.0
        %2219 = vmatprep.subr.mxu0 0.0
        %2220 = vmatpush1.msra.mxu0 0.0
        %2221 = vmatprep.subr.mxu0 0.0
        %2222 = vmatpush1.msra.mxu0 0.0
        %2223 = vmatprep.subr.mxu0 0.0
        %2224 = vmatpush1.msra.mxu0 0.0
        %2225 = vmatprep.subr.mxu0 0.0
        %2226 = vmatpush1.msra.mxu0 0.0
        %2227 = vmatprep.subr.mxu0 0.0
        %2228 = vmatpush1.msra.mxu0 0.0
        %2229 = vmatprep.subr.mxu0 0.0
        %2230 = vmatpush1.msra.mxu0 0.0
        %2231 = vmatprep.mubr.f32.mxu0 0.0
        %2232 = vmatmul.mubr.f32.gmra.mrb[0].mxu0 %v2165
        %v2233 = vpop.f32.mrb[0].mxu0
        %v2234 = vadd.f32 %v2157, %v2233
        %v2235 = vpop.f32.mrb[0].mxu0
        %v2236 = vadd.f32 %v2161, %v2235
        %2237 = vdwg.mxu0
        %v2238 = vadd.f32 %v2024, %v2234
        %v2239 = vadd.f32 %v2025, %v2236
        %v2240 = vld [vmem:[%s11] sm:$0x3]
        %v2241 = vld [vmem:[%s12] sm:$0x3]
        %v2242 = vadd.f32 %v2238, %v2239
        %2243 = vadd.xlane.f32.xlu0 %v2242
        %v2244 = vpop.xlane.xlu0 %2243
        %v2245 = vmul.f32 %v2244, %v1986
        %v2246 = vsub.f32 %v2238, %v2245
        %v2247 = vsub.f32 %v2239, %v2245
        %v2248 = vmul.f32 %v2246, %v2246
        %v2249 = vmul.f32 %v2247, %v2247
        %v2250 = vadd.f32 %v2248, %v2249
        %2251 = vadd.xlane.f32.xlu0 %v2250
        %v2252 = vpop.xlane.xlu0 %2251
        %v2253 = vmul.f32 %v2252, %v1986
        %v2254 = vadd.f32 %v2253, 1e-05
        %v2255 = vrsqrt.pop %v2254
        %v2256 = vmul.f32 %v2246, %v2255
        %v2257 = vmul.f32 %v2247, %v2255
        %v2259 = vlaneseq
        %v2260 = vshrl.u32 %v2259, 7
        %v2261 = vsub.s32 0, %v2260
        %v2262 = vrot.slane %v2240, %v2261
        %v2263 = vlaneseq
        %v2264 = vshrl.u32 %v2263, 7
        %v2265 = vsub.s32 1, %v2264
        %v2266 = vrot.slane %v2240, %v2265
        %v2269 = vmul.f32 %v2256, %v2262
        %v2270 = vmul.f32 %v2257, %v2266
        %v2272 = vlaneseq
        %v2273 = vshrl.u32 %v2272, 7
        %v2274 = vsub.s32 0, %v2273
        %v2275 = vrot.slane %v2241, %v2274
        %v2276 = vlaneseq
        %v2277 = vshrl.u32 %v2276, 7
        %v2278 = vsub.s32 1, %v2277
        %v2279 = vrot.slane %v2241, %v2278
        %v2282 = vadd.f32 %v2269, %v2275
        %v2283 = vadd.f32 %v2270, %v2279
        %s2284 = scalar_lea.vmem %s1, 1536
        %v2285 = vld [vmem:[%s2284] sm:$0xff]
        %v2286 = vld [vmem:[%s2284 + $0x8] sm:$0xff]
        %v2287 = vld [vmem:[%s2284 + $0x10] sm:$0xff]
        %v2288 = vld [vmem:[%s2284 + $0x18] sm:$0xff]
        %v2289 = vld [vmem:[%s2284 + $0x20] sm:$0xff]
        %v2290 = vld [vmem:[%s2284 + $0x28] sm:$0xff]
        %v2291 = vld [vmem:[%s2284 + $0x30] sm:$0xff]
        %v2292 = vld [vmem:[%s2284 + $0x38] sm:$0xff]
        %v2293 = vld [vmem:[%s2284 + $0x40] sm:$0xff]
        %v2294 = vld [vmem:[%s2284 + $0x48] sm:$0xff]
        %v2295 = vld [vmem:[%s2284 + $0x50] sm:$0xff]
        %v2296 = vld [vmem:[%s2284 + $0x58] sm:$0xff]
        %v2297 = vld [vmem:[%s2284 + $0x60] sm:$0xff]
        %v2298 = vld [vmem:[%s2284 + $0x68] sm:$0xff]
        %v2299 = vld [vmem:[%s2284 + $0x70] sm:$0xff]
        %v2300 = vld [vmem:[%s2284 + $0x78] sm:$0xff]
        %v2301 = vld [vmem:[%s2284 + $0x80] sm:$0xff]
        %v2302 = vld [vmem:[%s2284 + $0x88] sm:$0xff]
        %v2303 = vld [vmem:[%s2284 + $0x90] sm:$0xff]
        %v2304 = vld [vmem:[%s2284 + $0x98] sm:$0xff]
        %v2305 = vld [vmem:[%s2284 + $0xa0] sm:$0xff]
        %v2306 = vld [vmem:[%s2284 + $0xa8] sm:$0xff]
        %v2307 = vld [vmem:[%s2284 + $0xb0] sm:$0xff]
        %v2308 = vld [vmem:[%s2284 + $0xb8] sm:$0xff]
        %v2309 = vld [vmem:[%s2284 + $0xc0] sm:$0xff]
        %v2310 = vld [vmem:[%s2284 + $0xc8] sm:$0xff]
        %v2311 = vld [vmem:[%s2284 + $0xd0] sm:$0xff]
        %v2312 = vld [vmem:[%s2284 + $0xd8] sm:$0xff]
        %v2313 = vld [vmem:[%s2284 + $0xe0] sm:$0xff]
        %v2314 = vld [vmem:[%s2284 + $0xe8] sm:$0xff]
        %v2315 = vld [vmem:[%s2284 + $0xf0] sm:$0xff]
        %v2316 = vld [vmem:[%s2284 + $0xf8] sm:$0xff]
        %v2317 = vld [vmem:[%s2284 + $0x100] sm:$0xff]
        %v2318 = vld [vmem:[%s2284 + $0x108] sm:$0xff]
        %v2319 = vld [vmem:[%s2284 + $0x110] sm:$0xff]
        %v2320 = vld [vmem:[%s2284 + $0x118] sm:$0xff]
        %v2321 = vld [vmem:[%s2284 + $0x120] sm:$0xff]
        %v2322 = vld [vmem:[%s2284 + $0x128] sm:$0xff]
        %v2323 = vld [vmem:[%s2284 + $0x130] sm:$0xff]
        %v2324 = vld [vmem:[%s2284 + $0x138] sm:$0xff]
        %v2325 = vld [vmem:[%s2284 + $0x140] sm:$0xff]
        %v2326 = vld [vmem:[%s2284 + $0x148] sm:$0xff]
        %v2327 = vld [vmem:[%s2284 + $0x150] sm:$0xff]
        %v2328 = vld [vmem:[%s2284 + $0x158] sm:$0xff]
        %v2329 = vld [vmem:[%s2284 + $0x160] sm:$0xff]
        %v2330 = vld [vmem:[%s2284 + $0x168] sm:$0xff]
        %v2331 = vld [vmem:[%s2284 + $0x170] sm:$0xff]
        %v2332 = vld [vmem:[%s2284 + $0x178] sm:$0xff]
        %v2333 = vld [vmem:[%s2284 + $0x180] sm:$0xff]
        %v2334 = vld [vmem:[%s2284 + $0x188] sm:$0xff]
        %v2335 = vld [vmem:[%s2284 + $0x190] sm:$0xff]
        %v2336 = vld [vmem:[%s2284 + $0x198] sm:$0xff]
        %v2337 = vld [vmem:[%s2284 + $0x1a0] sm:$0xff]
        %v2338 = vld [vmem:[%s2284 + $0x1a8] sm:$0xff]
        %v2339 = vld [vmem:[%s2284 + $0x1b0] sm:$0xff]
        %v2340 = vld [vmem:[%s2284 + $0x1b8] sm:$0xff]
        %v2341 = vld [vmem:[%s2284 + $0x1c0] sm:$0xff]
        %v2342 = vld [vmem:[%s2284 + $0x1c8] sm:$0xff]
        %v2343 = vld [vmem:[%s2284 + $0x1d0] sm:$0xff]
        %v2344 = vld [vmem:[%s2284 + $0x1d8] sm:$0xff]
        %v2345 = vld [vmem:[%s2284 + $0x1e0] sm:$0xff]
        %v2346 = vld [vmem:[%s2284 + $0x1e8] sm:$0xff]
        %v2347 = vld [vmem:[%s2284 + $0x1f0] sm:$0xff]
        %v2348 = vld [vmem:[%s2284 + $0x1f8] sm:$0xff]
        %v2349 = vld [vmem:[%s2284 + $0x200] sm:$0xff]
        %v2350 = vld [vmem:[%s2284 + $0x208] sm:$0xff]
        %v2351 = vld [vmem:[%s2284 + $0x210] sm:$0xff]
        %v2352 = vld [vmem:[%s2284 + $0x218] sm:$0xff]
        %v2353 = vld [vmem:[%s2284 + $0x220] sm:$0xff]
        %v2354 = vld [vmem:[%s2284 + $0x228] sm:$0xff]
        %v2355 = vld [vmem:[%s2284 + $0x230] sm:$0xff]
        %v2356 = vld [vmem:[%s2284 + $0x238] sm:$0xff]
        %v2357 = vld [vmem:[%s2284 + $0x240] sm:$0xff]
        %v2358 = vld [vmem:[%s2284 + $0x248] sm:$0xff]
        %v2359 = vld [vmem:[%s2284 + $0x250] sm:$0xff]
        %v2360 = vld [vmem:[%s2284 + $0x258] sm:$0xff]
        %v2361 = vld [vmem:[%s2284 + $0x260] sm:$0xff]
        %v2362 = vld [vmem:[%s2284 + $0x268] sm:$0xff]
        %v2363 = vld [vmem:[%s2284 + $0x270] sm:$0xff]
        %v2364 = vld [vmem:[%s2284 + $0x278] sm:$0xff]
        %v2365 = vld [vmem:[%s2284 + $0x280] sm:$0xff]
        %v2366 = vld [vmem:[%s2284 + $0x288] sm:$0xff]
        %v2367 = vld [vmem:[%s2284 + $0x290] sm:$0xff]
        %v2368 = vld [vmem:[%s2284 + $0x298] sm:$0xff]
        %v2369 = vld [vmem:[%s2284 + $0x2a0] sm:$0xff]
        %v2370 = vld [vmem:[%s2284 + $0x2a8] sm:$0xff]
        %v2371 = vld [vmem:[%s2284 + $0x2b0] sm:$0xff]
        %v2372 = vld [vmem:[%s2284 + $0x2b8] sm:$0xff]
        %v2373 = vld [vmem:[%s2284 + $0x2c0] sm:$0xff]
        %v2374 = vld [vmem:[%s2284 + $0x2c8] sm:$0xff]
        %v2375 = vld [vmem:[%s2284 + $0x2d0] sm:$0xff]
        %v2376 = vld [vmem:[%s2284 + $0x2d8] sm:$0xff]
        %v2377 = vld [vmem:[%s2284 + $0x2e0] sm:$0xff]
        %v2378 = vld [vmem:[%s2284 + $0x2e8] sm:$0xff]
        %v2379 = vld [vmem:[%s2284 + $0x2f0] sm:$0xff]
        %v2380 = vld [vmem:[%s2284 + $0x2f8] sm:$0xff]
        %v2381 = vld [vmem:[%s2284 + $0x300] sm:$0xff]
        %v2382 = vld [vmem:[%s2284 + $0x308] sm:$0xff]
        %v2383 = vld [vmem:[%s2284 + $0x310] sm:$0xff]
        %v2384 = vld [vmem:[%s2284 + $0x318] sm:$0xff]
        %v2385 = vld [vmem:[%s2284 + $0x320] sm:$0xff]
        %v2386 = vld [vmem:[%s2284 + $0x328] sm:$0xff]
        %v2387 = vld [vmem:[%s2284 + $0x330] sm:$0xff]
        %v2388 = vld [vmem:[%s2284 + $0x338] sm:$0xff]
        %v2389 = vld [vmem:[%s2284 + $0x340] sm:$0xff]
        %v2390 = vld [vmem:[%s2284 + $0x348] sm:$0xff]
        %v2391 = vld [vmem:[%s2284 + $0x350] sm:$0xff]
        %v2392 = vld [vmem:[%s2284 + $0x358] sm:$0xff]
        %v2393 = vld [vmem:[%s2284 + $0x360] sm:$0xff]
        %v2394 = vld [vmem:[%s2284 + $0x368] sm:$0xff]
        %v2395 = vld [vmem:[%s2284 + $0x370] sm:$0xff]
        %v2396 = vld [vmem:[%s2284 + $0x378] sm:$0xff]
        %v2397 = vld [vmem:[%s2284 + $0x380] sm:$0xff]
        %v2398 = vld [vmem:[%s2284 + $0x388] sm:$0xff]
        %v2399 = vld [vmem:[%s2284 + $0x390] sm:$0xff]
        %v2400 = vld [vmem:[%s2284 + $0x398] sm:$0xff]
        %v2401 = vld [vmem:[%s2284 + $0x3a0] sm:$0xff]
        %v2402 = vld [vmem:[%s2284 + $0x3a8] sm:$0xff]
        %v2403 = vld [vmem:[%s2284 + $0x3b0] sm:$0xff]
        %v2404 = vld [vmem:[%s2284 + $0x3b8] sm:$0xff]
        %v2405 = vld [vmem:[%s2284 + $0x3c0] sm:$0xff]
        %v2406 = vld [vmem:[%s2284 + $0x3c8] sm:$0xff]
        %v2407 = vld [vmem:[%s2284 + $0x3d0] sm:$0xff]
        %v2408 = vld [vmem:[%s2284 + $0x3d8] sm:$0xff]
        %v2409 = vld [vmem:[%s2284 + $0x3e0] sm:$0xff]
        %v2410 = vld [vmem:[%s2284 + $0x3e8] sm:$0xff]
        %v2411 = vld [vmem:[%s2284 + $0x3f0] sm:$0xff]
        %v2412 = vld [vmem:[%s2284 + $0x3f8] sm:$0xff]
        %v2413 = vld [vmem:[%s2284 + $0x400] sm:$0xff]
        %v2414 = vld [vmem:[%s2284 + $0x408] sm:$0xff]
        %v2415 = vld [vmem:[%s2284 + $0x410] sm:$0xff]
        %v2416 = vld [vmem:[%s2284 + $0x418] sm:$0xff]
        %v2417 = vld [vmem:[%s2284 + $0x420] sm:$0xff]
        %v2418 = vld [vmem:[%s2284 + $0x428] sm:$0xff]
        %v2419 = vld [vmem:[%s2284 + $0x430] sm:$0xff]
        %v2420 = vld [vmem:[%s2284 + $0x438] sm:$0xff]
        %v2421 = vld [vmem:[%s2284 + $0x440] sm:$0xff]
        %v2422 = vld [vmem:[%s2284 + $0x448] sm:$0xff]
        %v2423 = vld [vmem:[%s2284 + $0x450] sm:$0xff]
        %v2424 = vld [vmem:[%s2284 + $0x458] sm:$0xff]
        %v2425 = vld [vmem:[%s2284 + $0x460] sm:$0xff]
        %v2426 = vld [vmem:[%s2284 + $0x468] sm:$0xff]
        %v2427 = vld [vmem:[%s2284 + $0x470] sm:$0xff]
        %v2428 = vld [vmem:[%s2284 + $0x478] sm:$0xff]
        %v2429 = vld [vmem:[%s2284 + $0x480] sm:$0xff]
        %v2430 = vld [vmem:[%s2284 + $0x488] sm:$0xff]
        %v2431 = vld [vmem:[%s2284 + $0x490] sm:$0xff]
        %v2432 = vld [vmem:[%s2284 + $0x498] sm:$0xff]
        %v2433 = vld [vmem:[%s2284 + $0x4a0] sm:$0xff]
        %v2434 = vld [vmem:[%s2284 + $0x4a8] sm:$0xff]
        %v2435 = vld [vmem:[%s2284 + $0x4b0] sm:$0xff]
        %v2436 = vld [vmem:[%s2284 + $0x4b8] sm:$0xff]
        %v2437 = vld [vmem:[%s2284 + $0x4c0] sm:$0xff]
        %v2438 = vld [vmem:[%s2284 + $0x4c8] sm:$0xff]
        %v2439 = vld [vmem:[%s2284 + $0x4d0] sm:$0xff]
        %v2440 = vld [vmem:[%s2284 + $0x4d8] sm:$0xff]
        %v2441 = vld [vmem:[%s2284 + $0x4e0] sm:$0xff]
        %v2442 = vld [vmem:[%s2284 + $0x4e8] sm:$0xff]
        %v2443 = vld [vmem:[%s2284 + $0x4f0] sm:$0xff]
        %v2444 = vld [vmem:[%s2284 + $0x4f8] sm:$0xff]
        %v2445 = vld [vmem:[%s2284 + $0x500] sm:$0xff]
        %v2446 = vld [vmem:[%s2284 + $0x508] sm:$0xff]
        %v2447 = vld [vmem:[%s2284 + $0x510] sm:$0xff]
        %v2448 = vld [vmem:[%s2284 + $0x518] sm:$0xff]
        %v2449 = vld [vmem:[%s2284 + $0x520] sm:$0xff]
        %v2450 = vld [vmem:[%s2284 + $0x528] sm:$0xff]
        %v2451 = vld [vmem:[%s2284 + $0x530] sm:$0xff]
        %v2452 = vld [vmem:[%s2284 + $0x538] sm:$0xff]
        %v2453 = vld [vmem:[%s2284 + $0x540] sm:$0xff]
        %v2454 = vld [vmem:[%s2284 + $0x548] sm:$0xff]
        %v2455 = vld [vmem:[%s2284 + $0x550] sm:$0xff]
        %v2456 = vld [vmem:[%s2284 + $0x558] sm:$0xff]
        %v2457 = vld [vmem:[%s2284 + $0x560] sm:$0xff]
        %v2458 = vld [vmem:[%s2284 + $0x568] sm:$0xff]
        %v2459 = vld [vmem:[%s2284 + $0x570] sm:$0xff]
        %v2460 = vld [vmem:[%s2284 + $0x578] sm:$0xff]
        %v2461 = vld [vmem:[%s2284 + $0x580] sm:$0xff]
        %v2462 = vld [vmem:[%s2284 + $0x588] sm:$0xff]
        %v2463 = vld [vmem:[%s2284 + $0x590] sm:$0xff]
        %v2464 = vld [vmem:[%s2284 + $0x598] sm:$0xff]
        %v2465 = vld [vmem:[%s2284 + $0x5a0] sm:$0xff]
        %v2466 = vld [vmem:[%s2284 + $0x5a8] sm:$0xff]
        %v2467 = vld [vmem:[%s2284 + $0x5b0] sm:$0xff]
        %v2468 = vld [vmem:[%s2284 + $0x5b8] sm:$0xff]
        %v2469 = vld [vmem:[%s2284 + $0x5c0] sm:$0xff]
        %v2470 = vld [vmem:[%s2284 + $0x5c8] sm:$0xff]
        %v2471 = vld [vmem:[%s2284 + $0x5d0] sm:$0xff]
        %v2472 = vld [vmem:[%s2284 + $0x5d8] sm:$0xff]
        %v2473 = vld [vmem:[%s2284 + $0x5e0] sm:$0xff]
        %v2474 = vld [vmem:[%s2284 + $0x5e8] sm:$0xff]
        %v2475 = vld [vmem:[%s2284 + $0x5f0] sm:$0xff]
        %v2476 = vld [vmem:[%s2284 + $0x5f8] sm:$0xff]
        %s2477 = scalar_lea.vmem %s2, 6
        %v2478 = vld [vmem:[%s2477] sm:$0x3f]
        %v2480 = vlaneseq
        %v2481 = vshrl.u32 %v2480, 7
        %v2482 = vsub.s32 0, %v2481
        %v2483 = vrot.slane %v2478, %v2482
        %v2484 = vlaneseq
        %v2485 = vshrl.u32 %v2484, 7
        %v2486 = vsub.s32 1, %v2485
        %v2487 = vrot.slane %v2478, %v2486
        %v2488 = vlaneseq
        %v2489 = vshrl.u32 %v2488, 7
        %v2490 = vsub.s32 2, %v2489
        %v2491 = vrot.slane %v2478, %v2490
        %v2492 = vlaneseq
        %v2493 = vshrl.u32 %v2492, 7
        %v2494 = vsub.s32 3, %v2493
        %v2495 = vrot.slane %v2478, %v2494
        %v2496 = vlaneseq
        %v2497 = vshrl.u32 %v2496, 7
        %v2498 = vsub.s32 4, %v2497
        %v2499 = vrot.slane %v2478, %v2498
        %v2500 = vlaneseq
        %v2501 = vshrl.u32 %v2500, 7
        %v2502 = vsub.s32 5, %v2501
        %v2503 = vrot.slane %v2478, %v2502
        %2510 = vmatprep.subr.mxu0 %v2286
        %2511 = vmatpush1.msra.mxu0 %v2285
        %2512 = vmatprep.subr.mxu0 %v2292
        %2513 = vmatpush1.msra.mxu0 %v2291
        %2514 = vmatprep.subr.mxu0 %v2298
        %2515 = vmatpush1.msra.mxu0 %v2297
        %2516 = vmatprep.subr.mxu0 %v2304
        %2517 = vmatpush1.msra.mxu0 %v2303
        %2518 = vmatprep.subr.mxu0 %v2310
        %2519 = vmatpush1.msra.mxu0 %v2309
        %2520 = vmatprep.subr.mxu0 %v2316
        %2521 = vmatpush1.msra.mxu0 %v2315
        %2522 = vmatprep.subr.mxu0 %v2322
        %2523 = vmatpush1.msra.mxu0 %v2321
        %2524 = vmatprep.subr.mxu0 %v2328
        %2525 = vmatpush1.msra.mxu0 %v2327
        %2526 = vmatprep.subr.mxu0 %v2334
        %2527 = vmatpush1.msra.mxu0 %v2333
        %2528 = vmatprep.subr.mxu0 %v2340
        %2529 = vmatpush1.msra.mxu0 %v2339
        %2530 = vmatprep.subr.mxu0 %v2346
        %2531 = vmatpush1.msra.mxu0 %v2345
        %2532 = vmatprep.subr.mxu0 %v2352
        %2533 = vmatpush1.msra.mxu0 %v2351
        %2534 = vmatprep.subr.mxu0 %v2358
        %2535 = vmatpush1.msra.mxu0 %v2357
        %2536 = vmatprep.subr.mxu0 %v2364
        %2537 = vmatpush1.msra.mxu0 %v2363
        %2538 = vmatprep.subr.mxu0 %v2370
        %2539 = vmatpush1.msra.mxu0 %v2369
        %2540 = vmatprep.subr.mxu0 %v2376
        %2541 = vmatpush1.msra.mxu0 %v2375
        %2542 = vmatprep.subr.mxu0 %v2382
        %2543 = vmatpush1.msra.mxu0 %v2381
        %2544 = vmatprep.subr.mxu0 %v2388
        %2545 = vmatpush1.msra.mxu0 %v2387
        %2546 = vmatprep.subr.mxu0 %v2394
        %2547 = vmatpush1.msra.mxu0 %v2393
        %2548 = vmatprep.subr.mxu0 %v2400
        %2549 = vmatpush1.msra.mxu0 %v2399
        %2550 = vmatprep.subr.mxu0 %v2406
        %2551 = vmatpush1.msra.mxu0 %v2405
        %2552 = vmatprep.subr.mxu0 %v2412
        %2553 = vmatpush1.msra.mxu0 %v2411
        %2554 = vmatprep.subr.mxu0 %v2418
        %2555 = vmatpush1.msra.mxu0 %v2417
        %2556 = vmatprep.subr.mxu0 %v2424
        %2557 = vmatpush1.msra.mxu0 %v2423
        %2558 = vmatprep.subr.mxu0 %v2430
        %2559 = vmatpush1.msra.mxu0 %v2429
        %2560 = vmatprep.subr.mxu0 %v2436
        %2561 = vmatpush1.msra.mxu0 %v2435
        %2562 = vmatprep.subr.mxu0 %v2442
        %2563 = vmatpush1.msra.mxu0 %v2441
        %2564 = vmatprep.subr.mxu0 %v2448
        %2565 = vmatpush1.msra.mxu0 %v2447
        %2566 = vmatprep.subr.mxu0 %v2454
        %2567 = vmatpush1.msra.mxu0 %v2453
        %2568 = vmatprep.subr.mxu0 %v2460
        %2569 = vmatpush1.msra.mxu0 %v2459
        %2570 = vmatprep.subr.mxu0 %v2466
        %2571 = vmatpush1.msra.mxu0 %v2465
        %2572 = vmatprep.subr.mxu0 %v2472
        %2573 = vmatpush1.msra.mxu0 %v2471
        %2574 = vmatprep.mubr.f32.mxu0 %v2283
        %2575 = vmatmul.mubr.f32.gmra.mrb[0].mxu0 %v2282
        %v2576 = vpop.f32.mrb[0].mxu0
        %v2577 = vadd.f32 %v2483, %v2576
        %v2578 = vpop.f32.mrb[0].mxu0
        %v2579 = vadd.f32 %v2487, %v2578
        %2580 = vdwg.mxu0
        %2581 = vmatprep.subr.mxu0 %v2288
        %2582 = vmatpush1.msra.mxu0 %v2287
        %2583 = vmatprep.subr.mxu0 %v2294
        %2584 = vmatpush1.msra.mxu0 %v2293
        %2585 = vmatprep.subr.mxu0 %v2300
        %2586 = vmatpush1.msra.mxu0 %v2299
        %2587 = vmatprep.subr.mxu0 %v2306
        %2588 = vmatpush1.msra.mxu0 %v2305
        %2589 = vmatprep.subr.mxu0 %v2312
        %2590 = vmatpush1.msra.mxu0 %v2311
        %2591 = vmatprep.subr.mxu0 %v2318
        %2592 = vmatpush1.msra.mxu0 %v2317
        %2593 = vmatprep.subr.mxu0 %v2324
        %2594 = vmatpush1.msra.mxu0 %v2323
        %2595 = vmatprep.subr.mxu0 %v2330
        %2596 = vmatpush1.msra.mxu0 %v2329
        %2597 = vmatprep.subr.mxu0 %v2336
        %2598 = vmatpush1.msra.mxu0 %v2335
        %2599 = vmatprep.subr.mxu0 %v2342
        %2600 = vmatpush1.msra.mxu0 %v2341
        %2601 = vmatprep.subr.mxu0 %v2348
        %2602 = vmatpush1.msra.mxu0 %v2347
        %2603 = vmatprep.subr.mxu0 %v2354
        %2604 = vmatpush1.msra.mxu0 %v2353
        %2605 = vmatprep.subr.mxu0 %v2360
        %2606 = vmatpush1.msra.mxu0 %v2359
        %2607 = vmatprep.subr.mxu0 %v2366
        %2608 = vmatpush1.msra.mxu0 %v2365
        %2609 = vmatprep.subr.mxu0 %v2372
        %2610 = vmatpush1.msra.mxu0 %v2371
        %2611 = vmatprep.subr.mxu0 %v2378
        %2612 = vmatpush1.msra.mxu0 %v2377
        %2613 = vmatprep.subr.mxu0 %v2384
        %2614 = vmatpush1.msra.mxu0 %v2383
        %2615 = vmatprep.subr.mxu0 %v2390
        %2616 = vmatpush1.msra.mxu0 %v2389
        %2617 = vmatprep.subr.mxu0 %v2396
        %2618 = vmatpush1.msra.mxu0 %v2395
        %2619 = vmatprep.subr.mxu0 %v2402
        %2620 = vmatpush1.msra.mxu0 %v2401
        %2621 = vmatprep.subr.mxu0 %v2408
        %2622 = vmatpush1.msra.mxu0 %v2407
        %2623 = vmatprep.subr.mxu0 %v2414
        %2624 = vmatpush1.msra.mxu0 %v2413
        %2625 = vmatprep.subr.mxu0 %v2420
        %2626 = vmatpush1.msra.mxu0 %v2419
        %2627 = vmatprep.subr.mxu0 %v2426
        %2628 = vmatpush1.msra.mxu0 %v2425
        %2629 = vmatprep.subr.mxu0 %v2432
        %2630 = vmatpush1.msra.mxu0 %v2431
        %2631 = vmatprep.subr.mxu0 %v2438
        %2632 = vmatpush1.msra.mxu0 %v2437
        %2633 = vmatprep.subr.mxu0 %v2444
        %2634 = vmatpush1.msra.mxu0 %v2443
        %2635 = vmatprep.subr.mxu0 %v2450
        %2636 = vmatpush1.msra.mxu0 %v2449
        %2637 = vmatprep.subr.mxu0 %v2456
        %2638 = vmatpush1.msra.mxu0 %v2455
        %2639 = vmatprep.subr.mxu0 %v2462
        %2640 = vmatpush1.msra.mxu0 %v2461
        %2641 = vmatprep.subr.mxu0 %v2468
        %2642 = vmatpush1.msra.mxu0 %v2467
        %2643 = vmatprep.subr.mxu0 %v2474
        %2644 = vmatpush1.msra.mxu0 %v2473
        %2645 = vmatprep.mubr.f32.mxu0 %v2283
        %2646 = vmatmul.mubr.f32.gmra.mrb[0].mxu0 %v2282
        %v2647 = vpop.f32.mrb[0].mxu0
        %v2648 = vadd.f32 %v2491, %v2647
        %v2649 = vpop.f32.mrb[0].mxu0
        %v2650 = vadd.f32 %v2495, %v2649
        %2651 = vdwg.mxu0
        %2652 = vmatprep.subr.mxu0 %v2290
        %2653 = vmatpush1.msra.mxu0 %v2289
        %2654 = vmatprep.subr.mxu0 %v2296
        %2655 = vmatpush1.msra.mxu0 %v2295
        %2656 = vmatprep.subr.mxu0 %v2302
        %2657 = vmatpush1.msra.mxu0 %v2301
        %2658 = vmatprep.subr.mxu0 %v2308
        %2659 = vmatpush1.msra.mxu0 %v2307
        %2660 = vmatprep.subr.mxu0 %v2314
        %2661 = vmatpush1.msra.mxu0 %v2313
        %2662 = vmatprep.subr.mxu0 %v2320
        %2663 = vmatpush1.msra.mxu0 %v2319
        %2664 = vmatprep.subr.mxu0 %v2326
        %2665 = vmatpush1.msra.mxu0 %v2325
        %2666 = vmatprep.subr.mxu0 %v2332
        %2667 = vmatpush1.msra.mxu0 %v2331
        %2668 = vmatprep.subr.mxu0 %v2338
        %2669 = vmatpush1.msra.mxu0 %v2337
        %2670 = vmatprep.subr.mxu0 %v2344
        %2671 = vmatpush1.msra.mxu0 %v2343
        %2672 = vmatprep.subr.mxu0 %v2350
        %2673 = vmatpush1.msra.mxu0 %v2349
        %2674 = vmatprep.subr.mxu0 %v2356
        %2675 = vmatpush1.msra.mxu0 %v2355
        %2676 = vmatprep.subr.mxu0 %v2362
        %2677 = vmatpush1.msra.mxu0 %v2361
        %2678 = vmatprep.subr.mxu0 %v2368
        %2679 = vmatpush1.msra.mxu0 %v2367
        %2680 = vmatprep.subr.mxu0 %v2374
        %2681 = vmatpush1.msra.mxu0 %v2373
        %2682 = vmatprep.subr.mxu0 %v2380
        %2683 = vmatpush1.msra.mxu0 %v2379
        %2684 = vmatprep.subr.mxu0 %v2386
        %2685 = vmatpush1.msra.mxu0 %v2385
        %2686 = vmatprep.subr.mxu0 %v2392
        %2687 = vmatpush1.msra.mxu0 %v2391
        %2688 = vmatprep.subr.mxu0 %v2398
        %2689 = vmatpush1.msra.mxu0 %v2397
        %2690 = vmatprep.subr.mxu0 %v2404
        %2691 = vmatpush1.msra.mxu0 %v2403
        %2692 = vmatprep.subr.mxu0 %v2410
        %2693 = vmatpush1.msra.mxu0 %v2409
        %2694 = vmatprep.subr.mxu0 %v2416
        %2695 = vmatpush1.msra.mxu0 %v2415
        %2696 = vmatprep.subr.mxu0 %v2422
        %2697 = vmatpush1.msra.mxu0 %v2421
        %2698 = vmatprep.subr.mxu0 %v2428
        %2699 = vmatpush1.msra.mxu0 %v2427
        %2700 = vmatprep.subr.mxu0 %v2434
        %2701 = vmatpush1.msra.mxu0 %v2433
        %2702 = vmatprep.subr.mxu0 %v2440
        %2703 = vmatpush1.msra.mxu0 %v2439
        %2704 = vmatprep.subr.mxu0 %v2446
        %2705 = vmatpush1.msra.mxu0 %v2445
        %2706 = vmatprep.subr.mxu0 %v2452
        %2707 = vmatpush1.msra.mxu0 %v2451
        %2708 = vmatprep.subr.mxu0 %v2458
        %2709 = vmatpush1.msra.mxu0 %v2457
        %2710 = vmatprep.subr.mxu0 %v2464
        %2711 = vmatpush1.msra.mxu0 %v2463
        %2712 = vmatprep.subr.mxu0 %v2470
        %2713 = vmatpush1.msra.mxu0 %v2469
        %2714 = vmatprep.subr.mxu0 %v2476
        %2715 = vmatpush1.msra.mxu0 %v2475
        %2716 = vmatprep.mubr.f32.mxu0 %v2283
        %2717 = vmatmul.mubr.f32.gmra.mrb[0].mxu0 %v2282
        %v2718 = vpop.f32.mrb[0].mxu0
        %v2719 = vadd.f32 %v2499, %v2718
        %v2720 = vpop.f32.mrb[0].mxu0
        %v2721 = vadd.f32 %v2503, %v2720
        %2722 = vdwg.mxu0
        %s2723 = scalar_lea.vmem %s3, 512
        %v2724 = vld [vmem:[%s2723] sm:$0xff]
        %v2725 = vld [vmem:[%s2723 + $0x8] sm:$0xff]
        %v2726 = vld [vmem:[%s2723 + $0x10] sm:$0xff]
        %v2727 = vld [vmem:[%s2723 + $0x18] sm:$0xff]
        %v2728 = vld [vmem:[%s2723 + $0x20] sm:$0xff]
        %v2729 = vld [vmem:[%s2723 + $0x28] sm:$0xff]
        %v2730 = vld [vmem:[%s2723 + $0x30] sm:$0xff]
        %v2731 = vld [vmem:[%s2723 + $0x38] sm:$0xff]
        %v2732 = vld [vmem:[%s2723 + $0x40] sm:$0xff]
        %v2733 = vld [vmem:[%s2723 + $0x48] sm:$0xff]
        %v2734 = vld [vmem:[%s2723 + $0x50] sm:$0xff]
        %v2735 = vld [vmem:[%s2723 + $0x58] sm:$0xff]
        %v2736 = vld [vmem:[%s2723 + $0x60] sm:$0xff]
        %v2737 = vld [vmem:[%s2723 + $0x68] sm:$0xff]
        %v2738 = vld [vmem:[%s2723 + $0x70] sm:$0xff]
        %v2739 = vld [vmem:[%s2723 + $0x78] sm:$0xff]
        %v2740 = vld [vmem:[%s2723 + $0x80] sm:$0xff]
        %v2741 = vld [vmem:[%s2723 + $0x88] sm:$0xff]
        %v2742 = vld [vmem:[%s2723 + $0x90] sm:$0xff]
        %v2743 = vld [vmem:[%s2723 + $0x98] sm:$0xff]
        %v2744 = vld [vmem:[%s2723 + $0xa0] sm:$0xff]
        %v2745 = vld [vmem:[%s2723 + $0xa8] sm:$0xff]
        %v2746 = vld [vmem:[%s2723 + $0xb0] sm:$0xff]
        %v2747 = vld [vmem:[%s2723 + $0xb8] sm:$0xff]
        %v2748 = vld [vmem:[%s2723 + $0xc0] sm:$0xff]
        %v2749 = vld [vmem:[%s2723 + $0xc8] sm:$0xff]
        %v2750 = vld [vmem:[%s2723 + $0xd0] sm:$0xff]
        %v2751 = vld [vmem:[%s2723 + $0xd8] sm:$0xff]
        %v2752 = vld [vmem:[%s2723 + $0xe0] sm:$0xff]
        %v2753 = vld [vmem:[%s2723 + $0xe8] sm:$0xff]
        %v2754 = vld [vmem:[%s2723 + $0xf0] sm:$0xff]
        %v2755 = vld [vmem:[%s2723 + $0xf8] sm:$0xff]
        %v2756 = vld [vmem:[%s2723 + $0x100] sm:$0xff]
        %v2757 = vld [vmem:[%s2723 + $0x108] sm:$0xff]
        %v2758 = vld [vmem:[%s2723 + $0x110] sm:$0xff]
        %v2759 = vld [vmem:[%s2723 + $0x118] sm:$0xff]
        %v2760 = vld [vmem:[%s2723 + $0x120] sm:$0xff]
        %v2761 = vld [vmem:[%s2723 + $0x128] sm:$0xff]
        %v2762 = vld [vmem:[%s2723 + $0x130] sm:$0xff]
        %v2763 = vld [vmem:[%s2723 + $0x138] sm:$0xff]
        %v2764 = vld [vmem:[%s2723 + $0x140] sm:$0xff]
        %v2765 = vld [vmem:[%s2723 + $0x148] sm:$0xff]
        %v2766 = vld [vmem:[%s2723 + $0x150] sm:$0xff]
        %v2767 = vld [vmem:[%s2723 + $0x158] sm:$0xff]
        %v2768 = vld [vmem:[%s2723 + $0x160] sm:$0xff]
        %v2769 = vld [vmem:[%s2723 + $0x168] sm:$0xff]
        %v2770 = vld [vmem:[%s2723 + $0x170] sm:$0xff]
        %v2771 = vld [vmem:[%s2723 + $0x178] sm:$0xff]
        %v2772 = vld [vmem:[%s2723 + $0x180] sm:$0xff]
        %v2773 = vld [vmem:[%s2723 + $0x188] sm:$0xff]
        %v2774 = vld [vmem:[%s2723 + $0x190] sm:$0xff]
        %v2775 = vld [vmem:[%s2723 + $0x198] sm:$0xff]
        %v2776 = vld [vmem:[%s2723 + $0x1a0] sm:$0xff]
        %v2777 = vld [vmem:[%s2723 + $0x1a8] sm:$0xff]
        %v2778 = vld [vmem:[%s2723 + $0x1b0] sm:$0xff]
        %v2779 = vld [vmem:[%s2723 + $0x1b8] sm:$0xff]
        %v2780 = vld [vmem:[%s2723 + $0x1c0] sm:$0xff]
        %v2781 = vld [vmem:[%s2723 + $0x1c8] sm:$0xff]
        %v2782 = vld [vmem:[%s2723 + $0x1d0] sm:$0xff]
        %v2783 = vld [vmem:[%s2723 + $0x1d8] sm:$0xff]
        %v2784 = vld [vmem:[%s2723 + $0x1e0] sm:$0xff]
        %v2785 = vld [vmem:[%s2723 + $0x1e8] sm:$0xff]
        %v2786 = vld [vmem:[%s2723 + $0x1f0] sm:$0xff]
        %v2787 = vld [vmem:[%s2723 + $0x1f8] sm:$0xff]
        %s2788 = scalar_lea.vmem %s4, 2
        %v2789 = vld [vmem:[%s2788] sm:$0x3]
        %v2791 = vsel %vm1002, %v2577, 0
        %v2794 = vsel %vm1002, %v2648, 0
        %2796 = vmatprep.subr.mxu0 0.0
        %2797 = vmatpush1.xpose.msra.mxu0 %v2794
        %2798 = vmatprep.subr.mxu0 0.0
        %2799 = vmatpush1.xpose.msra.mxu0 0.0
        %2800 = vmatprep.subr.mxu0 0.0
        %2801 = vmatpush1.xpose.msra.mxu0 0.0
        %2802 = vmatprep.subr.mxu0 0.0
        %2803 = vmatpush1.xpose.msra.mxu0 0.0
        %2804 = vmatprep.subr.mxu0 0.0
        %2805 = vmatpush1.xpose.msra.mxu0 0.0
        %2806 = vmatprep.subr.mxu0 0.0
        %2807 = vmatpush1.xpose.msra.mxu0 0.0
        %2808 = vmatprep.subr.mxu0 0.0
        %2809 = vmatpush1.xpose.msra.mxu0 0.0
        %2810 = vmatprep.subr.mxu0 0.0
        %2811 = vmatpush1.xpose.msra.mxu0 0.0
        %2812 = vmatprep.subr.mxu0 0.0
        %2813 = vmatpush1.xpose.msra.mxu0 0.0
        %2814 = vmatprep.subr.mxu0 0.0
        %2815 = vmatpush1.xpose.msra.mxu0 0.0
        %2816 = vmatprep.subr.mxu0 0.0
        %2817 = vmatpush1.xpose.msra.mxu0 0.0
        %2818 = vmatprep.subr.mxu0 0.0
        %2819 = vmatpush1.xpose.msra.mxu0 0.0
        %2820 = vmatprep.subr.mxu0 0.0
        %2821 = vmatpush1.xpose.msra.mxu0 0.0
        %2822 = vmatprep.subr.mxu0 0.0
        %2823 = vmatpush1.xpose.msra.mxu0 0.0
        %2824 = vmatprep.subr.mxu0 0.0
        %2825 = vmatpush1.xpose.msra.mxu0 0.0
        %2826 = vmatprep.subr.mxu0 0.0
        %2827 = vmatpush1.xpose.msra.mxu0 0.0
        %2828 = vmatprep.subr.mxu0 0.0
        %2829 = vmatpush1.xpose.msra.mxu0 0.0
        %2830 = vmatprep.subr.mxu0 0.0
        %2831 = vmatpush1.xpose.msra.mxu0 0.0
        %2832 = vmatprep.subr.mxu0 0.0
        %2833 = vmatpush1.xpose.msra.mxu0 0.0
        %2834 = vmatprep.subr.mxu0 0.0
        %2835 = vmatpush1.xpose.msra.mxu0 0.0
        %2836 = vmatprep.subr.mxu0 0.0
        %2837 = vmatpush1.xpose.msra.mxu0 0.0
        %2838 = vmatprep.subr.mxu0 0.0
        %2839 = vmatpush1.xpose.msra.mxu0 0.0
        %2840 = vmatprep.subr.mxu0 0.0
        %2841 = vmatpush1.xpose.msra.mxu0 0.0
        %2842 = vmatprep.subr.mxu0 0.0
        %2843 = vmatpush1.xpose.msra.mxu0 0.0
        %2844 = vmatprep.subr.mxu0 0.0
        %2845 = vmatpush1.xpose.msra.mxu0 0.0
        %2846 = vmatprep.subr.mxu0 0.0
        %2847 = vmatpush1.xpose.msra.mxu0 0.0
        %2848 = vmatprep.subr.mxu0 0.0
        %2849 = vmatpush1.xpose.msra.mxu0 0.0
        %2850 = vmatprep.subr.mxu0 0.0
        %2851 = vmatpush1.xpose.msra.mxu0 0.0
        %2852 = vmatprep.subr.mxu0 0.0
        %2853 = vmatpush1.xpose.msra.mxu0 0.0
        %2854 = vmatprep.subr.mxu0 0.0
        %2855 = vmatpush1.xpose.msra.mxu0 0.0
        %2856 = vmatprep.subr.mxu0 0.0
        %2857 = vmatpush1.xpose.msra.mxu0 0.0
        %2858 = vmatprep.subr.mxu0 0.0
        %2859 = vmatpush1.xpose.msra.mxu0 0.0
        %2860 = vmatprep.mubr.f32.mxu0 0.0
        %2861 = vmatmul.mubr.f32.gmra.mrb[0].mxu0 %v2791
        %v2862 = vpop.f32.mrb[0].mxu0
        %v2863 = vadd.f32 0.0, %v2862
        %v2864 = vpop.f32.mrb[0].mxu0
        %2865 = vdwg.mxu0
        %v2866 = vmul.f32 %v2863, 0.125
        %v2867 = vadd.f32 %v2866, %v499
        %v2868 = vsel %vm1081, %v2867, -inf
        %2869 = vmax.xlane.f32.xlu0 %v2868
        %v2870 = vpop.xlane.xlu0 %2869
        %v2871 = vsub.f32 %v2867, %v2870
        %v2872 = vmul.f32 %v2871, 1.442695
        %v2873 = vpow.pop %v2872
        %v2874 = vsel %vm1081, %v2873, 0.0
        %2875 = vadd.xlane.f32.xlu0 %v2874
        %v2876 = vpop.xlane.xlu0 %2875
        %v2877 = vrcp.pop %v2876
        %v2878 = vmul.f32 %v2873, %v2877
        %v2880 = vsel %vm1081, %v2878, 0
        %2882 = vmatprep.subr.mxu0 0.0
        %2883 = vmatpush1.msra.mxu0 %v2719
        %2884 = vmatprep.subr.mxu0 0.0
        %2885 = vmatpush1.msra.mxu0 0.0
        %2886 = vmatprep.subr.mxu0 0.0
        %2887 = vmatpush1.msra.mxu0 0.0
        %2888 = vmatprep.subr.mxu0 0.0
        %2889 = vmatpush1.msra.mxu0 0.0
        %2890 = vmatprep.subr.mxu0 0.0
        %2891 = vmatpush1.msra.mxu0 0.0
        %2892 = vmatprep.subr.mxu0 0.0
        %2893 = vmatpush1.msra.mxu0 0.0
        %2894 = vmatprep.subr.mxu0 0.0
        %2895 = vmatpush1.msra.mxu0 0.0
        %2896 = vmatprep.subr.mxu0 0.0
        %2897 = vmatpush1.msra.mxu0 0.0
        %2898 = vmatprep.subr.mxu0 0.0
        %2899 = vmatpush1.msra.mxu0 0.0
        %2900 = vmatprep.subr.mxu0 0.0
        %2901 = vmatpush1.msra.mxu0 0.0
        %2902 = vmatprep.subr.mxu0 0.0
        %2903 = vmatpush1.msra.mxu0 0.0
        %2904 = vmatprep.subr.mxu0 0.0
        %2905 = vmatpush1.msra.mxu0 0.0
        %2906 = vmatprep.subr.mxu0 0.0
        %2907 = vmatpush1.msra.mxu0 0.0
        %2908 = vmatprep.subr.mxu0 0.0
        %2909 = vmatpush1.msra.mxu0 0.0
        %2910 = vmatprep.subr.mxu0 0.0
        %2911 = vmatpush1.msra.mxu0 0.0
        %2912 = vmatprep.subr.mxu0 0.0
        %2913 = vmatpush1.msra.mxu0 0.0
        %2914 = vmatprep.subr.mxu0 0.0
        %2915 = vmatpush1.msra.mxu0 0.0
        %2916 = vmatprep.subr.mxu0 0.0
        %2917 = vmatpush1.msra.mxu0 0.0
        %2918 = vmatprep.subr.mxu0 0.0
        %2919 = vmatpush1.msra.mxu0 0.0
        %2920 = vmatprep.subr.mxu0 0.0
        %2921 = vmatpush1.msra.mxu0 0.0
        %2922 = vmatprep.subr.mxu0 0.0
        %2923 = vmatpush1.msra.mxu0 0.0
        %2924 = vmatprep.subr.mxu0 0.0
        %2925 = vmatpush1.msra.mxu0 0.0
        %2926 = vmatprep.subr.mxu0 0.0
        %2927 = vmatpush1.msra.mxu0 0.0
        %2928 = vmatprep.subr.mxu0 0.0
        %2929 = vmatpush1.msra.mxu0 0.0
        %2930 = vmatprep.subr.mxu0 0.0
        %2931 = vmatpush1.msra.mxu0 0.0
        %2932 = vmatprep.subr.mxu0 0.0
        %2933 = vmatpush1.msra.mxu0 0.0
        %2934 = vmatprep.subr.mxu0 0.0
        %2935 = vmatpush1.msra.mxu0 0.0
        %2936 = vmatprep.subr.mxu0 0.0
        %2937 = vmatpush1.msra.mxu0 0.0
        %2938 = vmatprep.subr.mxu0 0.0
        %2939 = vmatpush1.msra.mxu0 0.0
        %2940 = vmatprep.subr.mxu0 0.0
        %2941 = vmatpush1.msra.mxu0 0.0
        %2942 = vmatprep.subr.mxu0 0.0
        %2943 = vmatpush1.msra.mxu0 0.0
        %2944 = vmatprep.subr.mxu0 0.0
        %2945 = vmatpush1.msra.mxu0 0.0
        %2946 = vmatprep.mubr.f32.mxu0 0.0
        %2947 = vmatmul.mubr.f32.gmra.mrb[0].mxu0 %v2880
        %v2948 = vpop.f32.mrb[0].mxu0
        %v2949 = vadd.f32 0.0, %v2948
        %v2950 = vpop.f32.mrb[0].mxu0
        %2951 = vdwg.mxu0
        %v2953 = vsel %vm1002, %v2949, 0
        %2955 = vmatprep.subr.mxu0 %v2725
        %2956 = vmatpush1.msra.mxu0 %v2724
        %2957 = vmatprep.subr.mxu0 %v2727
        %2958 = vmatpush1.msra.mxu0 %v2726
        %2959 = vmatprep.subr.mxu0 %v2729
        %2960 = vmatpush1.msra.mxu0 %v2728
        %2961 = vmatprep.subr.mxu0 %v2731
        %2962 = vmatpush1.msra.mxu0 %v2730
        %2963 = vmatprep.subr.mxu0 %v2733
        %2964 = vmatpush1.msra.mxu0 %v2732
        %2965 = vmatprep.subr.mxu0 %v2735
        %2966 = vmatpush1.msra.mxu0 %v2734
        %2967 = vmatprep.subr.mxu0 %v2737
        %2968 = vmatpush1.msra.mxu0 %v2736
        %2969 = vmatprep.subr.mxu0 %v2739
        %2970 = vmatpush1.msra.mxu0 %v2738
        %2971 = vmatprep.subr.mxu0 0.0
        %2972 = vmatpush1.msra.mxu0 0.0
        %2973 = vmatprep.subr.mxu0 0.0
        %2974 = vmatpush1.msra.mxu0 0.0
        %2975 = vmatprep.subr.mxu0 0.0
        %2976 = vmatpush1.msra.mxu0 0.0
        %2977 = vmatprep.subr.mxu0 0.0
        %2978 = vmatpush1.msra.mxu0 0.0
        %2979 = vmatprep.subr.mxu0 0.0
        %2980 = vmatpush1.msra.mxu0 0.0
        %2981 = vmatprep.subr.mxu0 0.0
        %2982 = vmatpush1.msra.mxu0 0.0
        %2983 = vmatprep.subr.mxu0 0.0
        %2984 = vmatpush1.msra.mxu0 0.0
        %2985 = vmatprep.subr.mxu0 0.0
        %2986 = vmatpush1.msra.mxu0 0.0
        %2987 = vmatprep.subr.mxu0 0.0
        %2988 = vmatpush1.msra.mxu0 0.0
        %2989 = vmatprep.subr.mxu0 0.0
        %2990 = vmatpush1.msra.mxu0 0.0
        %2991 = vmatprep.subr.mxu0 0.0
        %2992 = vmatpush1.msra.mxu0 0.0
        %2993 = vmatprep.subr.mxu0 0.0
        %2994 = vmatpush1.msra.mxu0 0.0
        %2995 = vmatprep.subr.mxu0 0.0
        %2996 = vmatpush1.msra.mxu0 0.0
        %2997 = vmatprep.subr.mxu0 0.0
        %2998 = vmatpush1.msra.mxu0 0.0
        %2999 = vmatprep.subr.mxu0 0.0
        %3000 = vmatpush1.msra.mxu0 0.0
        %3001 = vmatprep.subr.mxu0 0.0
        %3002 = vmatpush1.msra.mxu0 0.0
        %3003 = vmatprep.subr.mxu0 0.0
        %3004 = vmatpush1.msra.mxu0 0.0
        %3005 = vmatprep.subr.mxu0 0.0
        %3006 = vmatpush1.msra.mxu0 0.0
        %3007 = vmatprep.subr.mxu0 0.0
        %3008 = vmatpush1.msra.mxu0 0.0
        %3009 = vmatprep.subr.mxu0 0.0
        %3010 = vmatpush1.msra.mxu0 0.0
        %3011 = vmatprep.subr.mxu0 0.0
        %3012 = vmatpush1.msra.mxu0 0.0
        %3013 = vmatprep.subr.mxu0 0.0
        %3014 = vmatpush1.msra.mxu0 0.0
        %3015 = vmatprep.subr.mxu0 0.0
        %3016 = vmatpush1.msra.mxu0 0.0
        %3017 = vmatprep.subr.mxu0 0.0
        %3018 = vmatpush1.msra.mxu0 0.0
        %3019 = vmatprep.mubr.f32.mxu0 0.0
        %3020 = vmatmul.mubr.f32.gmra.mrb[0].mxu0 %v2953
        %v3021 = vpop.f32.mrb[0].mxu0
        %v3022 = vadd.f32 0.0, %v3021
        %v3023 = vpop.f32.mrb[0].mxu0
        %v3024 = vadd.f32 0.0, %v3023
        %3025 = vdwg.mxu0
        %v3027 = vlaneseq
        %v3028 = vshrl.u32 %v3027, 7
        %v3029 = vsub.s32 0, %v3028
        %v3030 = vrot.slane %v2789, %v3029
        %v3031 = vlaneseq
        %v3032 = vshrl.u32 %v3031, 7
        %v3033 = vsub.s32 1, %v3032
        %v3034 = vrot.slane %v2789, %v3033
        %v3037 = vadd.f32 %v3030, %v3022
        %v3038 = vadd.f32 %v3034, %v3024
        %3039 = vrot.lane.b32.xlu0 %v2577, 64
        %v3040 = vpop.permute.xlu0 %3039
        %3041 = vrot.lane.b32.xlu0 %v2648, 64
        %v3042 = vpop.permute.xlu0 %3041
        %v3043 = vsel %vm1002, %v3040, 0
        %v3045 = vsel %vm1002, %v3042, 0
        %3047 = vmatprep.subr.mxu0 0.0
        %3048 = vmatpush1.xpose.msra.mxu0 %v3045
        %3049 = vmatprep.subr.mxu0 0.0
        %3050 = vmatpush1.xpose.msra.mxu0 0.0
        %3051 = vmatprep.subr.mxu0 0.0
        %3052 = vmatpush1.xpose.msra.mxu0 0.0
        %3053 = vmatprep.subr.mxu0 0.0
        %3054 = vmatpush1.xpose.msra.mxu0 0.0
        %3055 = vmatprep.subr.mxu0 0.0
        %3056 = vmatpush1.xpose.msra.mxu0 0.0
        %3057 = vmatprep.subr.mxu0 0.0
        %3058 = vmatpush1.xpose.msra.mxu0 0.0
        %3059 = vmatprep.subr.mxu0 0.0
        %3060 = vmatpush1.xpose.msra.mxu0 0.0
        %3061 = vmatprep.subr.mxu0 0.0
        %3062 = vmatpush1.xpose.msra.mxu0 0.0
        %3063 = vmatprep.subr.mxu0 0.0
        %3064 = vmatpush1.xpose.msra.mxu0 0.0
        %3065 = vmatprep.subr.mxu0 0.0
        %3066 = vmatpush1.xpose.msra.mxu0 0.0
        %3067 = vmatprep.subr.mxu0 0.0
        %3068 = vmatpush1.xpose.msra.mxu0 0.0
        %3069 = vmatprep.subr.mxu0 0.0
        %3070 = vmatpush1.xpose.msra.mxu0 0.0
        %3071 = vmatprep.subr.mxu0 0.0
        %3072 = vmatpush1.xpose.msra.mxu0 0.0
        %3073 = vmatprep.subr.mxu0 0.0
        %3074 = vmatpush1.xpose.msra.mxu0 0.0
        %3075 = vmatprep.subr.mxu0 0.0
        %3076 = vmatpush1.xpose.msra.mxu0 0.0
        %3077 = vmatprep.subr.mxu0 0.0
        %3078 = vmatpush1.xpose.msra.mxu0 0.0
        %3079 = vmatprep.subr.mxu0 0.0
        %3080 = vmatpush1.xpose.msra.mxu0 0.0
        %3081 = vmatprep.subr.mxu0 0.0
        %3082 = vmatpush1.xpose.msra.mxu0 0.0
        %3083 = vmatprep.subr.mxu0 0.0
        %3084 = vmatpush1.xpose.msra.mxu0 0.0
        %3085 = vmatprep.subr.mxu0 0.0
        %3086 = vmatpush1.xpose.msra.mxu0 0.0
        %3087 = vmatprep.subr.mxu0 0.0
        %3088 = vmatpush1.xpose.msra.mxu0 0.0
        %3089 = vmatprep.subr.mxu0 0.0
        %3090 = vmatpush1.xpose.msra.mxu0 0.0
        %3091 = vmatprep.subr.mxu0 0.0
        %3092 = vmatpush1.xpose.msra.mxu0 0.0
        %3093 = vmatprep.subr.mxu0 0.0
        %3094 = vmatpush1.xpose.msra.mxu0 0.0
        %3095 = vmatprep.subr.mxu0 0.0
        %3096 = vmatpush1.xpose.msra.mxu0 0.0
        %3097 = vmatprep.subr.mxu0 0.0
        %3098 = vmatpush1.xpose.msra.mxu0 0.0
        %3099 = vmatprep.subr.mxu0 0.0
        %3100 = vmatpush1.xpose.msra.mxu0 0.0
        %3101 = vmatprep.subr.mxu0 0.0
        %3102 = vmatpush1.xpose.msra.mxu0 0.0
        %3103 = vmatprep.subr.mxu0 0.0
        %3104 = vmatpush1.xpose.msra.mxu0 0.0
        %3105 = vmatprep.subr.mxu0 0.0
        %3106 = vmatpush1.xpose.msra.mxu0 0.0
        %3107 = vmatprep.subr.mxu0 0.0
        %3108 = vmatpush1.xpose.msra.mxu0 0.0
        %3109 = vmatprep.subr.mxu0 0.0
        %3110 = vmatpush1.xpose.msra.mxu0 0.0
        %3111 = vmatprep.mubr.f32.mxu0 0.0
        %3112 = vmatmul.mubr.f32.gmra.mrb[0].mxu0 %v3043
        %v3113 = vpop.f32.mrb[0].mxu0
        %v3114 = vadd.f32 0.0, %v3113
        %v3115 = vpop.f32.mrb[0].mxu0
        %3116 = vdwg.mxu0
        %v3117 = vmul.f32 %v3114, 0.125
        %v3118 = vadd.f32 %v3117, %v499
        %v3119 = vsel %vm1081, %v3118, -inf
        %3120 = vmax.xlane.f32.xlu0 %v3119
        %v3121 = vpop.xlane.xlu0 %3120
        %v3122 = vsub.f32 %v3118, %v3121
        %v3123 = vmul.f32 %v3122, 1.442695
        %v3124 = vpow.pop %v3123
        %v3125 = vsel %vm1081, %v3124, 0.0
        %3126 = vadd.xlane.f32.xlu0 %v3125
        %v3127 = vpop.xlane.xlu0 %3126
        %v3128 = vrcp.pop %v3127
        %v3129 = vmul.f32 %v3124, %v3128
        %3131 = vrot.lane.b32.xlu0 %v2719, 64
        %v3132 = vpop.permute.xlu0 %3131
        %v3135 = vsel %vm1081, %v3129, 0
        %3137 = vmatprep.subr.mxu0 0.0
        %3138 = vmatpush1.msra.mxu0 %v3132
        %3139 = vmatprep.subr.mxu0 0.0
        %3140 = vmatpush1.msra.mxu0 0.0
        %3141 = vmatprep.subr.mxu0 0.0
        %3142 = vmatpush1.msra.mxu0 0.0
        %3143 = vmatprep.subr.mxu0 0.0
        %3144 = vmatpush1.msra.mxu0 0.0
        %3145 = vmatprep.subr.mxu0 0.0
        %3146 = vmatpush1.msra.mxu0 0.0
        %3147 = vmatprep.subr.mxu0 0.0
        %3148 = vmatpush1.msra.mxu0 0.0
        %3149 = vmatprep.subr.mxu0 0.0
        %3150 = vmatpush1.msra.mxu0 0.0
        %3151 = vmatprep.subr.mxu0 0.0
        %3152 = vmatpush1.msra.mxu0 0.0
        %3153 = vmatprep.subr.mxu0 0.0
        %3154 = vmatpush1.msra.mxu0 0.0
        %3155 = vmatprep.subr.mxu0 0.0
        %3156 = vmatpush1.msra.mxu0 0.0
        %3157 = vmatprep.subr.mxu0 0.0
        %3158 = vmatpush1.msra.mxu0 0.0
        %3159 = vmatprep.subr.mxu0 0.0
        %3160 = vmatpush1.msra.mxu0 0.0
        %3161 = vmatprep.subr.mxu0 0.0
        %3162 = vmatpush1.msra.mxu0 0.0
        %3163 = vmatprep.subr.mxu0 0.0
        %3164 = vmatpush1.msra.mxu0 0.0
        %3165 = vmatprep.subr.mxu0 0.0
        %3166 = vmatpush1.msra.mxu0 0.0
        %3167 = vmatprep.subr.mxu0 0.0
        %3168 = vmatpush1.msra.mxu0 0.0
        %3169 = vmatprep.subr.mxu0 0.0
        %3170 = vmatpush1.msra.mxu0 0.0
        %3171 = vmatprep.subr.mxu0 0.0
        %3172 = vmatpush1.msra.mxu0 0.0
        %3173 = vmatprep.subr.mxu0 0.0
        %3174 = vmatpush1.msra.mxu0 0.0
        %3175 = vmatprep.subr.mxu0 0.0
        %3176 = vmatpush1.msra.mxu0 0.0
        %3177 = vmatprep.subr.mxu0 0.0
        %3178 = vmatpush1.msra.mxu0 0.0
        %3179 = vmatprep.subr.mxu0 0.0
        %3180 = vmatpush1.msra.mxu0 0.0
        %3181 = vmatprep.subr.mxu0 0.0
        %3182 = vmatpush1.msra.mxu0 0.0
        %3183 = vmatprep.subr.mxu0 0.0
        %3184 = vmatpush1.msra.mxu0 0.0
        %3185 = vmatprep.subr.mxu0 0.0
        %3186 = vmatpush1.msra.mxu0 0.0
        %3187 = vmatprep.subr.mxu0 0.0
        %3188 = vmatpush1.msra.mxu0 0.0
        %3189 = vmatprep.subr.mxu0 0.0
        %3190 = vmatpush1.msra.mxu0 0.0
        %3191 = vmatprep.subr.mxu0 0.0
        %3192 = vmatpush1.msra.mxu0 0.0
        %3193 = vmatprep.subr.mxu0 0.0
        %3194 = vmatpush1.msra.mxu0 0.0
        %3195 = vmatprep.subr.mxu0 0.0
        %3196 = vmatpush1.msra.mxu0 0.0
        %3197 = vmatprep.subr.mxu0 0.0
        %3198 = vmatpush1.msra.mxu0 0.0
        %3199 = vmatprep.subr.mxu0 0.0
        %3200 = vmatpush1.msra.mxu0 0.0
        %3201 = vmatprep.mubr.f32.mxu0 0.0
        %3202 = vmatmul.mubr.f32.gmra.mrb[0].mxu0 %v3135
        %v3203 = vpop.f32.mrb[0].mxu0
        %v3204 = vadd.f32 0.0, %v3203
        %v3205 = vpop.f32.mrb[0].mxu0
        %3206 = vdwg.mxu0
        %v3208 = vsel %vm1002, %v3204, 0
        %3210 = vmatprep.subr.mxu0 %v2741
        %3211 = vmatpush1.msra.mxu0 %v2740
        %3212 = vmatprep.subr.mxu0 %v2743
        %3213 = vmatpush1.msra.mxu0 %v2742
        %3214 = vmatprep.subr.mxu0 %v2745
        %3215 = vmatpush1.msra.mxu0 %v2744
        %3216 = vmatprep.subr.mxu0 %v2747
        %3217 = vmatpush1.msra.mxu0 %v2746
        %3218 = vmatprep.subr.mxu0 %v2749
        %3219 = vmatpush1.msra.mxu0 %v2748
        %3220 = vmatprep.subr.mxu0 %v2751
        %3221 = vmatpush1.msra.mxu0 %v2750
        %3222 = vmatprep.subr.mxu0 %v2753
        %3223 = vmatpush1.msra.mxu0 %v2752
        %3224 = vmatprep.subr.mxu0 %v2755
        %3225 = vmatpush1.msra.mxu0 %v2754
        %3226 = vmatprep.subr.mxu0 0.0
        %3227 = vmatpush1.msra.mxu0 0.0
        %3228 = vmatprep.subr.mxu0 0.0
        %3229 = vmatpush1.msra.mxu0 0.0
        %3230 = vmatprep.subr.mxu0 0.0
        %3231 = vmatpush1.msra.mxu0 0.0
        %3232 = vmatprep.subr.mxu0 0.0
        %3233 = vmatpush1.msra.mxu0 0.0
        %3234 = vmatprep.subr.mxu0 0.0
        %3235 = vmatpush1.msra.mxu0 0.0
        %3236 = vmatprep.subr.mxu0 0.0
        %3237 = vmatpush1.msra.mxu0 0.0
        %3238 = vmatprep.subr.mxu0 0.0
        %3239 = vmatpush1.msra.mxu0 0.0
        %3240 = vmatprep.subr.mxu0 0.0
        %3241 = vmatpush1.msra.mxu0 0.0
        %3242 = vmatprep.subr.mxu0 0.0
        %3243 = vmatpush1.msra.mxu0 0.0
        %3244 = vmatprep.subr.mxu0 0.0
        %3245 = vmatpush1.msra.mxu0 0.0
        %3246 = vmatprep.subr.mxu0 0.0
        %3247 = vmatpush1.msra.mxu0 0.0
        %3248 = vmatprep.subr.mxu0 0.0
        %3249 = vmatpush1.msra.mxu0 0.0
        %3250 = vmatprep.subr.mxu0 0.0
        %3251 = vmatpush1.msra.mxu0 0.0
        %3252 = vmatprep.subr.mxu0 0.0
        %3253 = vmatpush1.msra.mxu0 0.0
        %3254 = vmatprep.subr.mxu0 0.0
        %3255 = vmatpush1.msra.mxu0 0.0
        %3256 = vmatprep.subr.mxu0 0.0
        %3257 = vmatpush1.msra.mxu0 0.0
        %3258 = vmatprep.subr.mxu0 0.0
        %3259 = vmatpush1.msra.mxu0 0.0
        %3260 = vmatprep.subr.mxu0 0.0
        %3261 = vmatpush1.msra.mxu0 0.0
        %3262 = vmatprep.subr.mxu0 0.0
        %3263 = vmatpush1.msra.mxu0 0.0
        %3264 = vmatprep.subr.mxu0 0.0
        %3265 = vmatpush1.msra.mxu0 0.0
        %3266 = vmatprep.subr.mxu0 0.0
        %3267 = vmatpush1.msra.mxu0 0.0
        %3268 = vmatprep.subr.mxu0 0.0
        %3269 = vmatpush1.msra.mxu0 0.0
        %3270 = vmatprep.subr.mxu0 0.0
        %3271 = vmatpush1.msra.mxu0 0.0
        %3272 = vmatprep.subr.mxu0 0.0
        %3273 = vmatpush1.msra.mxu0 0.0
        %3274 = vmatprep.mubr.f32.mxu0 0.0
        %3275 = vmatmul.mubr.f32.gmra.mrb[0].mxu0 %v3208
        %v3276 = vpop.f32.mrb[0].mxu0
        %v3277 = vadd.f32 0.0, %v3276
        %v3278 = vpop.f32.mrb[0].mxu0
        %v3279 = vadd.f32 0.0, %v3278
        %3280 = vdwg.mxu0
        %v3281 = vadd.f32 %v3037, %v3277
        %v3282 = vadd.f32 %v3038, %v3279
        %v3284 = vsel %vm1002, %v2579, 0
        %v3287 = vsel %vm1002, %v2650, 0
        %3289 = vmatprep.subr.mxu0 0.0
        %3290 = vmatpush1.xpose.msra.mxu0 %v3287
        %3291 = vmatprep.subr.mxu0 0.0
        %3292 = vmatpush1.xpose.msra.mxu0 0.0
        %3293 = vmatprep.subr.mxu0 0.0
        %3294 = vmatpush1.xpose.msra.mxu0 0.0
        %3295 = vmatprep.subr.mxu0 0.0
        %3296 = vmatpush1.xpose.msra.mxu0 0.0
        %3297 = vmatprep.subr.mxu0 0.0
        %3298 = vmatpush1.xpose.msra.mxu0 0.0
        %3299 = vmatprep.subr.mxu0 0.0
        %3300 = vmatpush1.xpose.msra.mxu0 0.0
        %3301 = vmatprep.subr.mxu0 0.0
        %3302 = vmatpush1.xpose.msra.mxu0 0.0
        %3303 = vmatprep.subr.mxu0 0.0
        %3304 = vmatpush1.xpose.msra.mxu0 0.0
        %3305 = vmatprep.subr.mxu0 0.0
        %3306 = vmatpush1.xpose.msra.mxu0 0.0
        %3307 = vmatprep.subr.mxu0 0.0
        %3308 = vmatpush1.xpose.msra.mxu0 0.0
        %3309 = vmatprep.subr.mxu0 0.0
        %3310 = vmatpush1.xpose.msra.mxu0 0.0
        %3311 = vmatprep.subr.mxu0 0.0
        %3312 = vmatpush1.xpose.msra.mxu0 0.0
        %3313 = vmatprep.subr.mxu0 0.0
        %3314 = vmatpush1.xpose.msra.mxu0 0.0
        %3315 = vmatprep.subr.mxu0 0.0
        %3316 = vmatpush1.xpose.msra.mxu0 0.0
        %3317 = vmatprep.subr.mxu0 0.0
        %3318 = vmatpush1.xpose.msra.mxu0 0.0
        %3319 = vmatprep.subr.mxu0 0.0
        %3320 = vmatpush1.xpose.msra.mxu0 0.0
        %3321 = vmatprep.subr.mxu0 0.0
        %3322 = vmatpush1.xpose.msra.mxu0 0.0
        %3323 = vmatprep.subr.mxu0 0.0
        %3324 = vmatpush1.xpose.msra.mxu0 0.0
        %3325 = vmatprep.subr.mxu0 0.0
        %3326 = vmatpush1.xpose.msra.mxu0 0.0
        %3327 = vmatprep.subr.mxu0 0.0
        %3328 = vmatpush1.xpose.msra.mxu0 0.0
        %3329 = vmatprep.subr.mxu0 0.0
        %3330 = vmatpush1.xpose.msra.mxu0 0.0
        %3331 = vmatprep.subr.mxu0 0.0
        %3332 = vmatpush1.xpose.msra.mxu0 0.0
        %3333 = vmatprep.subr.mxu0 0.0
        %3334 = vmatpush1.xpose.msra.mxu0 0.0
        %3335 = vmatprep.subr.mxu0 0.0
        %3336 = vmatpush1.xpose.msra.mxu0 0.0
        %3337 = vmatprep.subr.mxu0 0.0
        %3338 = vmatpush1.xpose.msra.mxu0 0.0
        %3339 = vmatprep.subr.mxu0 0.0
        %3340 = vmatpush1.xpose.msra.mxu0 0.0
        %3341 = vmatprep.subr.mxu0 0.0
        %3342 = vmatpush1.xpose.msra.mxu0 0.0
        %3343 = vmatprep.subr.mxu0 0.0
        %3344 = vmatpush1.xpose.msra.mxu0 0.0
        %3345 = vmatprep.subr.mxu0 0.0
        %3346 = vmatpush1.xpose.msra.mxu0 0.0
        %3347 = vmatprep.subr.mxu0 0.0
        %3348 = vmatpush1.xpose.msra.mxu0 0.0
        %3349 = vmatprep.subr.mxu0 0.0
        %3350 = vmatpush1.xpose.msra.mxu0 0.0
        %3351 = vmatprep.subr.mxu0 0.0
        %3352 = vmatpush1.xpose.msra.mxu0 0.0
        %3353 = vmatprep.mubr.f32.mxu0 0.0
        %3354 = vmatmul.mubr.f32.gmra.mrb[0].mxu0 %v3284
        %v3355 = vpop.f32.mrb[0].mxu0
        %v3356 = vadd.f32 0.0, %v3355
        %v3357 = vpop.f32.mrb[0].mxu0
        %3358 = vdwg.mxu0
        %v3359 = vmul.f32 %v3356, 0.125
        %v3360 = vadd.f32 %v3359, %v499
        %v3361 = vsel %vm1081, %v3360, -inf
        %3362 = vmax.xlane.f32.xlu0 %v3361
        %v3363 = vpop.xlane.xlu0 %3362
        %v3364 = vsub.f32 %v3360, %v3363
        %v3365 = vmul.f32 %v3364, 1.442695
        %v3366 = vpow.pop %v3365
        %v3367 = vsel %vm1081, %v3366, 0.0
        %3368 = vadd.xlane.f32.xlu0 %v3367
        %v3369 = vpop.xlane.xlu0 %3368
        %v3370 = vrcp.pop %v3369
        %v3371 = vmul.f32 %v3366, %v3370
        %v3373 = vsel %vm1081, %v3371, 0
        %3375 = vmatprep.subr.mxu0 0.0
        %3376 = vmatpush1.msra.mxu0 %v2721
        %3377 = vmatprep.subr.mxu0 0.0
        %3378 = vmatpush1.msra.mxu0 0.0
        %3379 = vmatprep.subr.mxu0 0.0
        %3380 = vmatpush1.msra.mxu0 0.0
        %3381 = vmatprep.subr.mxu0 0.0
        %3382 = vmatpush1.msra.mxu0 0.0
        %3383 = vmatprep.subr.mxu0 0.0
        %3384 = vmatpush1.msra.mxu0 0.0
        %3385 = vmatprep.subr.mxu0 0.0
        %3386 = vmatpush1.msra.mxu0 0.0
        %3387 = vmatprep.subr.mxu0 0.0
        %3388 = vmatpush1.msra.mxu0 0.0
        %3389 = vmatprep.subr.mxu0 0.0
        %3390 = vmatpush1.msra.mxu0 0.0
        %3391 = vmatprep.subr.mxu0 0.0
        %3392 = vmatpush1.msra.mxu0 0.0
        %3393 = vmatprep.subr.mxu0 0.0
        %3394 = vmatpush1.msra.mxu0 0.0
        %3395 = vmatprep.subr.mxu0 0.0
        %3396 = vmatpush1.msra.mxu0 0.0
        %3397 = vmatprep.subr.mxu0 0.0
        %3398 = vmatpush1.msra.mxu0 0.0
        %3399 = vmatprep.subr.mxu0 0.0
        %3400 = vmatpush1.msra.mxu0 0.0
        %3401 = vmatprep.subr.mxu0 0.0
        %3402 = vmatpush1.msra.mxu0 0.0
        %3403 = vmatprep.subr.mxu0 0.0
        %3404 = vmatpush1.msra.mxu0 0.0
        %3405 = vmatprep.subr.mxu0 0.0
        %3406 = vmatpush1.msra.mxu0 0.0
        %3407 = vmatprep.subr.mxu0 0.0
        %3408 = vmatpush1.msra.mxu0 0.0
        %3409 = vmatprep.subr.mxu0 0.0
        %3410 = vmatpush1.msra.mxu0 0.0
        %3411 = vmatprep.subr.mxu0 0.0
        %3412 = vmatpush1.msra.mxu0 0.0
        %3413 = vmatprep.subr.mxu0 0.0
        %3414 = vmatpush1.msra.mxu0 0.0
        %3415 = vmatprep.subr.mxu0 0.0
        %3416 = vmatpush1.msra.mxu0 0.0
        %3417 = vmatprep.subr.mxu0 0.0
        %3418 = vmatpush1.msra.mxu0 0.0
        %3419 = vmatprep.subr.mxu0 0.0
        %3420 = vmatpush1.msra.mxu0 0.0
        %3421 = vmatprep.subr.mxu0 0.0
        %3422 = vmatpush1.msra.mxu0 0.0
        %3423 = vmatprep.subr.mxu0 0.0
        %3424 = vmatpush1.msra.mxu0 0.0
        %3425 = vmatprep.subr.mxu0 0.0
        %3426 = vmatpush1.msra.mxu0 0.0
        %3427 = vmatprep.subr.mxu0 0.0
        %3428 = vmatpush1.msra.mxu0 0.0
        %3429 = vmatprep.subr.mxu0 0.0
        %3430 = vmatpush1.msra.mxu0 0.0
        %3431 = vmatprep.subr.mxu0 0.0
        %3432 = vmatpush1.msra.mxu0 0.0
        %3433 = vmatprep.subr.mxu0 0.0
        %3434 = vmatpush1.msra.mxu0 0.0
        %3435 = vmatprep.subr.mxu0 0.0
        %3436 = vmatpush1.msra.mxu0 0.0
        %3437 = vmatprep.subr.mxu0 0.0
        %3438 = vmatpush1.msra.mxu0 0.0
        %3439 = vmatprep.mubr.f32.mxu0 0.0
        %3440 = vmatmul.mubr.f32.gmra.mrb[0].mxu0 %v3373
        %v3441 = vpop.f32.mrb[0].mxu0
        %v3442 = vadd.f32 0.0, %v3441
        %v3443 = vpop.f32.mrb[0].mxu0
        %3444 = vdwg.mxu0
        %v3446 = vsel %vm1002, %v3442, 0
        %3448 = vmatprep.subr.mxu0 %v2757
        %3449 = vmatpush1.msra.mxu0 %v2756
        %3450 = vmatprep.subr.mxu0 %v2759
        %3451 = vmatpush1.msra.mxu0 %v2758
        %3452 = vmatprep.subr.mxu0 %v2761
        %3453 = vmatpush1.msra.mxu0 %v2760
        %3454 = vmatprep.subr.mxu0 %v2763
        %3455 = vmatpush1.msra.mxu0 %v2762
        %3456 = vmatprep.subr.mxu0 %v2765
        %3457 = vmatpush1.msra.mxu0 %v2764
        %3458 = vmatprep.subr.mxu0 %v2767
        %3459 = vmatpush1.msra.mxu0 %v2766
        %3460 = vmatprep.subr.mxu0 %v2769
        %3461 = vmatpush1.msra.mxu0 %v2768
        %3462 = vmatprep.subr.mxu0 %v2771
        %3463 = vmatpush1.msra.mxu0 %v2770
        %3464 = vmatprep.subr.mxu0 0.0
        %3465 = vmatpush1.msra.mxu0 0.0
        %3466 = vmatprep.subr.mxu0 0.0
        %3467 = vmatpush1.msra.mxu0 0.0
        %3468 = vmatprep.subr.mxu0 0.0
        %3469 = vmatpush1.msra.mxu0 0.0
        %3470 = vmatprep.subr.mxu0 0.0
        %3471 = vmatpush1.msra.mxu0 0.0
        %3472 = vmatprep.subr.mxu0 0.0
        %3473 = vmatpush1.msra.mxu0 0.0
        %3474 = vmatprep.subr.mxu0 0.0
        %3475 = vmatpush1.msra.mxu0 0.0
        %3476 = vmatprep.subr.mxu0 0.0
        %3477 = vmatpush1.msra.mxu0 0.0
        %3478 = vmatprep.subr.mxu0 0.0
        %3479 = vmatpush1.msra.mxu0 0.0
        %3480 = vmatprep.subr.mxu0 0.0
        %3481 = vmatpush1.msra.mxu0 0.0
        %3482 = vmatprep.subr.mxu0 0.0
        %3483 = vmatpush1.msra.mxu0 0.0
        %3484 = vmatprep.subr.mxu0 0.0
        %3485 = vmatpush1.msra.mxu0 0.0
        %3486 = vmatprep.subr.mxu0 0.0
        %3487 = vmatpush1.msra.mxu0 0.0
        %3488 = vmatprep.subr.mxu0 0.0
        %3489 = vmatpush1.msra.mxu0 0.0
        %3490 = vmatprep.subr.mxu0 0.0
        %3491 = vmatpush1.msra.mxu0 0.0
        %3492 = vmatprep.subr.mxu0 0.0
        %3493 = vmatpush1.msra.mxu0 0.0
        %3494 = vmatprep.subr.mxu0 0.0
        %3495 = vmatpush1.msra.mxu0 0.0
        %3496 = vmatprep.subr.mxu0 0.0
        %3497 = vmatpush1.msra.mxu0 0.0
        %3498 = vmatprep.subr.mxu0 0.0
        %3499 = vmatpush1.msra.mxu0 0.0
        %3500 = vmatprep.subr.mxu0 0.0
        %3501 = vmatpush1.msra.mxu0 0.0
        %3502 = vmatprep.subr.mxu0 0.0
        %3503 = vmatpush1.msra.mxu0 0.0
        %3504 = vmatprep.subr.mxu0 0.0
        %3505 = vmatpush1.msra.mxu0 0.0
        %3506 = vmatprep.subr.mxu0 0.0
        %3507 = vmatpush1.msra.mxu0 0.0
        %3508 = vmatprep.subr.mxu0 0.0
        %3509 = vmatpush1.msra.mxu0 0.0
        %3510 = vmatprep.subr.mxu0 0.0
        %3511 = vmatpush1.msra.mxu0 0.0
        %3512 = vmatprep.mubr.f32.mxu0 0.0
        %3513 = vmatmul.mubr.f32.gmra.mrb[0].mxu0 %v3446
        %v3514 = vpop.f32.mrb[0].mxu0
        %v3515 = vadd.f32 0.0, %v3514
        %v3516 = vpop.f32.mrb[0].mxu0
        %v3517 = vadd.f32 0.0, %v3516
        %3518 = vdwg.mxu0
        %v3519 = vadd.f32 %v3281, %v3515
        %v3520 = vadd.f32 %v3282, %v3517
        %3521 = vrot.lane.b32.xlu0 %v2579, 64
        %v3522 = vpop.permute.xlu0 %3521
        %3523 = vrot.lane.b32.xlu0 %v2650, 64
        %v3524 = vpop.permute.xlu0 %3523
        %v3525 = vsel %vm1002, %v3522, 0
        %v3527 = vsel %vm1002, %v3524, 0
        %3529 = vmatprep.subr.mxu0 0.0
        %3530 = vmatpush1.xpose.msra.mxu0 %v3527
        %3531 = vmatprep.subr.mxu0 0.0
        %3532 = vmatpush1.xpose.msra.mxu0 0.0
        %3533 = vmatprep.subr.mxu0 0.0
        %3534 = vmatpush1.xpose.msra.mxu0 0.0
        %3535 = vmatprep.subr.mxu0 0.0
        %3536 = vmatpush1.xpose.msra.mxu0 0.0
        %3537 = vmatprep.subr.mxu0 0.0
        %3538 = vmatpush1.xpose.msra.mxu0 0.0
        %3539 = vmatprep.subr.mxu0 0.0
        %3540 = vmatpush1.xpose.msra.mxu0 0.0
        %3541 = vmatprep.subr.mxu0 0.0
        %3542 = vmatpush1.xpose.msra.mxu0 0.0
        %3543 = vmatprep.subr.mxu0 0.0
        %3544 = vmatpush1.xpose.msra.mxu0 0.0
        %3545 = vmatprep.subr.mxu0 0.0
        %3546 = vmatpush1.xpose.msra.mxu0 0.0
        %3547 = vmatprep.subr.mxu0 0.0
        %3548 = vmatpush1.xpose.msra.mxu0 0.0
        %3549 = vmatprep.subr.mxu0 0.0
        %3550 = vmatpush1.xpose.msra.mxu0 0.0
        %3551 = vmatprep.subr.mxu0 0.0
        %3552 = vmatpush1.xpose.msra.mxu0 0.0
        %3553 = vmatprep.subr.mxu0 0.0
        %3554 = vmatpush1.xpose.msra.mxu0 0.0
        %3555 = vmatprep.subr.mxu0 0.0
        %3556 = vmatpush1.xpose.msra.mxu0 0.0
        %3557 = vmatprep.subr.mxu0 0.0
        %3558 = vmatpush1.xpose.msra.mxu0 0.0
        %3559 = vmatprep.subr.mxu0 0.0
        %3560 = vmatpush1.xpose.msra.mxu0 0.0
        %3561 = vmatprep.subr.mxu0 0.0
        %3562 = vmatpush1.xpose.msra.mxu0 0.0
        %3563 = vmatprep.subr.mxu0 0.0
        %3564 = vmatpush1.xpose.msra.mxu0 0.0
        %3565 = vmatprep.subr.mxu0 0.0
        %3566 = vmatpush1.xpose.msra.mxu0 0.0
        %3567 = vmatprep.subr.mxu0 0.0
        %3568 = vmatpush1.xpose.msra.mxu0 0.0
        %3569 = vmatprep.subr.mxu0 0.0
        %3570 = vmatpush1.xpose.msra.mxu0 0.0
        %3571 = vmatprep.subr.mxu0 0.0
        %3572 = vmatpush1.xpose.msra.mxu0 0.0
        %3573 = vmatprep.subr.mxu0 0.0
        %3574 = vmatpush1.xpose.msra.mxu0 0.0
        %3575 = vmatprep.subr.mxu0 0.0
        %3576 = vmatpush1.xpose.msra.mxu0 0.0
        %3577 = vmatprep.subr.mxu0 0.0
        %3578 = vmatpush1.xpose.msra.mxu0 0.0
        %3579 = vmatprep.subr.mxu0 0.0
        %3580 = vmatpush1.xpose.msra.mxu0 0.0
        %3581 = vmatprep.subr.mxu0 0.0
        %3582 = vmatpush1.xpose.msra.mxu0 0.0
        %3583 = vmatprep.subr.mxu0 0.0
        %3584 = vmatpush1.xpose.msra.mxu0 0.0
        %3585 = vmatprep.subr.mxu0 0.0
        %3586 = vmatpush1.xpose.msra.mxu0 0.0
        %3587 = vmatprep.subr.mxu0 0.0
        %3588 = vmatpush1.xpose.msra.mxu0 0.0
        %3589 = vmatprep.subr.mxu0 0.0
        %3590 = vmatpush1.xpose.msra.mxu0 0.0
        %3591 = vmatprep.subr.mxu0 0.0
        %3592 = vmatpush1.xpose.msra.mxu0 0.0
        %3593 = vmatprep.mubr.f32.mxu0 0.0
        %3594 = vmatmul.mubr.f32.gmra.mrb[0].mxu0 %v3525
        %v3595 = vpop.f32.mrb[0].mxu0
        %v3596 = vadd.f32 0.0, %v3595
        %v3597 = vpop.f32.mrb[0].mxu0
        %3598 = vdwg.mxu0
        %v3599 = vmul.f32 %v3596, 0.125
        %v3600 = vadd.f32 %v3599, %v499
        %v3601 = vsel %vm1081, %v3600, -inf
        %3602 = vmax.xlane.f32.xlu0 %v3601
        %v3603 = vpop.xlane.xlu0 %3602
        %v3604 = vsub.f32 %v3600, %v3603
        %v3605 = vmul.f32 %v3604, 1.442695
        %v3606 = vpow.pop %v3605
        %v3607 = vsel %vm1081, %v3606, 0.0
        %3608 = vadd.xlane.f32.xlu0 %v3607
        %v3609 = vpop.xlane.xlu0 %3608
        %v3610 = vrcp.pop %v3609
        %v3611 = vmul.f32 %v3606, %v3610
        %3613 = vrot.lane.b32.xlu0 %v2721, 64
        %v3614 = vpop.permute.xlu0 %3613
        %v3617 = vsel %vm1081, %v3611, 0
        %3619 = vmatprep.subr.mxu0 0.0
        %3620 = vmatpush1.msra.mxu0 %v3614
        %3621 = vmatprep.subr.mxu0 0.0
        %3622 = vmatpush1.msra.mxu0 0.0
        %3623 = vmatprep.subr.mxu0 0.0
        %3624 = vmatpush1.msra.mxu0 0.0
        %3625 = vmatprep.subr.mxu0 0.0
        %3626 = vmatpush1.msra.mxu0 0.0
        %3627 = vmatprep.subr.mxu0 0.0
        %3628 = vmatpush1.msra.mxu0 0.0
        %3629 = vmatprep.subr.mxu0 0.0
        %3630 = vmatpush1.msra.mxu0 0.0
        %3631 = vmatprep.subr.mxu0 0.0
        %3632 = vmatpush1.msra.mxu0 0.0
        %3633 = vmatprep.subr.mxu0 0.0
        %3634 = vmatpush1.msra.mxu0 0.0
        %3635 = vmatprep.subr.mxu0 0.0
        %3636 = vmatpush1.msra.mxu0 0.0
        %3637 = vmatprep.subr.mxu0 0.0
        %3638 = vmatpush1.msra.mxu0 0.0
        %3639 = vmatprep.subr.mxu0 0.0
        %3640 = vmatpush1.msra.mxu0 0.0
        %3641 = vmatprep.subr.mxu0 0.0
        %3642 = vmatpush1.msra.mxu0 0.0
        %3643 = vmatprep.subr.mxu0 0.0
        %3644 = vmatpush1.msra.mxu0 0.0
        %3645 = vmatprep.subr.mxu0 0.0
        %3646 = vmatpush1.msra.mxu0 0.0
        %3647 = vmatprep.subr.mxu0 0.0
        %3648 = vmatpush1.msra.mxu0 0.0
        %3649 = vmatprep.subr.mxu0 0.0
        %3650 = vmatpush1.msra.mxu0 0.0
        %3651 = vmatprep.subr.mxu0 0.0
        %3652 = vmatpush1.msra.mxu0 0.0
        %3653 = vmatprep.subr.mxu0 0.0
        %3654 = vmatpush1.msra.mxu0 0.0
        %3655 = vmatprep.subr.mxu0 0.0
        %3656 = vmatpush1.msra.mxu0 0.0
        %3657 = vmatprep.subr.mxu0 0.0
        %3658 = vmatpush1.msra.mxu0 0.0
        %3659 = vmatprep.subr.mxu0 0.0
        %3660 = vmatpush1.msra.mxu0 0.0
        %3661 = vmatprep.subr.mxu0 0.0
        %3662 = vmatpush1.msra.mxu0 0.0
        %3663 = vmatprep.subr.mxu0 0.0
        %3664 = vmatpush1.msra.mxu0 0.0
        %3665 = vmatprep.subr.mxu0 0.0
        %3666 = vmatpush1.msra.mxu0 0.0
        %3667 = vmatprep.subr.mxu0 0.0
        %3668 = vmatpush1.msra.mxu0 0.0
        %3669 = vmatprep.subr.mxu0 0.0
        %3670 = vmatpush1.msra.mxu0 0.0
        %3671 = vmatprep.subr.mxu0 0.0
        %3672 = vmatpush1.msra.mxu0 0.0
        %3673 = vmatprep.subr.mxu0 0.0
        %3674 = vmatpush1.msra.mxu0 0.0
        %3675 = vmatprep.subr.mxu0 0.0
        %3676 = vmatpush1.msra.mxu0 0.0
        %3677 = vmatprep.subr.mxu0 0.0
        %3678 = vmatpush1.msra.mxu0 0.0
        %3679 = vmatprep.subr.mxu0 0.0
        %3680 = vmatpush1.msra.mxu0 0.0
        %3681 = vmatprep.subr.mxu0 0.0
        %3682 = vmatpush1.msra.mxu0 0.0
        %3683 = vmatprep.mubr.f32.mxu0 0.0
        %3684 = vmatmul.mubr.f32.gmra.mrb[0].mxu0 %v3617
        %v3685 = vpop.f32.mrb[0].mxu0
        %v3686 = vadd.f32 0.0, %v3685
        %v3687 = vpop.f32.mrb[0].mxu0
        %3688 = vdwg.mxu0
        %v3690 = vsel %vm1002, %v3686, 0
        %3692 = vmatprep.subr.mxu0 %v2773
        %3693 = vmatpush1.msra.mxu0 %v2772
        %3694 = vmatprep.subr.mxu0 %v2775
        %3695 = vmatpush1.msra.mxu0 %v2774
        %3696 = vmatprep.subr.mxu0 %v2777
        %3697 = vmatpush1.msra.mxu0 %v2776
        %3698 = vmatprep.subr.mxu0 %v2779
        %3699 = vmatpush1.msra.mxu0 %v2778
        %3700 = vmatprep.subr.mxu0 %v2781
        %3701 = vmatpush1.msra.mxu0 %v2780
        %3702 = vmatprep.subr.mxu0 %v2783
        %3703 = vmatpush1.msra.mxu0 %v2782
        %3704 = vmatprep.subr.mxu0 %v2785
        %3705 = vmatpush1.msra.mxu0 %v2784
        %3706 = vmatprep.subr.mxu0 %v2787
        %3707 = vmatpush1.msra.mxu0 %v2786
        %3708 = vmatprep.subr.mxu0 0.0
        %3709 = vmatpush1.msra.mxu0 0.0
        %3710 = vmatprep.subr.mxu0 0.0
        %3711 = vmatpush1.msra.mxu0 0.0
        %3712 = vmatprep.subr.mxu0 0.0
        %3713 = vmatpush1.msra.mxu0 0.0
        %3714 = vmatprep.subr.mxu0 0.0
        %3715 = vmatpush1.msra.mxu0 0.0
        %3716 = vmatprep.subr.mxu0 0.0
        %3717 = vmatpush1.msra.mxu0 0.0
        %3718 = vmatprep.subr.mxu0 0.0
        %3719 = vmatpush1.msra.mxu0 0.0
        %3720 = vmatprep.subr.mxu0 0.0
        %3721 = vmatpush1.msra.mxu0 0.0
        %3722 = vmatprep.subr.mxu0 0.0
        %3723 = vmatpush1.msra.mxu0 0.0
        %3724 = vmatprep.subr.mxu0 0.0
        %3725 = vmatpush1.msra.mxu0 0.0
        %3726 = vmatprep.subr.mxu0 0.0
        %3727 = vmatpush1.msra.mxu0 0.0
        %3728 = vmatprep.subr.mxu0 0.0
        %3729 = vmatpush1.msra.mxu0 0.0
        %3730 = vmatprep.subr.mxu0 0.0
        %3731 = vmatpush1.msra.mxu0 0.0
        %3732 = vmatprep.subr.mxu0 0.0
        %3733 = vmatpush1.msra.mxu0 0.0
        %3734 = vmatprep.subr.mxu0 0.0
        %3735 = vmatpush1.msra.mxu0 0.0
        %3736 = vmatprep.subr.mxu0 0.0
        %3737 = vmatpush1.msra.mxu0 0.0
        %3738 = vmatprep.subr.mxu0 0.0
        %3739 = vmatpush1.msra.mxu0 0.0
        %3740 = vmatprep.subr.mxu0 0.0
        %3741 = vmatpush1.msra.mxu0 0.0
        %3742 = vmatprep.subr.mxu0 0.0
        %3743 = vmatpush1.msra.mxu0 0.0
        %3744 = vmatprep.subr.mxu0 0.0
        %3745 = vmatpush1.msra.mxu0 0.0
        %3746 = vmatprep.subr.mxu0 0.0
        %3747 = vmatpush1.msra.mxu0 0.0
        %3748 = vmatprep.subr.mxu0 0.0
        %3749 = vmatpush1.msra.mxu0 0.0
        %3750 = vmatprep.subr.mxu0 0.0
        %3751 = vmatpush1.msra.mxu0 0.0
        %3752 = vmatprep.subr.mxu0 0.0
        %3753 = vmatpush1.msra.mxu0 0.0
        %3754 = vmatprep.subr.mxu0 0.0
        %3755 = vmatpush1.msra.mxu0 0.0
        %3756 = vmatprep.mubr.f32.mxu0 0.0
        %3757 = vmatmul.mubr.f32.gmra.mrb[0].mxu0 %v3690
        %v3758 = vpop.f32.mrb[0].mxu0
        %v3759 = vadd.f32 0.0, %v3758
        %v3760 = vpop.f32.mrb[0].mxu0
        %v3761 = vadd.f32 0.0, %v3760
        %3762 = vdwg.mxu0
        %v3763 = vadd.f32 %v3519, %v3759
        %v3764 = vadd.f32 %v3520, %v3761
        %v3765 = vadd.f32 %v2282, %v3763
        %v3766 = vadd.f32 %v2283, %v3764
        %s3767 = scalar_lea.vmem %s9, 2
        %v3768 = vld [vmem:[%s3767] sm:$0x3]
        %s3769 = scalar_lea.vmem %s10, 2
        %v3770 = vld [vmem:[%s3769] sm:$0x3]
        %v3771 = vadd.f32 %v3765, %v3766
        %3772 = vadd.xlane.f32.xlu0 %v3771
        %v3773 = vpop.xlane.xlu0 %3772
        %v3774 = vmul.f32 %v3773, %v1986
        %v3775 = vsub.f32 %v3765, %v3774
        %v3776 = vsub.f32 %v3766, %v3774
        %v3777 = vmul.f32 %v3775, %v3775
        %v3778 = vmul.f32 %v3776, %v3776
        %v3779 = vadd.f32 %v3777, %v3778
        %3780 = vadd.xlane.f32.xlu0 %v3779
        %v3781 = vpop.xlane.xlu0 %3780
        %v3782 = vmul.f32 %v3781, %v1986
        %v3783 = vadd.f32 %v3782, 1e-05
        %v3784 = vrsqrt.pop %v3783
        %v3785 = vmul.f32 %v3775, %v3784
        %v3786 = vmul.f32 %v3776, %v3784
        %v3788 = vlaneseq
        %v3789 = vshrl.u32 %v3788, 7
        %v3790 = vsub.s32 0, %v3789
        %v3791 = vrot.slane %v3768, %v3790
        %v3792 = vlaneseq
        %v3793 = vshrl.u32 %v3792, 7
        %v3794 = vsub.s32 1, %v3793
        %v3795 = vrot.slane %v3768, %v3794
        %v3798 = vmul.f32 %v3785, %v3791
        %v3799 = vmul.f32 %v3786, %v3795
        %v3801 = vlaneseq
        %v3802 = vshrl.u32 %v3801, 7
        %v3803 = vsub.s32 0, %v3802
        %v3804 = vrot.slane %v3770, %v3803
        %v3805 = vlaneseq
        %v3806 = vshrl.u32 %v3805, 7
        %v3807 = vsub.s32 1, %v3806
        %v3808 = vrot.slane %v3770, %v3807
        %v3811 = vadd.f32 %v3798, %v3804
        %v3812 = vadd.f32 %v3799, %v3808
        %s3813 = scalar_lea.vmem %s5, 256
        %v3814 = vld [vmem:[%s3813] sm:$0xff]
        %v3815 = vld [vmem:[%s3813 + $0x8] sm:$0xff]
        %v3816 = vld [vmem:[%s3813 + $0x10] sm:$0xff]
        %v3817 = vld [vmem:[%s3813 + $0x18] sm:$0xff]
        %v3818 = vld [vmem:[%s3813 + $0x20] sm:$0xff]
        %v3819 = vld [vmem:[%s3813 + $0x28] sm:$0xff]
        %v3820 = vld [vmem:[%s3813 + $0x30] sm:$0xff]
        %v3821 = vld [vmem:[%s3813 + $0x38] sm:$0xff]
        %v3822 = vld [vmem:[%s3813 + $0x40] sm:$0xff]
        %v3823 = vld [vmem:[%s3813 + $0x48] sm:$0xff]
        %v3824 = vld [vmem:[%s3813 + $0x50] sm:$0xff]
        %v3825 = vld [vmem:[%s3813 + $0x58] sm:$0xff]
        %v3826 = vld [vmem:[%s3813 + $0x60] sm:$0xff]
        %v3827 = vld [vmem:[%s3813 + $0x68] sm:$0xff]
        %v3828 = vld [vmem:[%s3813 + $0x70] sm:$0xff]
        %v3829 = vld [vmem:[%s3813 + $0x78] sm:$0xff]
        %v3830 = vld [vmem:[%s3813 + $0x80] sm:$0xff]
        %v3831 = vld [vmem:[%s3813 + $0x88] sm:$0xff]
        %v3832 = vld [vmem:[%s3813 + $0x90] sm:$0xff]
        %v3833 = vld [vmem:[%s3813 + $0x98] sm:$0xff]
        %v3834 = vld [vmem:[%s3813 + $0xa0] sm:$0xff]
        %v3835 = vld [vmem:[%s3813 + $0xa8] sm:$0xff]
        %v3836 = vld [vmem:[%s3813 + $0xb0] sm:$0xff]
        %v3837 = vld [vmem:[%s3813 + $0xb8] sm:$0xff]
        %v3838 = vld [vmem:[%s3813 + $0xc0] sm:$0xff]
        %v3839 = vld [vmem:[%s3813 + $0xc8] sm:$0xff]
        %v3840 = vld [vmem:[%s3813 + $0xd0] sm:$0xff]
        %v3841 = vld [vmem:[%s3813 + $0xd8] sm:$0xff]
        %v3842 = vld [vmem:[%s3813 + $0xe0] sm:$0xff]
        %v3843 = vld [vmem:[%s3813 + $0xe8] sm:$0xff]
        %v3844 = vld [vmem:[%s3813 + $0xf0] sm:$0xff]
        %v3845 = vld [vmem:[%s3813 + $0xf8] sm:$0xff]
        %s3846 = scalar_lea.vmem %s6, 1
        %v3847 = vld [vmem:[%s3846] sm:$0x1]
        %v3849 = vlaneseq
        %v3850 = vshrl.u32 %v3849, 7
        %v3851 = vsub.s32 0, %v3850
        %v3852 = vrot.slane %v3847, %v3851
        %3854 = vmatprep.subr.mxu0 0.0
        %3855 = vmatpush1.msra.mxu0 %v3814
        %3856 = vmatprep.subr.mxu0 0.0
        %3857 = vmatpush1.msra.mxu0 %v3815
        %3858 = vmatprep.subr.mxu0 0.0
        %3859 = vmatpush1.msra.mxu0 %v3816
        %3860 = vmatprep.subr.mxu0 0.0
        %3861 = vmatpush1.msra.mxu0 %v3817
        %3862 = vmatprep.subr.mxu0 0.0
        %3863 = vmatpush1.msra.mxu0 %v3818
        %3864 = vmatprep.subr.mxu0 0.0
        %3865 = vmatpush1.msra.mxu0 %v3819
        %3866 = vmatprep.subr.mxu0 0.0
        %3867 = vmatpush1.msra.mxu0 %v3820
        %3868 = vmatprep.subr.mxu0 0.0
        %3869 = vmatpush1.msra.mxu0 %v3821
        %3870 = vmatprep.subr.mxu0 0.0
        %3871 = vmatpush1.msra.mxu0 %v3822
        %3872 = vmatprep.subr.mxu0 0.0
        %3873 = vmatpush1.msra.mxu0 %v3823
        %3874 = vmatprep.subr.mxu0 0.0
        %3875 = vmatpush1.msra.mxu0 %v3824
        %3876 = vmatprep.subr.mxu0 0.0
        %3877 = vmatpush1.msra.mxu0 %v3825
        %3878 = vmatprep.subr.mxu0 0.0
        %3879 = vmatpush1.msra.mxu0 %v3826
        %3880 = vmatprep.subr.mxu0 0.0
        %3881 = vmatpush1.msra.mxu0 %v3827
        %3882 = vmatprep.subr.mxu0 0.0
        %3883 = vmatpush1.msra.mxu0 %v3828
        %3884 = vmatprep.subr.mxu0 0.0
        %3885 = vmatpush1.msra.mxu0 %v3829
        %3886 = vmatprep.subr.mxu0 0.0
        %3887 = vmatpush1.msra.mxu0 %v3830
        %3888 = vmatprep.subr.mxu0 0.0
        %3889 = vmatpush1.msra.mxu0 %v3831
        %3890 = vmatprep.subr.mxu0 0.0
        %3891 = vmatpush1.msra.mxu0 %v3832
        %3892 = vmatprep.subr.mxu0 0.0
        %3893 = vmatpush1.msra.mxu0 %v3833
        %3894 = vmatprep.subr.mxu0 0.0
        %3895 = vmatpush1.msra.mxu0 %v3834
        %3896 = vmatprep.subr.mxu0 0.0
        %3897 = vmatpush1.msra.mxu0 %v3835
        %3898 = vmatprep.subr.mxu0 0.0
        %3899 = vmatpush1.msra.mxu0 %v3836
        %3900 = vmatprep.subr.mxu0 0.0
        %3901 = vmatpush1.msra.mxu0 %v3837
        %3902 = vmatprep.subr.mxu0 0.0
        %3903 = vmatpush1.msra.mxu0 %v3838
        %3904 = vmatprep.subr.mxu0 0.0
        %3905 = vmatpush1.msra.mxu0 %v3839
        %3906 = vmatprep.subr.mxu0 0.0
        %3907 = vmatpush1.msra.mxu0 %v3840
        %3908 = vmatprep.subr.mxu0 0.0
        %3909 = vmatpush1.msra.mxu0 %v3841
        %3910 = vmatprep.subr.mxu0 0.0
        %3911 = vmatpush1.msra.mxu0 %v3842
        %3912 = vmatprep.subr.mxu0 0.0
        %3913 = vmatpush1.msra.mxu0 %v3843
        %3914 = vmatprep.subr.mxu0 0.0
        %3915 = vmatpush1.msra.mxu0 %v3844
        %3916 = vmatprep.subr.mxu0 0.0
        %3917 = vmatpush1.msra.mxu0 %v3845
        %3918 = vmatprep.mubr.f32.mxu0 %v3812
        %3919 = vmatmul.mubr.f32.gmra.mrb[0].mxu0 %v3811
        %v3920 = vpop.f32.mrb[0].mxu0
        %v3921 = vadd.f32 %v3852, %v3920
        %v3922 = vpop.f32.mrb[0].mxu0
        %3923 = vdwg.mxu0
        %v3924 = vmax.f32 %v3921, 0.0
        %s3925 = scalar_lea.vmem %s7, 128
        %v3926 = vld [vmem:[%s3925] sm:$0xff]
        %v3927 = vld [vmem:[%s3925 + $0x8] sm:$0xff]
        %v3928 = vld [vmem:[%s3925 + $0x10] sm:$0xff]
        %v3929 = vld [vmem:[%s3925 + $0x18] sm:$0xff]
        %v3930 = vld [vmem:[%s3925 + $0x20] sm:$0xff]
        %v3931 = vld [vmem:[%s3925 + $0x28] sm:$0xff]
        %v3932 = vld [vmem:[%s3925 + $0x30] sm:$0xff]
        %v3933 = vld [vmem:[%s3925 + $0x38] sm:$0xff]
        %v3934 = vld [vmem:[%s3925 + $0x40] sm:$0xff]
        %v3935 = vld [vmem:[%s3925 + $0x48] sm:$0xff]
        %v3936 = vld [vmem:[%s3925 + $0x50] sm:$0xff]
        %v3937 = vld [vmem:[%s3925 + $0x58] sm:$0xff]
        %v3938 = vld [vmem:[%s3925 + $0x60] sm:$0xff]
        %v3939 = vld [vmem:[%s3925 + $0x68] sm:$0xff]
        %v3940 = vld [vmem:[%s3925 + $0x70] sm:$0xff]
        %v3941 = vld [vmem:[%s3925 + $0x78] sm:$0xff]
        %s3942 = scalar_lea.vmem %s8, 2
        %v3943 = vld [vmem:[%s3942] sm:$0x3]
        %v3945 = vlaneseq
        %v3946 = vshrl.u32 %v3945, 7
        %v3947 = vsub.s32 0, %v3946
        %v3948 = vrot.slane %v3943, %v3947
        %v3949 = vlaneseq
        %v3950 = vshrl.u32 %v3949, 7
        %v3951 = vsub.s32 1, %v3950
        %v3952 = vrot.slane %v3943, %v3951
        %v3956 = vsel %vm1002, %v3924, 0
        %3958 = vmatprep.subr.mxu0 %v3927
        %3959 = vmatpush1.msra.mxu0 %v3926
        %3960 = vmatprep.subr.mxu0 %v3929
        %3961 = vmatpush1.msra.mxu0 %v3928
        %3962 = vmatprep.subr.mxu0 %v3931
        %3963 = vmatpush1.msra.mxu0 %v3930
        %3964 = vmatprep.subr.mxu0 %v3933
        %3965 = vmatpush1.msra.mxu0 %v3932
        %3966 = vmatprep.subr.mxu0 %v3935
        %3967 = vmatpush1.msra.mxu0 %v3934
        %3968 = vmatprep.subr.mxu0 %v3937
        %3969 = vmatpush1.msra.mxu0 %v3936
        %3970 = vmatprep.subr.mxu0 %v3939
        %3971 = vmatpush1.msra.mxu0 %v3938
        %3972 = vmatprep.subr.mxu0 %v3941
        %3973 = vmatpush1.msra.mxu0 %v3940
        %3974 = vmatprep.subr.mxu0 0.0
        %3975 = vmatpush1.msra.mxu0 0.0
        %3976 = vmatprep.subr.mxu0 0.0
        %3977 = vmatpush1.msra.mxu0 0.0
        %3978 = vmatprep.subr.mxu0 0.0
        %3979 = vmatpush1.msra.mxu0 0.0
        %3980 = vmatprep.subr.mxu0 0.0
        %3981 = vmatpush1.msra.mxu0 0.0
        %3982 = vmatprep.subr.mxu0 0.0
        %3983 = vmatpush1.msra.mxu0 0.0
        %3984 = vmatprep.subr.mxu0 0.0
        %3985 = vmatpush1.msra.mxu0 0.0
        %3986 = vmatprep.subr.mxu0 0.0
        %3987 = vmatpush1.msra.mxu0 0.0
        %3988 = vmatprep.subr.mxu0 0.0
        %3989 = vmatpush1.msra.mxu0 0.0
        %3990 = vmatprep.subr.mxu0 0.0
        %3991 = vmatpush1.msra.mxu0 0.0
        %3992 = vmatprep.subr.mxu0 0.0
        %3993 = vmatpush1.msra.mxu0 0.0
        %3994 = vmatprep.subr.mxu0 0.0
        %3995 = vmatpush1.msra.mxu0 0.0
        %3996 = vmatprep.subr.mxu0 0.0
        %3997 = vmatpush1.msra.mxu0 0.0
        %3998 = vmatprep.subr.mxu0 0.0
        %3999 = vmatpush1.msra.mxu0 0.0
        %4000 = vmatprep.subr.mxu0 0.0
        %4001 = vmatpush1.msra.mxu0 0.0
        %4002 = vmatprep.subr.mxu0 0.0
        %4003 = vmatpush1.msra.mxu0 0.0
        %4004 = vmatprep.subr.mxu0 0.0
        %4005 = vmatpush1.msra.mxu0 0.0
        %4006 = vmatprep.subr.mxu0 0.0
        %4007 = vmatpush1.msra.mxu0 0.0
        %4008 = vmatprep.subr.mxu0 0.0
        %4009 = vmatpush1.msra.mxu0 0.0
        %4010 = vmatprep.subr.mxu0 0.0
        %4011 = vmatpush1.msra.mxu0 0.0
        %4012 = vmatprep.subr.mxu0 0.0
        %4013 = vmatpush1.msra.mxu0 0.0
        %4014 = vmatprep.subr.mxu0 0.0
        %4015 = vmatpush1.msra.mxu0 0.0
        %4016 = vmatprep.subr.mxu0 0.0
        %4017 = vmatpush1.msra.mxu0 0.0
        %4018 = vmatprep.subr.mxu0 0.0
        %4019 = vmatpush1.msra.mxu0 0.0
        %4020 = vmatprep.subr.mxu0 0.0
        %4021 = vmatpush1.msra.mxu0 0.0
        %4022 = vmatprep.mubr.f32.mxu0 0.0
        %4023 = vmatmul.mubr.f32.gmra.mrb[0].mxu0 %v3956
        %v4024 = vpop.f32.mrb[0].mxu0
        %v4025 = vadd.f32 %v3948, %v4024
        %v4026 = vpop.f32.mrb[0].mxu0
        %v4027 = vadd.f32 %v3952, %v4026
        %4028 = vdwg.mxu0
        %v4029 = vadd.f32 %v3811, %v4025
        %v4030 = vadd.f32 %v3812, %v4027
        %s4031 = scalar_lea.vmem %s11, 2
        %v4032 = vld [vmem:[%s4031] sm:$0x3]
        %s4033 = scalar_lea.vmem %s12, 2
        %v4034 = vld [vmem:[%s4033] sm:$0x3]
        %v4035 = vadd.f32 %v4029, %v4030
        %4036 = vadd.xlane.f32.xlu0 %v4035
        %v4037 = vpop.xlane.xlu0 %4036
        %v4038 = vmul.f32 %v4037, %v1986
        %v4039 = vsub.f32 %v4029, %v4038
        %v4040 = vsub.f32 %v4030, %v4038
        %v4041 = vmul.f32 %v4039, %v4039
        %v4042 = vmul.f32 %v4040, %v4040
        %v4043 = vadd.f32 %v4041, %v4042
        %4044 = vadd.xlane.f32.xlu0 %v4043
        %v4045 = vpop.xlane.xlu0 %4044
        %v4046 = vmul.f32 %v4045, %v1986
        %v4047 = vadd.f32 %v4046, 1e-05
        %v4048 = vrsqrt.pop %v4047
        %v4049 = vmul.f32 %v4039, %v4048
        %v4050 = vmul.f32 %v4040, %v4048
        %v4052 = vlaneseq
        %v4053 = vshrl.u32 %v4052, 7
        %v4054 = vsub.s32 0, %v4053
        %v4055 = vrot.slane %v4032, %v4054
        %v4056 = vlaneseq
        %v4057 = vshrl.u32 %v4056, 7
        %v4058 = vsub.s32 1, %v4057
        %v4059 = vrot.slane %v4032, %v4058
        %v4062 = vmul.f32 %v4049, %v4055
        %v4063 = vmul.f32 %v4050, %v4059
        %v4065 = vlaneseq
        %v4066 = vshrl.u32 %v4065, 7
        %v4067 = vsub.s32 0, %v4066
        %v4068 = vrot.slane %v4034, %v4067
        %v4069 = vlaneseq
        %v4070 = vshrl.u32 %v4069, 7
        %v4071 = vsub.s32 1, %v4070
        %v4072 = vrot.slane %v4034, %v4071
        %v4075 = vadd.f32 %v4062, %v4068
        %v4076 = vadd.f32 %v4063, %v4072
        %v4077 = vld [vmem:[%s13] sm:$0xff]
        %v4078 = vld [vmem:[%s13 + $0x8] sm:$0xff]
        %v4079 = vld [vmem:[%s13 + $0x10] sm:$0xff]
        %v4080 = vld [vmem:[%s13 + $0x18] sm:$0xff]
        %v4081 = vld [vmem:[%s13 + $0x20] sm:$0xff]
        %v4082 = vld [vmem:[%s13 + $0x28] sm:$0xff]
        %v4083 = vld [vmem:[%s13 + $0x30] sm:$0xff]
        %v4084 = vld [vmem:[%s13 + $0x38] sm:$0xff]
        %v4085 = vld [vmem:[%s13 + $0x40] sm:$0xff]
        %v4086 = vld [vmem:[%s13 + $0x48] sm:$0xff]
        %v4087 = vld [vmem:[%s13 + $0x50] sm:$0xff]
        %v4088 = vld [vmem:[%s13 + $0x58] sm:$0xff]
        %v4089 = vld [vmem:[%s13 + $0x60] sm:$0xff]
        %v4090 = vld [vmem:[%s13 + $0x68] sm:$0xff]
        %v4091 = vld [vmem:[%s13 + $0x70] sm:$0xff]
        %v4092 = vld [vmem:[%s13 + $0x78] sm:$0xff]
        %v4093 = vld [vmem:[%s13 + $0x80] sm:$0xff]
        %v4094 = vld [vmem:[%s13 + $0x88] sm:$0xff]
        %v4095 = vld [vmem:[%s13 + $0x90] sm:$0xff]
        %v4096 = vld [vmem:[%s13 + $0x98] sm:$0xff]
        %v4097 = vld [vmem:[%s13 + $0xa0] sm:$0xff]
        %v4098 = vld [vmem:[%s13 + $0xa8] sm:$0xff]
        %v4099 = vld [vmem:[%s13 + $0xb0] sm:$0xff]
        %v4100 = vld [vmem:[%s13 + $0xb8] sm:$0xff]
        %v4101 = vld [vmem:[%s13 + $0xc0] sm:$0xff]
        %v4102 = vld [vmem:[%s13 + $0xc8] sm:$0xff]
        %v4103 = vld [vmem:[%s13 + $0xd0] sm:$0xff]
        %v4104 = vld [vmem:[%s13 + $0xd8] sm:$0xff]
        %v4105 = vld [vmem:[%s13 + $0xe0] sm:$0xff]
        %v4106 = vld [vmem:[%s13 + $0xe8] sm:$0xff]
        %v4107 = vld [vmem:[%s13 + $0xf0] sm:$0xff]
        %v4108 = vld [vmem:[%s13 + $0xf8] sm:$0xff]
        %v4109 = vld [vmem:[%s14] sm:$0x1]
        %v4112 = vrot.slane %v4075, 7
        %v4113 = vrot.slane %v4076, 7
        %4116 = vmatprep.subr.mxu0 0.0
        %4117 = vmatpush1.msra.mxu0 %v4077
        %4118 = vmatprep.subr.mxu0 0.0
        %4119 = vmatpush1.msra.mxu0 %v4078
        %4120 = vmatprep.subr.mxu0 0.0
        %4121 = vmatpush1.msra.mxu0 %v4079
        %4122 = vmatprep.subr.mxu0 0.0
        %4123 = vmatpush1.msra.mxu0 %v4080
        %4124 = vmatprep.subr.mxu0 0.0
        %4125 = vmatpush1.msra.mxu0 %v4081
        %4126 = vmatprep.subr.mxu0 0.0
        %4127 = vmatpush1.msra.mxu0 %v4082
        %4128 = vmatprep.subr.mxu0 0.0
        %4129 = vmatpush1.msra.mxu0 %v4083
        %4130 = vmatprep.subr.mxu0 0.0
        %4131 = vmatpush1.msra.mxu0 %v4084
        %4132 = vmatprep.subr.mxu0 0.0
        %4133 = vmatpush1.msra.mxu0 %v4085
        %4134 = vmatprep.subr.mxu0 0.0
        %4135 = vmatpush1.msra.mxu0 %v4086
        %4136 = vmatprep.subr.mxu0 0.0
        %4137 = vmatpush1.msra.mxu0 %v4087
        %4138 = vmatprep.subr.mxu0 0.0
        %4139 = vmatpush1.msra.mxu0 %v4088
        %4140 = vmatprep.subr.mxu0 0.0
        %4141 = vmatpush1.msra.mxu0 %v4089
        %4142 = vmatprep.subr.mxu0 0.0
        %4143 = vmatpush1.msra.mxu0 %v4090
        %4144 = vmatprep.subr.mxu0 0.0
        %4145 = vmatpush1.msra.mxu0 %v4091
        %4146 = vmatprep.subr.mxu0 0.0
        %4147 = vmatpush1.msra.mxu0 %v4092
        %4148 = vmatprep.subr.mxu0 0.0
        %4149 = vmatpush1.msra.mxu0 %v4093
        %4150 = vmatprep.subr.mxu0 0.0
        %4151 = vmatpush1.msra.mxu0 %v4094
        %4152 = vmatprep.subr.mxu0 0.0
        %4153 = vmatpush1.msra.mxu0 %v4095
        %4154 = vmatprep.subr.mxu0 0.0
        %4155 = vmatpush1.msra.mxu0 %v4096
        %4156 = vmatprep.subr.mxu0 0.0
        %4157 = vmatpush1.msra.mxu0 %v4097
        %4158 = vmatprep.subr.mxu0 0.0
        %4159 = vmatpush1.msra.mxu0 %v4098
        %4160 = vmatprep.subr.mxu0 0.0
        %4161 = vmatpush1.msra.mxu0 %v4099
        %4162 = vmatprep.subr.mxu0 0.0
        %4163 = vmatpush1.msra.mxu0 %v4100
        %4164 = vmatprep.subr.mxu0 0.0
        %4165 = vmatpush1.msra.mxu0 %v4101
        %4166 = vmatprep.subr.mxu0 0.0
        %4167 = vmatpush1.msra.mxu0 %v4102
        %4168 = vmatprep.subr.mxu0 0.0
        %4169 = vmatpush1.msra.mxu0 %v4103
        %4170 = vmatprep.subr.mxu0 0.0
        %4171 = vmatpush1.msra.mxu0 %v4104
        %4172 = vmatprep.subr.mxu0 0.0
        %4173 = vmatpush1.msra.mxu0 %v4105
        %4174 = vmatprep.subr.mxu0 0.0
        %4175 = vmatpush1.msra.mxu0 %v4106
        %4176 = vmatprep.subr.mxu0 0.0
        %4177 = vmatpush1.msra.mxu0 %v4107
        %4178 = vmatprep.subr.mxu0 0.0
        %4179 = vmatpush1.msra.mxu0 %v4108
        %4180 = vmatprep.mubr.f32.mxu0 %v4113
        %4181 = vmatmul.mubr.f32.gmra.mrb[0].mxu0 %v4112
        %v4182 = vpop.f32.mrb[0].mxu0
        %v4183 = vadd.f32 %v4109, %v4182
        %v4184 = vpop.f32.mrb[0].mxu0
        %4185 = vdwg.mxu0
        %vm4186 = vcmask 57344
        %4187 = vst.msk [vmem:[%s486] sm:$0x1] %vm4186, %v4183
        %s4188 = sand.u32 %s357, 1
        %s4189 = scalar_lea.sflag [#allocation3], %s4188
        %s4190 = sand.u32 %s357, 1
        %s4191 = scalar_lea.vmem [#allocation2], %s4190
        // Predicated region
        $region81: #{transformer_forward.1} parent=79 // pred_check
          %p4192 = pneg %p367
        $region82: #{transformer_forward.1} parent=79 // pred_check_branch
          %4194 = sbr.rel (%p4192) target = $region84
        $region83: #{transformer_forward.1} parent=79 // pred_region
          %s4196 = ssub.s32 16, 16
          %4197 = vsyncadd %s4189, %s4196
          %s4198 = smul.addr %s29, 16
          %s4199 = scalar_lea.hbm %s15, %s4198
          %s4201 = sshll.u32 %s4191, 4
          %s4202 = int_to_ptr.vmem [resolvable:$true] %s4201
          %4204 = dma.vmem_to_hbm [thread:$0]  %s4202, 16, %s4199, %s4189
        $region84: #{transformer_forward.1} parent=79 // pred_fallthru
          _
      $region80: #{transformer_forward.1} parent=5 // pred_fallthru
        _
      %p4205 = scmp.le.s32.totalorder 2, %s24
      // Predicated region
      $region85: #{transformer_forward.1} parent=5 // pred_check
        %p4206 = pneg %p4205
      $region86: #{transformer_forward.1} parent=5 // pred_check_branch
        %4208 = sbr.rel (%p4206) target = $region88
      $region87: #{transformer_forward.1} parent=5 // pred_region
        %s4209 = ssub.s32 %s24, 2
        // Predicated region
        $region89: #{transformer_forward.1} parent=87 // pred_check
          %p4210 = pneg %p373
        $region90: #{transformer_forward.1} parent=87 // pred_check_branch
          %4212 = sbr.rel (%p4210) target = $region92
        $region91: #{transformer_forward.1} parent=87 // pred_region
          %s4213 = sand.u32 %s358, 1
          %s4214 = scalar_lea.sflag [#allocation3], %s4213
          %s4215 = sand.u32 %s358, 1
          %s4216 = scalar_lea.vmem [#allocation2], %s4215
          %4217 = dma.done %s4214, 16
        $region92: #{transformer_forward.1} parent=87 // pred_fallthru
          _
      $region88: #{transformer_forward.1} parent=5 // pred_fallthru
        _
    $region6: #{transformer_forward.1} parent=1 // loop_footer
      %s28 = sadd.s32 1, %s24
    $region7: #{transformer_forward.1} parent=1 // loop_footer_branch
      %23 = sbr.rel target = $region3
    $region8: #{transformer_forward.1} parent=1 // loop_exit
      _
    %4218 = vsyncpa [#allocation3], 1
    %s4219 = scalar_lea.sflag [#allocation3], 1
    %4220 = vsyncpa %s4219, 1

</llo_original>
